<compile_context>
chip_gen: v6e
topology: v6e:2x2x1
jax: 0.10.0
libtpu: 0.0.40
codegen_flags: <defaults>
</compile_context>

<pallas_src>
import functools

import jax
import jax.numpy as jnp
from jax import lax
from jax.experimental import pallas as pl
from jax.experimental.pallas import tpu as pltpu

EPS = 1e-12  # F.normalize default eps


def _netvlad_kernel(x_ref, w_ref, c_ref, out_ref, vlad_acc, asum_acc,
                    *, s_total, mxu_dtype, approx_recip):
    # x_ref    : (B, D, Ts)  raw descriptors, (n, s) block of the (N, D, S) input
    # w_ref    : (K, D)      1x1 conv weight (bias=False)
    # c_ref    : (K, D)      cluster centroids
    # out_ref  : (B, K, D)   final VLAD (intra + globally L2-normalized)
    # vlad_acc : (B, K, D)   f32 scratch: sum_s a[k,s] * xn[d,s]
    # asum_acc : (B, K, 1)   f32 scratch: sum_s a[k,s]
    block_b, _, block_s = x_ref.shape
    s_idx = pl.program_id(1)

    @pl.when(s_idx == 0)
    def _init():
        vlad_acc[...] = jnp.zeros_like(vlad_acc)
        asum_acc[...] = jnp.zeros_like(asum_acc)

    ragged = (s_total % block_s) != 0
    if ragged:
        col = lax.broadcasted_iota(jnp.int32, (1, block_s), 1)
        valid = (s_idx * block_s + col) < s_total            # (1, Ts)

    w_m = w_ref[...].astype(mxu_dtype)                       # (K, D)

    # block_b is small & static -> unrolled per-image 2-D MXU matmuls.
    for b in range(block_b):
        x = x_ref[b].astype(jnp.float32)                     # (D, Ts), f32 reductions
        if ragged:
            x = jnp.where(valid, x, 0.0)

        # descriptor-wise L2 normalization over D (PyTorch dim=1 of NCHW):
        # x * rsqrt(max(ss, eps^2)) == x / max(||x||, eps)  (F.normalize semantics)
        ss = jnp.sum(x * x, axis=0, keepdims=True)           # (1, Ts)
        xn = x * lax.rsqrt(jnp.maximum(ss, EPS * EPS))       # (D, Ts)
        xn_m = xn.astype(mxu_dtype)

        # 1x1 conv: logits[k, s] = sum_d w[k, d] * xn[d, s]
        logits = lax.dot_general(
            w_m, xn_m, dimension_numbers=(((1,), (0,)), ((), ())),
            preferred_element_type=jnp.float32)              # (K, Ts)

        # softmax over clusters K (PyTorch dim=1 of (N, K, S)) in f32
        m = jnp.max(logits, axis=0, keepdims=True)
        e = jnp.exp(logits - m)
        a = e * pl.reciprocal(jnp.sum(e, axis=0, keepdims=True),
                              approx=approx_recip)           # (K, Ts)
        if ragged:
            a = jnp.where(valid, a, 0.0)

        # partial VLAD: sum_s a[k, s] * xn[d, s]  (A @ Xn^T on the MXU)
        pvlad = lax.dot_general(
            a.astype(mxu_dtype), xn_m,
            dimension_numbers=(((1,), (1,)), ((), ())),
            preferred_element_type=jnp.float32)              # (K, D)
        vlad_acc[b] = vlad_acc[b] + pvlad
        asum_acc[b] = asum_acc[b] + jnp.sum(a, axis=1, keepdims=True)

    @pl.when(s_idx == pl.num_programs(1) - 1)
    def _finalize():
        c = c_ref[...].astype(jnp.float32)                   # (K, D)
        vlad = vlad_acc[...] - asum_acc[...] * c[None, :, :]  # (B, K, D)
        # intra-normalization (over D)
        rn = jnp.sum(vlad * vlad, axis=2, keepdims=True)
        vlad = vlad * lax.rsqrt(jnp.maximum(rn, EPS * EPS))
        # global L2 normalization over the flattened (K*D,) vector
        gn = jnp.sum(jnp.sum(vlad * vlad, axis=2, keepdims=True),
                     axis=1, keepdims=True)
        vlad = vlad * lax.rsqrt(jnp.maximum(gn, EPS * EPS))
        out_ref[...] = vlad.astype(out_ref.dtype)


def netvlad_pallas(x_nchw, conv_w, centroids, *, block_b=None, block_s=None,
                   mxu_dtype=jnp.float32):
    """x_nchw: (N, D, H, W); conv_w: (K, D); centroids: (K, D) -> (N, K*D).

    mxu_dtype=jnp.bfloat16 doubles MXU throughput on v6e/v7x (and enables the
    approx EUP reciprocal in the softmax); default f32 keeps bit-level parity
    with the f32 PyTorch reference.
    """
    N, D, H, W = x_nchw.shape
    K = conv_w.shape[0]
    S = H * W

    # Free, metadata-only reshape -- no HBM transpose is materialized.
    x_nds = x_nchw.reshape(N, D, S)

    if block_s is None:
        # Cap the spatial tile so the double-buffered x block stays modest on
        # v7x's 64 MiB VMEM even for large feature maps; ragged tails are
        # masked in-kernel.
        block_s = S if S <= 2048 else 2048
    if block_b is None:
        img_bytes = D * block_s * x_nds.dtype.itemsize
        # ~2 MiB of activations per step, unroll cap 8, and keep >= 2 batch
        # grid steps so both v7x TensorCores get work.
        block_b = max(1, min(8, (2 << 20) // max(img_bytes, 1)))
        if N > 1:
            block_b = min(block_b, max(1, N // 2))
    block_b = min(block_b, N)

    grid = (pl.cdiv(N, block_b), pl.cdiv(S, block_s))
    approx_recip = jnp.dtype(mxu_dtype) != jnp.dtype(jnp.float32)

    kernel = functools.partial(_netvlad_kernel, s_total=S, mxu_dtype=mxu_dtype,
                               approx_recip=approx_recip)

    out = pl.pallas_call(
        kernel,
        out_shape=jax.ShapeDtypeStruct((N, K, D), x_nchw.dtype),
        grid_spec=pltpu.PrefetchScalarGridSpec(
            num_scalar_prefetch=0,
            grid=grid,
            in_specs=[
                pl.BlockSpec((block_b, D, block_s), lambda n, s: (n, 0, s)),
                pl.BlockSpec((K, D), lambda n, s: (0, 0)),
                pl.BlockSpec((K, D), lambda n, s: (0, 0)),
            ],
            out_specs=pl.BlockSpec((block_b, K, D), lambda n, s: (n, 0, 0)),
            scratch_shapes=[
                pltpu.VMEM((block_b, K, D), jnp.float32),
                pltpu.VMEM((block_b, K, 1), jnp.float32),
            ],
        ),
        compiler_params=pltpu.CompilerParams(
            dimension_semantics=("parallel", "arbitrary"),
            vmem_limit_bytes=32 * 1024 * 1024),
    )(x_nds, conv_w, centroids)

    return out.reshape(N, K * D)


def netvlad_ref(x_nchw, conv_w, centroids):
    """Pure-JAX reference mirroring the PyTorch forward pass."""
    N, D, H, W = x_nchw.shape
    x = x_nchw / jnp.maximum(
        jnp.sqrt(jnp.sum(x_nchw * x_nchw, axis=1, keepdims=True)), EPS)
    x_flat = x.reshape(N, D, H * W)                        # (N, D, S)
    logits = jnp.einsum("nds,kd->nks", x_flat, conv_w)     # (N, K, S)
    a = jax.nn.softmax(logits, axis=1)                     # (N, K, S)
    vlad = (jnp.einsum("nks,nds->nkd", a, x_flat)
            - jnp.sum(a, axis=-1)[..., None] * centroids[None])
    vlad = vlad / jnp.maximum(
        jnp.sqrt(jnp.sum(vlad * vlad, axis=2, keepdims=True)), EPS)
    vlad = vlad.reshape(N, -1)
    vlad = vlad / jnp.maximum(
        jnp.sqrt(jnp.sum(vlad * vlad, axis=1, keepdims=True)), EPS)
    return vlad


if __name__ == "__main__":
    # Small shapes consistent with module defaults (dim=128, clusters_num=64).
    N, D, H, W = 8, 128, 8, 8
    K = 64

    key = jax.random.PRNGKey(0)
    kx, kw, kc = jax.random.split(key, 3)
    x = jax.random.normal(kx, (N, D, H, W), dtype=jnp.float32)
    # Conv2d(dim -> K, 1x1, bias=False) weight squeezed to (K, D);
    # centroids ~ torch.rand(K, D).
    conv_w = jax.random.normal(kw, (K, D), dtype=jnp.float32) * 0.1
    centroids = jax.random.uniform(kc, (K, D), dtype=jnp.float32)

    out = jax.block_until_ready(netvlad_pallas(x, conv_w, centroids))
    ref = jax.block_until_ready(netvlad_ref(x, conv_w, centroids))

    assert out.shape == (N, K * D)
    assert jnp.allclose(out, ref, atol=1e-5, rtol=1e-5)
    print("KERNEL_OK")
</pallas_src>

<mosaic_0001>
module attributes {stable_mosaic.version = 11 : i64} {
  func.func @_netvlad_kernel(%arg0: i32, %arg1: i32, %arg2: memref<4x128x64xf32, #tpu.memory_space<vmem>>, %arg3: memref<64x128xf32, #tpu.memory_space<vmem>>, %arg4: memref<64x128xf32, #tpu.memory_space<vmem>>, %arg5: memref<4x64x128xf32, #tpu.memory_space<vmem>>, %arg6: memref<4x64x128xf32, #tpu.memory_space<vmem>>, %arg7: memref<4x64x1xf32, #tpu.memory_space<vmem>>) attributes {dimension_semantics = [#tpu.dimension_semantics<parallel>, #tpu.dimension_semantics<arbitrary>], iteration_bounds = array<i64: 2, 1>, scalar_prefetch = 0 : i64, scratch_operands = 2 : i64, tpu.core_type = #tpu.core_type<tc>, window_params = [{transform_indices = @transform_0, window_bounds = array<i64: 4, 128, 64>}, {pipeline_mode = #tpu.pipeline_mode<synchronous>, transform_indices = @transform_1, window_bounds = array<i64: 64, 128>}, {pipeline_mode = #tpu.pipeline_mode<synchronous>, transform_indices = @transform_2, window_bounds = array<i64: 64, 128>}, {transform_indices = @transform_3, window_bounds = array<i64: 4, 64, 128>}]} {
    %c0_i32 = arith.constant 0 : i32
    %0 = arith.cmpi eq, %arg1, %c0_i32 : i32
    %1 = arith.extui %0 : i1 to i32
    %c0_i32_0 = arith.constant 0 : i32
    %2 = arith.cmpi ne, %1, %c0_i32_0 : i32
    scf.if %2 {
      %cst_88 = arith.constant 0.000000e+00 : f32
      %151 = vector.broadcast %cst_88 : f32 to vector<4x64x128xf32>
      %c0_89 = arith.constant 0 : index
      %c0_90 = arith.constant 0 : index
      %c0_91 = arith.constant 0 : index
      %152 = vector.load %arg6[%c0_89, %c0_90, %c0_91] : memref<4x64x128xf32, #tpu.memory_space<vmem>>, vector<4x64x128xf32>
      tpu.vector_store %arg6[%c0_89, %c0_90, %c0_91], %151 {strides = array<i32>} : memref<4x64x128xf32, #tpu.memory_space<vmem>>, vector<4x64x128xf32>,
      %cst_92 = arith.constant 0.000000e+00 : f32
      %153 = vector.broadcast %cst_92 : f32 to vector<4x64x1xf32>
      %c0_93 = arith.constant 0 : index
      %c0_94 = arith.constant 0 : index
      %c0_95 = arith.constant 0 : index
      %154 = vector.load %arg7[%c0_93, %c0_94, %c0_95] : memref<4x64x1xf32, #tpu.memory_space<vmem>>, vector<4x64x1xf32>
      tpu.vector_store %arg7[%c0_93, %c0_94, %c0_95], %153 {strides = array<i32>} : memref<4x64x1xf32, #tpu.memory_space<vmem>>, vector<4x64x1xf32>,
    } else {
    }
    %c0 = arith.constant 0 : index
    %c0_1 = arith.constant 0 : index
    %3 = vector.load %arg3[%c0, %c0_1] : memref<64x128xf32, #tpu.memory_space<vmem>>, vector<64x128xf32>
    %c0_2 = arith.constant 0 : index
    %c0_3 = arith.constant 0 : index
    %c0_4 = arith.constant 0 : index
    %4 = vector.load %arg2[%c0_2, %c0_3, %c0_4] : memref<4x128x64xf32, #tpu.memory_space<vmem>>, vector<1x128x64xf32>
    %5 = vector.shape_cast %4 : vector<1x128x64xf32> to vector<128x64xf32>
    %6 = arith.mulf %5, %5 : vector<128x64xf32>
    %cst = arith.constant dense<0.000000e+00> : vector<64xf32>
    %7 = vector.multi_reduction <add>, %6, %cst [0] : vector<128x64xf32> to vector<64xf32>
    %8 = vector.shape_cast %7 : vector<64xf32> to vector<1x64xf32>
    %cst_5 = arith.constant 1.000000e-24 : f32
    %9 = vector.broadcast %cst_5 : f32 to vector<1x64xf32>
    %10 = arith.maximumf %8, %9 : vector<1x64xf32>
    %11 = math.rsqrt %10 : vector<1x64xf32>
    %12 = vector.broadcast %11 : vector<1x64xf32> to vector<128x64xf32>
    %13 = arith.mulf %5, %12 : vector<128x64xf32>
    %cst_6 = arith.constant dense<0.000000e+00> : vector<64x64xf32>
    %14 = tpu.matmul %3, %13, %cst_6 {dimension_numbers = #tpu.dot_dimension_numbers<[1], [0], [0], [1], [0, 0, 1, 1], [], []>} : vector<64x128xf32>, vector<128x64xf32>, vector<64x64xf32> -> vector<64x64xf32>
    %cst_7 = arith.constant dense<0xFF800000> : vector<64xf32>
    %15 = vector.multi_reduction <maximumf>, %14, %cst_7 [0] : vector<64x64xf32> to vector<64xf32>
    %16 = vector.shape_cast %15 : vector<64xf32> to vector<1x64xf32>
    %17 = vector.broadcast %16 : vector<1x64xf32> to vector<64x64xf32>
    %18 = arith.subf %14, %17 : vector<64x64xf32>
    %19 = math.exp %18 : vector<64x64xf32>
    %cst_8 = arith.constant dense<0.000000e+00> : vector<64xf32>
    %20 = vector.multi_reduction <add>, %19, %cst_8 [0] : vector<64x64xf32> to vector<64xf32>
    %21 = vector.shape_cast %20 : vector<64xf32> to vector<1x64xf32>
    %22 = tpu.reciprocal %21 : vector<1x64xf32> -> vector<1x64xf32>
    %23 = vector.broadcast %22 : vector<1x64xf32> to vector<64x64xf32>
    %24 = arith.mulf %19, %23 : vector<64x64xf32>
    %cst_9 = arith.constant dense<0.000000e+00> : vector<64x128xf32>
    %25 = tpu.matmul %24, %13, %cst_9 {dimension_numbers = #tpu.dot_dimension_numbers<[1], [1], [0], [0], [0, 0, 1, 0], [], []>} : vector<64x64xf32>, vector<128x64xf32>, vector<64x128xf32> -> vector<64x128xf32>
    %c0_10 = arith.constant 0 : index
    %c0_11 = arith.constant 0 : index
    %c0_12 = arith.constant 0 : index
    %26 = vector.load %arg6[%c0_10, %c0_11, %c0_12] : memref<4x64x128xf32, #tpu.memory_space<vmem>>, vector<1x64x128xf32>
    %27 = vector.shape_cast %26 : vector<1x64x128xf32> to vector<64x128xf32>
    %28 = arith.addf %27, %25 : vector<64x128xf32>
    %c0_13 = arith.constant 0 : index
    %c0_14 = arith.constant 0 : index
    %c0_15 = arith.constant 0 : index
    %29 = vector.load %arg6[%c0_13, %c0_14, %c0_15] : memref<4x64x128xf32, #tpu.memory_space<vmem>>, vector<1x64x128xf32>
    %30 = vector.shape_cast %29 : vector<1x64x128xf32> to vector<64x128xf32>
    %31 = vector.shape_cast %28 : vector<64x128xf32> to vector<1x64x128xf32>
    tpu.vector_store %arg6[%c0_13, %c0_14, %c0_15], %31 {strides = array<i32>} : memref<4x64x128xf32, #tpu.memory_space<vmem>>, vector<1x64x128xf32>,
    %c0_16 = arith.constant 0 : index
    %c0_17 = arith.constant 0 : index
    %c0_18 = arith.constant 0 : index
    %32 = vector.load %arg7[%c0_16, %c0_17, %c0_18] : memref<4x64x1xf32, #tpu.memory_space<vmem>>, vector<1x64x1xf32>
    %33 = vector.shape_cast %32 : vector<1x64x1xf32> to vector<64x1xf32>
    %cst_19 = arith.constant dense<0.000000e+00> : vector<64xf32>
    %34 = vector.multi_reduction <add>, %24, %cst_19 [1] : vector<64x64xf32> to vector<64xf32>
    %35 = vector.shape_cast %34 : vector<64xf32> to vector<64x1xf32>
    %36 = arith.addf %33, %35 : vector<64x1xf32>
    %c0_20 = arith.constant 0 : index
    %c0_21 = arith.constant 0 : index
    %c0_22 = arith.constant 0 : index
    %37 = vector.load %arg7[%c0_20, %c0_21, %c0_22] : memref<4x64x1xf32, #tpu.memory_space<vmem>>, vector<1x64x1xf32>
    %38 = vector.shape_cast %37 : vector<1x64x1xf32> to vector<64x1xf32>
    %39 = vector.shape_cast %36 : vector<64x1xf32> to vector<1x64x1xf32>
    tpu.vector_store %arg7[%c0_20, %c0_21, %c0_22], %39 {strides = array<i32>} : memref<4x64x1xf32, #tpu.memory_space<vmem>>, vector<1x64x1xf32>,
    %c1 = arith.constant 1 : index
    %c0_23 = arith.constant 0 : index
    %c0_24 = arith.constant 0 : index
    %40 = vector.load %arg2[%c1, %c0_23, %c0_24] : memref<4x128x64xf32, #tpu.memory_space<vmem>>, vector<1x128x64xf32>
    %41 = vector.shape_cast %40 : vector<1x128x64xf32> to vector<128x64xf32>
    %42 = arith.mulf %41, %41 : vector<128x64xf32>
    %cst_25 = arith.constant dense<0.000000e+00> : vector<64xf32>
    %43 = vector.multi_reduction <add>, %42, %cst_25 [0] : vector<128x64xf32> to vector<64xf32>
    %44 = vector.shape_cast %43 : vector<64xf32> to vector<1x64xf32>
    %cst_26 = arith.constant 1.000000e-24 : f32
    %45 = vector.broadcast %cst_26 : f32 to vector<1x64xf32>
    %46 = arith.maximumf %44, %45 : vector<1x64xf32>
    %47 = math.rsqrt %46 : vector<1x64xf32>
    %48 = vector.broadcast %47 : vector<1x64xf32> to vector<128x64xf32>
    %49 = arith.mulf %41, %48 : vector<128x64xf32>
    %cst_27 = arith.constant dense<0.000000e+00> : vector<64x64xf32>
    %50 = tpu.matmul %3, %49, %cst_27 {dimension_numbers = #tpu.dot_dimension_numbers<[1], [0], [0], [1], [0, 0, 1, 1], [], []>} : vector<64x128xf32>, vector<128x64xf32>, vector<64x64xf32> -> vector<64x64xf32>
    %cst_28 = arith.constant dense<0xFF800000> : vector<64xf32>
    %51 = vector.multi_reduction <maximumf>, %50, %cst_28 [0] : vector<64x64xf32> to vector<64xf32>
    %52 = vector.shape_cast %51 : vector<64xf32> to vector<1x64xf32>
    %53 = vector.broadcast %52 : vector<1x64xf32> to vector<64x64xf32>
    %54 = arith.subf %50, %53 : vector<64x64xf32>
    %55 = math.exp %54 : vector<64x64xf32>
    %cst_29 = arith.constant dense<0.000000e+00> : vector<64xf32>
    %56 = vector.multi_reduction <add>, %55, %cst_29 [0] : vector<64x64xf32> to vector<64xf32>
    %57 = vector.shape_cast %56 : vector<64xf32> to vector<1x64xf32>
    %58 = tpu.reciprocal %57 : vector<1x64xf32> -> vector<1x64xf32>
    %59 = vector.broadcast %58 : vector<1x64xf32> to vector<64x64xf32>
    %60 = arith.mulf %55, %59 : vector<64x64xf32>
    %cst_30 = arith.constant dense<0.000000e+00> : vector<64x128xf32>
    %61 = tpu.matmul %60, %49, %cst_30 {dimension_numbers = #tpu.dot_dimension_numbers<[1], [1], [0], [0], [0, 0, 1, 0], [], []>} : vector<64x64xf32>, vector<128x64xf32>, vector<64x128xf32> -> vector<64x128xf32>
    %c1_31 = arith.constant 1 : index
    %c0_32 = arith.constant 0 : index
    %c0_33 = arith.constant 0 : index
    %62 = vector.load %arg6[%c1_31, %c0_32, %c0_33] : memref<4x64x128xf32, #tpu.memory_space<vmem>>, vector<1x64x128xf32>
    %63 = vector.shape_cast %62 : vector<1x64x128xf32> to vector<64x128xf32>
    %64 = arith.addf %63, %61 : vector<64x128xf32>
    %c1_34 = arith.constant 1 : index
    %c0_35 = arith.constant 0 : index
    %c0_36 = arith.constant 0 : index
    %65 = vector.load %arg6[%c1_34, %c0_35, %c0_36] : memref<4x64x128xf32, #tpu.memory_space<vmem>>, vector<1x64x128xf32>
    %66 = vector.shape_cast %65 : vector<1x64x128xf32> to vector<64x128xf32>
    %67 = vector.shape_cast %64 : vector<64x128xf32> to vector<1x64x128xf32>
    tpu.vector_store %arg6[%c1_34, %c0_35, %c0_36], %67 {strides = array<i32>} : memref<4x64x128xf32, #tpu.memory_space<vmem>>, vector<1x64x128xf32>,
    %c1_37 = arith.constant 1 : index
    %c0_38 = arith.constant 0 : index
    %c0_39 = arith.constant 0 : index
    %68 = vector.load %arg7[%c1_37, %c0_38, %c0_39] : memref<4x64x1xf32, #tpu.memory_space<vmem>>, vector<1x64x1xf32>
    %69 = vector.shape_cast %68 : vector<1x64x1xf32> to vector<64x1xf32>
    %cst_40 = arith.constant dense<0.000000e+00> : vector<64xf32>
    %70 = vector.multi_reduction <add>, %60, %cst_40 [1] : vector<64x64xf32> to vector<64xf32>
    %71 = vector.shape_cast %70 : vector<64xf32> to vector<64x1xf32>
    %72 = arith.addf %69, %71 : vector<64x1xf32>
    %c1_41 = arith.constant 1 : index
    %c0_42 = arith.constant 0 : index
    %c0_43 = arith.constant 0 : index
    %73 = vector.load %arg7[%c1_41, %c0_42, %c0_43] : memref<4x64x1xf32, #tpu.memory_space<vmem>>, vector<1x64x1xf32>
    %74 = vector.shape_cast %73 : vector<1x64x1xf32> to vector<64x1xf32>
    %75 = vector.shape_cast %72 : vector<64x1xf32> to vector<1x64x1xf32>
    tpu.vector_store %arg7[%c1_41, %c0_42, %c0_43], %75 {strides = array<i32>} : memref<4x64x1xf32, #tpu.memory_space<vmem>>, vector<1x64x1xf32>,
    %c2 = arith.constant 2 : index
    %c0_44 = arith.constant 0 : index
    %c0_45 = arith.constant 0 : index
    %76 = vector.load %arg2[%c2, %c0_44, %c0_45] : memref<4x128x64xf32, #tpu.memory_space<vmem>>, vector<1x128x64xf32>
    %77 = vector.shape_cast %76 : vector<1x128x64xf32> to vector<128x64xf32>
    %78 = arith.mulf %77, %77 : vector<128x64xf32>
    %cst_46 = arith.constant dense<0.000000e+00> : vector<64xf32>
    %79 = vector.multi_reduction <add>, %78, %cst_46 [0] : vector<128x64xf32> to vector<64xf32>
    %80 = vector.shape_cast %79 : vector<64xf32> to vector<1x64xf32>
    %cst_47 = arith.constant 1.000000e-24 : f32
    %81 = vector.broadcast %cst_47 : f32 to vector<1x64xf32>
    %82 = arith.maximumf %80, %81 : vector<1x64xf32>
    %83 = math.rsqrt %82 : vector<1x64xf32>
    %84 = vector.broadcast %83 : vector<1x64xf32> to vector<128x64xf32>
    %85 = arith.mulf %77, %84 : vector<128x64xf32>
    %cst_48 = arith.constant dense<0.000000e+00> : vector<64x64xf32>
    %86 = tpu.matmul %3, %85, %cst_48 {dimension_numbers = #tpu.dot_dimension_numbers<[1], [0], [0], [1], [0, 0, 1, 1], [], []>} : vector<64x128xf32>, vector<128x64xf32>, vector<64x64xf32> -> vector<64x64xf32>
    %cst_49 = arith.constant dense<0xFF800000> : vector<64xf32>
    %87 = vector.multi_reduction <maximumf>, %86, %cst_49 [0] : vector<64x64xf32> to vector<64xf32>
    %88 = vector.shape_cast %87 : vector<64xf32> to vector<1x64xf32>
    %89 = vector.broadcast %88 : vector<1x64xf32> to vector<64x64xf32>
    %90 = arith.subf %86, %89 : vector<64x64xf32>
    %91 = math.exp %90 : vector<64x64xf32>
    %cst_50 = arith.constant dense<0.000000e+00> : vector<64xf32>
    %92 = vector.multi_reduction <add>, %91, %cst_50 [0] : vector<64x64xf32> to vector<64xf32>
    %93 = vector.shape_cast %92 : vector<64xf32> to vector<1x64xf32>
    %94 = tpu.reciprocal %93 : vector<1x64xf32> -> vector<1x64xf32>
    %95 = vector.broadcast %94 : vector<1x64xf32> to vector<64x64xf32>
    %96 = arith.mulf %91, %95 : vector<64x64xf32>
    %cst_51 = arith.constant dense<0.000000e+00> : vector<64x128xf32>
    %97 = tpu.matmul %96, %85, %cst_51 {dimension_numbers = #tpu.dot_dimension_numbers<[1], [1], [0], [0], [0, 0, 1, 0], [], []>} : vector<64x64xf32>, vector<128x64xf32>, vector<64x128xf32> -> vector<64x128xf32>
    %c2_52 = arith.constant 2 : index
    %c0_53 = arith.constant 0 : index
    %c0_54 = arith.constant 0 : index
    %98 = vector.load %arg6[%c2_52, %c0_53, %c0_54] : memref<4x64x128xf32, #tpu.memory_space<vmem>>, vector<1x64x128xf32>
    %99 = vector.shape_cast %98 : vector<1x64x128xf32> to vector<64x128xf32>
    %100 = arith.addf %99, %97 : vector<64x128xf32>
    %c2_55 = arith.constant 2 : index
    %c0_56 = arith.constant 0 : index
    %c0_57 = arith.constant 0 : index
    %101 = vector.load %arg6[%c2_55, %c0_56, %c0_57] : memref<4x64x128xf32, #tpu.memory_space<vmem>>, vector<1x64x128xf32>
    %102 = vector.shape_cast %101 : vector<1x64x128xf32> to vector<64x128xf32>
    %103 = vector.shape_cast %100 : vector<64x128xf32> to vector<1x64x128xf32>
    tpu.vector_store %arg6[%c2_55, %c0_56, %c0_57], %103 {strides = array<i32>} : memref<4x64x128xf32, #tpu.memory_space<vmem>>, vector<1x64x128xf32>,
    %c2_58 = arith.constant 2 : index
    %c0_59 = arith.constant 0 : index
    %c0_60 = arith.constant 0 : index
    %104 = vector.load %arg7[%c2_58, %c0_59, %c0_60] : memref<4x64x1xf32, #tpu.memory_space<vmem>>, vector<1x64x1xf32>
    %105 = vector.shape_cast %104 : vector<1x64x1xf32> to vector<64x1xf32>
    %cst_61 = arith.constant dense<0.000000e+00> : vector<64xf32>
    %106 = vector.multi_reduction <add>, %96, %cst_61 [1] : vector<64x64xf32> to vector<64xf32>
    %107 = vector.shape_cast %106 : vector<64xf32> to vector<64x1xf32>
    %108 = arith.addf %105, %107 : vector<64x1xf32>
    %c2_62 = arith.constant 2 : index
    %c0_63 = arith.constant 0 : index
    %c0_64 = arith.constant 0 : index
    %109 = vector.load %arg7[%c2_62, %c0_63, %c0_64] : memref<4x64x1xf32, #tpu.memory_space<vmem>>, vector<1x64x1xf32>
    %110 = vector.shape_cast %109 : vector<1x64x1xf32> to vector<64x1xf32>
    %111 = vector.shape_cast %108 : vector<64x1xf32> to vector<1x64x1xf32>
    tpu.vector_store %arg7[%c2_62, %c0_63, %c0_64], %111 {strides = array<i32>} : memref<4x64x1xf32, #tpu.memory_space<vmem>>, vector<1x64x1xf32>,
    %c3 = arith.constant 3 : index
    %c0_65 = arith.constant 0 : index
    %c0_66 = arith.constant 0 : index
    %112 = vector.load %arg2[%c3, %c0_65, %c0_66] : memref<4x128x64xf32, #tpu.memory_space<vmem>>, vector<1x128x64xf32>
    %113 = vector.shape_cast %112 : vector<1x128x64xf32> to vector<128x64xf32>
    %114 = arith.mulf %113, %113 : vector<128x64xf32>
    %cst_67 = arith.constant dense<0.000000e+00> : vector<64xf32>
    %115 = vector.multi_reduction <add>, %114, %cst_67 [0] : vector<128x64xf32> to vector<64xf32>
    %116 = vector.shape_cast %115 : vector<64xf32> to vector<1x64xf32>
    %cst_68 = arith.constant 1.000000e-24 : f32
    %117 = vector.broadcast %cst_68 : f32 to vector<1x64xf32>
    %118 = arith.maximumf %116, %117 : vector<1x64xf32>
    %119 = math.rsqrt %118 : vector<1x64xf32>
    %120 = vector.broadcast %119 : vector<1x64xf32> to vector<128x64xf32>
    %121 = arith.mulf %113, %120 : vector<128x64xf32>
    %cst_69 = arith.constant dense<0.000000e+00> : vector<64x64xf32>
    %122 = tpu.matmul %3, %121, %cst_69 {dimension_numbers = #tpu.dot_dimension_numbers<[1], [0], [0], [1], [0, 0, 1, 1], [], []>} : vector<64x128xf32>, vector<128x64xf32>, vector<64x64xf32> -> vector<64x64xf32>
    %cst_70 = arith.constant dense<0xFF800000> : vector<64xf32>
    %123 = vector.multi_reduction <maximumf>, %122, %cst_70 [0] : vector<64x64xf32> to vector<64xf32>
    %124 = vector.shape_cast %123 : vector<64xf32> to vector<1x64xf32>
    %125 = vector.broadcast %124 : vector<1x64xf32> to vector<64x64xf32>
    %126 = arith.subf %122, %125 : vector<64x64xf32>
    %127 = math.exp %126 : vector<64x64xf32>
    %cst_71 = arith.constant dense<0.000000e+00> : vector<64xf32>
    %128 = vector.multi_reduction <add>, %127, %cst_71 [0] : vector<64x64xf32> to vector<64xf32>
    %129 = vector.shape_cast %128 : vector<64xf32> to vector<1x64xf32>
    %130 = tpu.reciprocal %129 : vector<1x64xf32> -> vector<1x64xf32>
    %131 = vector.broadcast %130 : vector<1x64xf32> to vector<64x64xf32>
    %132 = arith.mulf %127, %131 : vector<64x64xf32>
    %cst_72 = arith.constant dense<0.000000e+00> : vector<64x128xf32>
    %133 = tpu.matmul %132, %121, %cst_72 {dimension_numbers = #tpu.dot_dimension_numbers<[1], [1], [0], [0], [0, 0, 1, 0], [], []>} : vector<64x64xf32>, vector<128x64xf32>, vector<64x128xf32> -> vector<64x128xf32>
    %c3_73 = arith.constant 3 : index
    %c0_74 = arith.constant 0 : index
    %c0_75 = arith.constant 0 : index
    %134 = vector.load %arg6[%c3_73, %c0_74, %c0_75] : memref<4x64x128xf32, #tpu.memory_space<vmem>>, vector<1x64x128xf32>
    %135 = vector.shape_cast %134 : vector<1x64x128xf32> to vector<64x128xf32>
    %136 = arith.addf %135, %133 : vector<64x128xf32>
    %c3_76 = arith.constant 3 : index
    %c0_77 = arith.constant 0 : index
    %c0_78 = arith.constant 0 : index
    %137 = vector.load %arg6[%c3_76, %c0_77, %c0_78] : memref<4x64x128xf32, #tpu.memory_space<vmem>>, vector<1x64x128xf32>
    %138 = vector.shape_cast %137 : vector<1x64x128xf32> to vector<64x128xf32>
    %139 = vector.shape_cast %136 : vector<64x128xf32> to vector<1x64x128xf32>
    tpu.vector_store %arg6[%c3_76, %c0_77, %c0_78], %139 {strides = array<i32>} : memref<4x64x128xf32, #tpu.memory_space<vmem>>, vector<1x64x128xf32>,
    %c3_79 = arith.constant 3 : index
    %c0_80 = arith.constant 0 : index
    %c0_81 = arith.constant 0 : index
    %140 = vector.load %arg7[%c3_79, %c0_80, %c0_81] : memref<4x64x1xf32, #tpu.memory_space<vmem>>, vector<1x64x1xf32>
    %141 = vector.shape_cast %140 : vector<1x64x1xf32> to vector<64x1xf32>
    %cst_82 = arith.constant dense<0.000000e+00> : vector<64xf32>
    %142 = vector.multi_reduction <add>, %132, %cst_82 [1] : vector<64x64xf32> to vector<64xf32>
    %143 = vector.shape_cast %142 : vector<64xf32> to vector<64x1xf32>
    %144 = arith.addf %141, %143 : vector<64x1xf32>
    %c3_83 = arith.constant 3 : index
    %c0_84 = arith.constant 0 : index
    %c0_85 = arith.constant 0 : index
    %145 = vector.load %arg7[%c3_83, %c0_84, %c0_85] : memref<4x64x1xf32, #tpu.memory_space<vmem>>, vector<1x64x1xf32>
    %146 = vector.shape_cast %145 : vector<1x64x1xf32> to vector<64x1xf32>
    %147 = vector.shape_cast %144 : vector<64x1xf32> to vector<1x64x1xf32>
    tpu.vector_store %arg7[%c3_83, %c0_84, %c0_85], %147 {strides = array<i32>} : memref<4x64x1xf32, #tpu.memory_space<vmem>>, vector<1x64x1xf32>,
    %c0_i32_86 = arith.constant 0 : i32
    %148 = arith.cmpi eq, %arg1, %c0_i32_86 : i32
    %149 = arith.extui %148 : i1 to i32
    %c0_i32_87 = arith.constant 0 : i32
    %150 = arith.cmpi ne, %149, %c0_i32_87 : i32
    scf.if %150 {
      %c0_88 = arith.constant 0 : index
      %c0_89 = arith.constant 0 : index
      %151 = vector.load %arg4[%c0_88, %c0_89] : memref<64x128xf32, #tpu.memory_space<vmem>>, vector<64x128xf32>
      %c0_90 = arith.constant 0 : index
      %c0_91 = arith.constant 0 : index
      %c0_92 = arith.constant 0 : index
      %152 = vector.load %arg6[%c0_90, %c0_91, %c0_92] : memref<4x64x128xf32, #tpu.memory_space<vmem>>, vector<4x64x128xf32>
      %c0_93 = arith.constant 0 : index
      %c0_94 = arith.constant 0 : index
      %c0_95 = arith.constant 0 : index
      %153 = vector.load %arg7[%c0_93, %c0_94, %c0_95] : memref<4x64x1xf32, #tpu.memory_space<vmem>>, vector<4x64x1xf32>
      %154 = vector.shape_cast %151 : vector<64x128xf32> to vector<1x64x128xf32>
      %155 = vector.broadcast %153 : vector<4x64x1xf32> to vector<4x64x128xf32>
      %156 = vector.broadcast %154 : vector<1x64x128xf32> to vector<4x64x128xf32>
      %157 = arith.mulf %155, %156 : vector<4x64x128xf32>
      %158 = arith.subf %152, %157 : vector<4x64x128xf32>
      %159 = arith.mulf %158, %158 : vector<4x64x128xf32>
      %cst_96 = arith.constant dense<0.000000e+00> : vector<4x64xf32>
      %160 = vector.multi_reduction <add>, %159, %cst_96 [2] : vector<4x64x128xf32> to vector<4x64xf32>
      %161 = vector.shape_cast %160 : vector<4x64xf32> to vector<4x64x1xf32>
      %cst_97 = arith.constant 1.000000e-24 : f32
      %162 = vector.broadcast %cst_97 : f32 to vector<4x64x1xf32>
      %163 = arith.maximumf %161, %162 : vector<4x64x1xf32>
      %164 = math.rsqrt %163 : vector<4x64x1xf32>
      %165 = vector.broadcast %164 : vector<4x64x1xf32> to vector<4x64x128xf32>
      %166 = arith.mulf %158, %165 : vector<4x64x128xf32>
      %167 = arith.mulf %166, %166 : vector<4x64x128xf32>
      %cst_98 = arith.constant dense<0.000000e+00> : vector<4x64xf32>
      %168 = vector.multi_reduction <add>, %167, %cst_98 [2] : vector<4x64x128xf32> to vector<4x64xf32>
      %169 = vector.shape_cast %168 : vector<4x64xf32> to vector<4x64x1xf32>
      %cst_99 = arith.constant dense<0.000000e+00> : vector<4x1xf32>
      %170 = vector.multi_reduction <add>, %169, %cst_99 [1] : vector<4x64x1xf32> to vector<4x1xf32>
      %171 = vector.shape_cast %170 : vector<4x1xf32> to vector<4x1x1xf32>
      %cst_100 = arith.constant 1.000000e-24 : f32
      %172 = vector.broadcast %cst_100 : f32 to vector<4x1x1xf32>
      %173 = arith.maximumf %171, %172 : vector<4x1x1xf32>
      %174 = math.rsqrt %173 : vector<4x1x1xf32>
      %175 = vector.broadcast %174 : vector<4x1x1xf32> to vector<4x64x128xf32>
      %176 = arith.mulf %166, %175 : vector<4x64x128xf32>
      %c0_101 = arith.constant 0 : index
      %c0_102 = arith.constant 0 : index
      %c0_103 = arith.constant 0 : index
      %177 = vector.load %arg5[%c0_101, %c0_102, %c0_103] : memref<4x64x128xf32, #tpu.memory_space<vmem>>, vector<4x64x128xf32>
      tpu.vector_store %arg5[%c0_101, %c0_102, %c0_103], %176 {strides = array<i32>} : memref<4x64x128xf32, #tpu.memory_space<vmem>>, vector<4x64x128xf32>,
    } else {
    }
    return
  }
  func.func @transform_0(%arg0: i32, %arg1: i32) -> (i32, i32, i32) {
    %c0_i32 = arith.constant 0 : i32
    %c0_i32_0 = arith.constant 0 : i32
    return %arg0, %c0_i32, %arg1 : i32, i32, i32
  }
  func.func @transform_1(%arg0: i32, %arg1: i32) -> (i32, i32) {
    %c0_i32 = arith.constant 0 : i32
    %c0_i32_0 = arith.constant 0 : i32
    %c0_i32_1 = arith.constant 0 : i32
    return %c0_i32, %c0_i32_0 : i32, i32
  }
  func.func @transform_2(%arg0: i32, %arg1: i32) -> (i32, i32) {
    %c0_i32 = arith.constant 0 : i32
    %c0_i32_0 = arith.constant 0 : i32
    %c0_i32_1 = arith.constant 0 : i32
    return %c0_i32, %c0_i32_0 : i32, i32
  }
  func.func @transform_3(%arg0: i32, %arg1: i32) -> (i32, i32, i32) {
    %c0_i32 = arith.constant 0 : i32
    %c0_i32_0 = arith.constant 0 : i32
    %c0_i32_1 = arith.constant 0 : i32
    return %arg0, %c0_i32, %c0_i32_0 : i32, i32, i32
  }
}

</mosaic_0001>

<llo_original>
// kernel: tpu_custom_call.1
$region0: #{tpu_custom_call.1}
  #allocation0 [shape = 'u32[]', space=smem, size = 0x4, offset = 0x4, fixed_abs, tag = 'smem constant byte address 0x4 - core index']
  #allocation1 [shape = 'u32[144,128]{1,0:T(1,128)}', space=vmem, size = 0x12000, scoped, tag = 'internal scratch']
  #allocation2 [shape = 'f32[4,64,128]{2,1,0:T(8,128)}', space=vmem, size = 0x20000, scoped, tag = 'scratch operand']
  #allocation3 [shape = 'f32[4,64,1]{2,1,0:T(8,128)}', space=vmem, size = 0x20000, scoped, tag = 'scratch operand']
  %s0 = inlined_call_operand.vmem [shape: f32[8,128,64], index: 0, kind: input, shape index: {}]
  %s1 = inlined_call_operand.vmem [shape: f32[64,128], index: 1, kind: input, shape index: {}]
  %s2 = inlined_call_operand.vmem [shape: f32[64,128], index: 2, kind: input, shape index: {}]
  %s3 = inlined_call_operand.hbm [shape: f32[8,64,128], index: 3, kind: output, shape index: {}]
  %s4 = sld [smem:[#allocation0]]
  $region53: #{tpu_custom_call.1} parent=0
    _
  %s6 = ssub.s32 1, %s4
  %s7 = scalar_select 0, %s6, %s4
  $region1: #{tpu_custom_call.1} parent=0
    #allocation4 [shape = 'u8[262144]{0}', space=vmem, size = 0x40000, scoped, tag = 'output window, operand 0']
    #allocation5 [shape = 's32[2]{0}', space=sflag, size = 0x8, scoped, tag = 'scoped memory for tpu_custom_call.1']
    %8 = vsyncpa [#allocation5], 0
    %s9 = scalar_lea.sflag [#allocation5], 1
    %10 = vsyncpa %s9, 0
    loop: start=0, step=1, limit=4
    $region2: #{tpu_custom_call.1} parent=1 // loop_pre_header
      _
    $region3: #{tpu_custom_call.1} parent=1 // loop_header
      %s12 = sphi 0, %s16
      %p13 = scmp.ge.s32.totalorder %s12, 4
      %s19 = sphi 0, %s31
      %s20 = sphi 0, %s27
      %s21 = sphi 0, %s19
      %s22 = sphi 0, %s20
      %s23 = sphi 0, %s21
      %s24 = sphi 0, %s22
      %s36 = sphi 0, %s38
      %s39 = sphi 0, %s36
      %s40 = sphi 0, %s39
      %s56 = sphi 0, %s40
      %s60 = sphi 0, %s60
      %s62 = sphi 0, %s60
      %s63 = sphi 0, %s62
      %s77 = sphi 0, %s63
      %s81 = sphi 0, %s81
      %s83 = sphi 0, %s81
      %s84 = sphi 0, %s83
      %s98 = sphi 0, %s84
      %s104 = sphi 0, %s106
      %s107 = sphi 0, %s104
      %s108 = sphi 0, %s107
      %s124 = sphi 0, %s108
    $region4: #{tpu_custom_call.1} parent=1 // loop_header_branch
      %15 = sbr.rel (%p13) target = $region8
    $region5: #{tpu_custom_call.1} parent=1 // loop_body
      %s17 = ssub.s32 %s12, 1
      %s18 = ssub.s32 %s12, 2
      %s25 = sadd.s32 1, %s20
      %p26 = scmp.ge.s32.totalorder %s25, 1
      %s27 = scalar_select %p26, 0, %s25
      %s28 = sadd.s32 1, %s19
      %s29 = scalar_select %p26, %s28, %s19
      %p30 = scmp.ge.s32.totalorder %s29, 2
      %s31 = scalar_select %p30, 0, %s29
      %s32 = ssub.s32 %s19, %s31
      %s33 = ssub.s32 %s20, %s27
      %s34 = sor.u32 %s32, %s33
      %p35 = scmp.eq.s32.totalorder %s34, 0
      %s37 = sadd.s32 %s36, 1
      %s38 = scalar_select %p35, %s36, %s37
      %p41 = pneg %p35
      %p42 = scmp.eq.s32.totalorder %s12, 1
      %p43 = por %p41, %p42
      %p44 = scmp.ne.s32.totalorder %s36, %s39
      %p45 = scmp.eq.s32.totalorder %s12, 0
      %p46 = por %p44, %p45
      %p47 = scmp.ne.s32.totalorder %s36, %s39
      %p48 = scmp.eq.s32.totalorder %s17, 1
      %p49 = por %p47, %p48
      %p50 = scmp.ne.s32.totalorder %s39, %s40
      %p51 = scmp.eq.s32.totalorder %s17, 0
      %p52 = por %p50, %p51
      %p53 = scmp.ne.s32.totalorder %s39, %s40
      %p54 = scmp.eq.s32.totalorder %s18, 1
      %p55 = por %p53, %p54
      %p57 = scmp.ne.s32.totalorder %s40, %s56
      %p58 = scmp.eq.s32.totalorder %s18, 0
      %p59 = por %p57, %p58
      %s61 = sadd.s32 %s60, 1
      %p64 = scmp.eq.s32.totalorder %s12, 1
      %p65 = scmp.ne.s32.totalorder %s60, %s62
      %p66 = scmp.eq.s32.totalorder %s12, 0
      %p67 = por %p65, %p66
      %p68 = scmp.ne.s32.totalorder %s60, %s62
      %p69 = scmp.eq.s32.totalorder %s17, 1
      %p70 = por %p68, %p69
      %p71 = scmp.ne.s32.totalorder %s62, %s63
      %p72 = scmp.eq.s32.totalorder %s17, 0
      %p73 = por %p71, %p72
      %p74 = scmp.ne.s32.totalorder %s62, %s63
      %p75 = scmp.eq.s32.totalorder %s18, 1
      %p76 = por %p74, %p75
      %p78 = scmp.ne.s32.totalorder %s63, %s77
      %p79 = scmp.eq.s32.totalorder %s18, 0
      %p80 = por %p78, %p79
      %s82 = sadd.s32 %s81, 1
      %p85 = scmp.eq.s32.totalorder %s12, 1
      %p86 = scmp.ne.s32.totalorder %s81, %s83
      %p87 = scmp.eq.s32.totalorder %s12, 0
      %p88 = por %p86, %p87
      %p89 = scmp.ne.s32.totalorder %s81, %s83
      %p90 = scmp.eq.s32.totalorder %s17, 1
      %p91 = por %p89, %p90
      %p92 = scmp.ne.s32.totalorder %s83, %s84
      %p93 = scmp.eq.s32.totalorder %s17, 0
      %p94 = por %p92, %p93
      %p95 = scmp.ne.s32.totalorder %s83, %s84
      %p96 = scmp.eq.s32.totalorder %s18, 1
      %p97 = por %p95, %p96
      %p99 = scmp.ne.s32.totalorder %s84, %s98
      %p100 = scmp.eq.s32.totalorder %s18, 0
      %p101 = por %p99, %p100
      %s102 = ssub.s32 %s19, %s31
      %p103 = scmp.eq.s32.totalorder %s102, 0
      %s105 = sadd.s32 %s104, 1
      %s106 = scalar_select %p103, %s104, %s105
      %p109 = pneg %p103
      %p110 = scmp.eq.s32.totalorder %s12, 1
      %p111 = por %p109, %p110
      %p112 = scmp.ne.s32.totalorder %s104, %s107
      %p113 = scmp.eq.s32.totalorder %s12, 0
      %p114 = por %p112, %p113
      %p115 = scmp.ne.s32.totalorder %s104, %s107
      %p116 = scmp.eq.s32.totalorder %s17, 1
      %p117 = por %p115, %p116
      %p118 = scmp.ne.s32.totalorder %s107, %s108
      %p119 = scmp.eq.s32.totalorder %s17, 0
      %p120 = por %p118, %p119
      %p121 = scmp.ne.s32.totalorder %s107, %s108
      %p122 = scmp.eq.s32.totalorder %s18, 1
      %p123 = por %p121, %p122
      %p125 = scmp.ne.s32.totalorder %s108, %s124
      %p126 = scmp.eq.s32.totalorder %s18, 0
      %p127 = por %p125, %p126
      %p128 = scmp.le.s32.totalorder 1, %s12
      %p129 = scmp.lt.s32.totalorder %s12, 3
      %p130 = pnand %p128, %p129
      %p131 = pneg %p130
      // Predicated region
      $region9: #{tpu_custom_call.1} parent=5 // pred_check
        _
      $region10: #{tpu_custom_call.1} parent=5 // pred_check_branch
        %133 = sbr.rel (%p130) target = $region12
      $region11: #{tpu_custom_call.1} parent=5 // pred_region
        %s134 = ssub.s32 %s12, 1
        // Predicated region
        $region13: #{tpu_custom_call.1} parent=11 // pred_check
          %p135 = pneg %p73
        $region14: #{tpu_custom_call.1} parent=11 // pred_check_branch
          %137 = sbr.rel (%p135) target = $region16
        $region15: #{tpu_custom_call.1} parent=11 // pred_region
          _
        $region16: #{tpu_custom_call.1} parent=11 // pred_fallthru
          _
        // Predicated region
        $region17: #{tpu_custom_call.1} parent=11 // pred_check
          %p138 = pneg %p94
        $region18: #{tpu_custom_call.1} parent=11 // pred_check_branch
          %140 = sbr.rel (%p138) target = $region20
        $region19: #{tpu_custom_call.1} parent=11 // pred_region
          _
        $region20: #{tpu_custom_call.1} parent=11 // pred_fallthru
          _
      $region12: #{tpu_custom_call.1} parent=5 // pred_fallthru
        _
      %p141 = scmp.lt.s32.totalorder %s12, 2
      // Predicated region
      $region21: #{tpu_custom_call.1} parent=5 // pred_check
        %p142 = pneg %p141
      $region22: #{tpu_custom_call.1} parent=5 // pred_check_branch
        %144 = sbr.rel (%p142) target = $region24
      $region23: #{tpu_custom_call.1} parent=5 // pred_region
        // Predicated region
        $region25: #{tpu_custom_call.1} parent=23 // pred_check
          %p145 = pneg %p46
        $region26: #{tpu_custom_call.1} parent=23 // pred_check_branch
          %147 = sbr.rel (%p145) target = $region28
        $region27: #{tpu_custom_call.1} parent=23 // pred_region
          %s148 = smul.u32 4, %s19
          %p149 = scmp.lt.s32.totalorder %s148, 7
          %s150 = scalar_select %p149, %s148, 7
          %p151 = scmp.lt.s32.totalorder %s20, 0
          %s152 = scalar_select %p151, %s20, 0
          %s153 = smul.addr %s150, 16
          %s154 = sadd.s32 %s152, %s153
          %s155 = smul.addr %s154, 8
          %s156 = scalar_lea.vmem %s0, %s155
          %s157 = smul.u32 4, %s19
        $region28: #{tpu_custom_call.1} parent=23 // pred_fallthru
          _
      $region24: #{tpu_custom_call.1} parent=5 // pred_fallthru
        _
      %p158 = scmp.le.s32.totalorder 1, %s12
      %p159 = scmp.lt.s32.totalorder %s12, 3
      %p160 = pnand %p158, %p159
      %p161 = pneg %p160
      // Predicated region
      $region29: #{tpu_custom_call.1} parent=5 // pred_check
        _
      $region30: #{tpu_custom_call.1} parent=5 // pred_check_branch
        %163 = sbr.rel (%p160) target = $region32
      $region31: #{tpu_custom_call.1} parent=5 // pred_region
        %s164 = ssub.s32 %s12, 1
        %s165 = smul.u32 4, %s21
        %p166 = scmp.lt.s32.totalorder %s165, 7
        %s167 = scalar_select %p166, %s165, 7
        %p168 = scmp.lt.s32.totalorder %s22, 0
        %s169 = scalar_select %p168, %s22, 0
        %s170 = smul.addr %s167, 16
        %s171 = sadd.s32 %s169, %s170
        %s172 = smul.addr %s171, 8
        %s173 = scalar_lea.vmem %s0, %s172
        %p174 = pneg %p52
        %p175 = pneg %p49
        %p176 = pneg %p73
        %p177 = pneg %p70
        %p178 = pneg %p94
        %p179 = pneg %p91
        %p180 = pneg %p120
        %p181 = pneg %p117
        %s182 = sand.u32 %s107, 1
        %s183 = scalar_lea.sflag [#allocation5], %s182
        %s184 = sand.u32 %s107, 1
        %s185 = smul.addr %s184, 256
        %s186 = scalar_lea.vmem [#allocation4], %s185
        %s187 = smul.u32 4, %s21
        %p188 = scmp.lt.s32.totalorder %s187, 7
        %s189 = scalar_select %p188, %s187, 7
        %p190 = scmp.lt.s32.totalorder %s22, 0
        %s191 = scalar_select %p190, %s22, 0
        %s192 = smul.addr %s189, 16
        %s193 = sadd.s32 %s191, %s192
        %s194 = smul.addr %s193, 8
        %s195 = scalar_lea.vmem %s0, %s194
        %s196 = smul.u32 4, %s21
        %s197 = smul.u32 4, %s21
        %p198 = scmp.eq.s32.totalorder %s22, 0
        // Predicated region
        $region33: #{tpu_custom_call.1} parent=31 // pred_check
          %p199 = pneg %p198
        $region34: #{tpu_custom_call.1} parent=31 // pred_check_branch
          %201 = sbr.rel (%p199) target = $region36
        $region35: #{tpu_custom_call.1} parent=31 // pred_region
          %202 = vst [vmem:[#allocation2] sm:$0xff] 0.0
          %203 = vst [vmem:[#allocation2 + $0x8] sm:$0xff] 0.0
          %204 = vst [vmem:[#allocation2 + $0x10] sm:$0xff] 0.0
          %205 = vst [vmem:[#allocation2 + $0x18] sm:$0xff] 0.0
          %206 = vst [vmem:[#allocation2 + $0x20] sm:$0xff] 0.0
          %207 = vst [vmem:[#allocation2 + $0x28] sm:$0xff] 0.0
          %208 = vst [vmem:[#allocation2 + $0x30] sm:$0xff] 0.0
          %209 = vst [vmem:[#allocation2 + $0x38] sm:$0xff] 0.0
          %210 = vst [vmem:[#allocation2 + $0x40] sm:$0xff] 0.0
          %211 = vst [vmem:[#allocation2 + $0x48] sm:$0xff] 0.0
          %212 = vst [vmem:[#allocation2 + $0x50] sm:$0xff] 0.0
          %213 = vst [vmem:[#allocation2 + $0x58] sm:$0xff] 0.0
          %214 = vst [vmem:[#allocation2 + $0x60] sm:$0xff] 0.0
          %215 = vst [vmem:[#allocation2 + $0x68] sm:$0xff] 0.0
          %216 = vst [vmem:[#allocation2 + $0x70] sm:$0xff] 0.0
          %217 = vst [vmem:[#allocation2 + $0x78] sm:$0xff] 0.0
          %218 = vst [vmem:[#allocation2 + $0x80] sm:$0xff] 0.0
          %219 = vst [vmem:[#allocation2 + $0x88] sm:$0xff] 0.0
          %220 = vst [vmem:[#allocation2 + $0x90] sm:$0xff] 0.0
          %221 = vst [vmem:[#allocation2 + $0x98] sm:$0xff] 0.0
          %222 = vst [vmem:[#allocation2 + $0xa0] sm:$0xff] 0.0
          %223 = vst [vmem:[#allocation2 + $0xa8] sm:$0xff] 0.0
          %224 = vst [vmem:[#allocation2 + $0xb0] sm:$0xff] 0.0
          %225 = vst [vmem:[#allocation2 + $0xb8] sm:$0xff] 0.0
          %226 = vst [vmem:[#allocation2 + $0xc0] sm:$0xff] 0.0
          %227 = vst [vmem:[#allocation2 + $0xc8] sm:$0xff] 0.0
          %228 = vst [vmem:[#allocation2 + $0xd0] sm:$0xff] 0.0
          %229 = vst [vmem:[#allocation2 + $0xd8] sm:$0xff] 0.0
          %230 = vst [vmem:[#allocation2 + $0xe0] sm:$0xff] 0.0
          %231 = vst [vmem:[#allocation2 + $0xe8] sm:$0xff] 0.0
          %232 = vst [vmem:[#allocation2 + $0xf0] sm:$0xff] 0.0
          %233 = vst [vmem:[#allocation2 + $0xf8] sm:$0xff] 0.0
          %vm234 = vcmask 7168
          %235 = vst.msk [vmem:[#allocation3] sm:$0xff] %vm234, 0.0
          %236 = vst.msk [vmem:[#allocation3 + $0x8] sm:$0xff] %vm234, 0.0
          %237 = vst.msk [vmem:[#allocation3 + $0x10] sm:$0xff] %vm234, 0.0
          %238 = vst.msk [vmem:[#allocation3 + $0x18] sm:$0xff] %vm234, 0.0
          %239 = vst.msk [vmem:[#allocation3 + $0x20] sm:$0xff] %vm234, 0.0
          %240 = vst.msk [vmem:[#allocation3 + $0x28] sm:$0xff] %vm234, 0.0
          %241 = vst.msk [vmem:[#allocation3 + $0x30] sm:$0xff] %vm234, 0.0
          %242 = vst.msk [vmem:[#allocation3 + $0x38] sm:$0xff] %vm234, 0.0
          %243 = vst.msk [vmem:[#allocation3 + $0x40] sm:$0xff] %vm234, 0.0
          %244 = vst.msk [vmem:[#allocation3 + $0x48] sm:$0xff] %vm234, 0.0
          %245 = vst.msk [vmem:[#allocation3 + $0x50] sm:$0xff] %vm234, 0.0
          %246 = vst.msk [vmem:[#allocation3 + $0x58] sm:$0xff] %vm234, 0.0
          %247 = vst.msk [vmem:[#allocation3 + $0x60] sm:$0xff] %vm234, 0.0
          %248 = vst.msk [vmem:[#allocation3 + $0x68] sm:$0xff] %vm234, 0.0
          %249 = vst.msk [vmem:[#allocation3 + $0x70] sm:$0xff] %vm234, 0.0
          %250 = vst.msk [vmem:[#allocation3 + $0x78] sm:$0xff] %vm234, 0.0
          %251 = vst.msk [vmem:[#allocation3 + $0x80] sm:$0xff] %vm234, 0.0
          %252 = vst.msk [vmem:[#allocation3 + $0x88] sm:$0xff] %vm234, 0.0
          %253 = vst.msk [vmem:[#allocation3 + $0x90] sm:$0xff] %vm234, 0.0
          %254 = vst.msk [vmem:[#allocation3 + $0x98] sm:$0xff] %vm234, 0.0
          %255 = vst.msk [vmem:[#allocation3 + $0xa0] sm:$0xff] %vm234, 0.0
          %256 = vst.msk [vmem:[#allocation3 + $0xa8] sm:$0xff] %vm234, 0.0
          %257 = vst.msk [vmem:[#allocation3 + $0xb0] sm:$0xff] %vm234, 0.0
          %258 = vst.msk [vmem:[#allocation3 + $0xb8] sm:$0xff] %vm234, 0.0
          %259 = vst.msk [vmem:[#allocation3 + $0xc0] sm:$0xff] %vm234, 0.0
          %260 = vst.msk [vmem:[#allocation3 + $0xc8] sm:$0xff] %vm234, 0.0
          %261 = vst.msk [vmem:[#allocation3 + $0xd0] sm:$0xff] %vm234, 0.0
          %262 = vst.msk [vmem:[#allocation3 + $0xd8] sm:$0xff] %vm234, 0.0
          %263 = vst.msk [vmem:[#allocation3 + $0xe0] sm:$0xff] %vm234, 0.0
          %264 = vst.msk [vmem:[#allocation3 + $0xe8] sm:$0xff] %vm234, 0.0
          %265 = vst.msk [vmem:[#allocation3 + $0xf0] sm:$0xff] %vm234, 0.0
          %266 = vst.msk [vmem:[#allocation3 + $0xf8] sm:$0xff] %vm234, 0.0
        $region36: #{tpu_custom_call.1} parent=31 // pred_fallthru
          _
        %v267 = vld [vmem:[%s1] sm:$0xff]
        %v268 = vld [vmem:[%s1 + $0x8] sm:$0xff]
        %v269 = vld [vmem:[%s1 + $0x10] sm:$0xff]
        %v270 = vld [vmem:[%s1 + $0x18] sm:$0xff]
        %v271 = vld [vmem:[%s1 + $0x20] sm:$0xff]
        %v272 = vld [vmem:[%s1 + $0x28] sm:$0xff]
        %v273 = vld [vmem:[%s1 + $0x30] sm:$0xff]
        %v274 = vld [vmem:[%s1 + $0x38] sm:$0xff]
        %v275 = vld [vmem:[%s195] sm:$0xff]
        %v276 = vld [vmem:[%s195 + $0x8] sm:$0xff]
        %v277 = vld [vmem:[%s195 + $0x10] sm:$0xff]
        %v278 = vld [vmem:[%s195 + $0x18] sm:$0xff]
        %v279 = vld [vmem:[%s195 + $0x20] sm:$0xff]
        %v280 = vld [vmem:[%s195 + $0x28] sm:$0xff]
        %v281 = vld [vmem:[%s195 + $0x30] sm:$0xff]
        %v282 = vld [vmem:[%s195 + $0x38] sm:$0xff]
        %v283 = vld [vmem:[%s195 + $0x40] sm:$0xff]
        %v284 = vld [vmem:[%s195 + $0x48] sm:$0xff]
        %v285 = vld [vmem:[%s195 + $0x50] sm:$0xff]
        %v286 = vld [vmem:[%s195 + $0x58] sm:$0xff]
        %v287 = vld [vmem:[%s195 + $0x60] sm:$0xff]
        %v288 = vld [vmem:[%s195 + $0x68] sm:$0xff]
        %v289 = vld [vmem:[%s195 + $0x70] sm:$0xff]
        %v290 = vld [vmem:[%s195 + $0x78] sm:$0xff]
        %v291 = vmul.f32 %v275, %v275
        %v292 = vmul.f32 %v276, %v276
        %v293 = vmul.f32 %v277, %v277
        %v294 = vmul.f32 %v278, %v278
        %v295 = vmul.f32 %v279, %v279
        %v296 = vmul.f32 %v280, %v280
        %v297 = vmul.f32 %v281, %v281
        %v298 = vmul.f32 %v282, %v282
        %v299 = vmul.f32 %v283, %v283
        %v300 = vmul.f32 %v284, %v284
        %v301 = vmul.f32 %v285, %v285
        %v302 = vmul.f32 %v286, %v286
        %v303 = vmul.f32 %v287, %v287
        %v304 = vmul.f32 %v288, %v288
        %v305 = vmul.f32 %v289, %v289
        %v306 = vmul.f32 %v290, %v290
        %vm307 = vcmask 523264
        %v308 = vsel %vm307, %v291, 0.0
        %v309 = vsel %vm307, %v292, 0.0
        %v310 = vadd.f32 %v308, %v309
        %v311 = vsel %vm307, %v293, 0.0
        %v312 = vadd.f32 %v310, %v311
        %v313 = vsel %vm307, %v294, 0.0
        %v314 = vadd.f32 %v312, %v313
        %v315 = vsel %vm307, %v295, 0.0
        %v316 = vadd.f32 %v314, %v315
        %v317 = vsel %vm307, %v296, 0.0
        %v318 = vadd.f32 %v316, %v317
        %v319 = vsel %vm307, %v297, 0.0
        %v320 = vadd.f32 %v318, %v319
        %v321 = vsel %vm307, %v298, 0.0
        %v322 = vadd.f32 %v320, %v321
        %v323 = vsel %vm307, %v299, 0.0
        %v324 = vadd.f32 %v322, %v323
        %v325 = vsel %vm307, %v300, 0.0
        %v326 = vadd.f32 %v324, %v325
        %v327 = vsel %vm307, %v301, 0.0
        %v328 = vadd.f32 %v326, %v327
        %v329 = vsel %vm307, %v302, 0.0
        %v330 = vadd.f32 %v328, %v329
        %v331 = vsel %vm307, %v303, 0.0
        %v332 = vadd.f32 %v330, %v331
        %v333 = vsel %vm307, %v304, 0.0
        %v334 = vadd.f32 %v332, %v333
        %v335 = vsel %vm307, %v305, 0.0
        %v336 = vadd.f32 %v334, %v335
        %v337 = vsel %vm307, %v306, 0.0
        %v338 = vadd.f32 %v336, %v337
        %v339 = vrot.slane %v338, 4
        %v340 = vadd.f32 %v338, %v339
        %v341 = vrot.slane %v340, 2
        %v342 = vadd.f32 %v340, %v341
        %v343 = vrot.slane %v342, 1
        %v344 = vadd.f32 %v342, %v343
        %v345 = vmax.f32 %v344, 1e-24
        %v346 = vrsqrt.pop %v345
        %v347 = vmul.f32 %v275, %v346
        %v348 = vmul.f32 %v276, %v346
        %v349 = vmul.f32 %v277, %v346
        %v350 = vmul.f32 %v278, %v346
        %v351 = vmul.f32 %v279, %v346
        %v352 = vmul.f32 %v280, %v346
        %v353 = vmul.f32 %v281, %v346
        %v354 = vmul.f32 %v282, %v346
        %v355 = vmul.f32 %v283, %v346
        %v356 = vmul.f32 %v284, %v346
        %v357 = vmul.f32 %v285, %v346
        %v358 = vmul.f32 %v286, %v346
        %v359 = vmul.f32 %v287, %v346
        %v360 = vmul.f32 %v288, %v346
        %v361 = vmul.f32 %v289, %v346
        %v362 = vmul.f32 %v290, %v346
        %363 = vmatprep.subr.mxu0 0.0
        %364 = vmatpush1.msra.mxu0 %v362
        %365 = vmatprep.subr.mxu0 0.0
        %366 = vmatpush1.msra.mxu0 %v361
        %367 = vmatprep.subr.mxu0 0.0
        %368 = vmatpush1.msra.mxu0 %v360
        %369 = vmatprep.subr.mxu0 0.0
        %370 = vmatpush1.msra.mxu0 %v359
        %371 = vmatprep.subr.mxu0 0.0
        %372 = vmatpush1.msra.mxu0 %v358
        %373 = vmatprep.subr.mxu0 0.0
        %374 = vmatpush1.msra.mxu0 %v357
        %375 = vmatprep.subr.mxu0 0.0
        %376 = vmatpush1.msra.mxu0 %v356
        %377 = vmatprep.subr.mxu0 0.0
        %378 = vmatpush1.msra.mxu0 %v355
        %379 = vmatprep.subr.mxu0 0.0
        %380 = vmatpush1.msra.mxu0 %v354
        %381 = vmatprep.subr.mxu0 0.0
        %382 = vmatpush1.msra.mxu0 %v353
        %383 = vmatprep.subr.mxu0 0.0
        %384 = vmatpush1.msra.mxu0 %v352
        %385 = vmatprep.subr.mxu0 0.0
        %386 = vmatpush1.msra.mxu0 %v351
        %387 = vmatprep.subr.mxu0 0.0
        %388 = vmatpush1.msra.mxu0 %v350
        %389 = vmatprep.subr.mxu0 0.0
        %390 = vmatpush1.msra.mxu0 %v349
        %391 = vmatprep.subr.mxu0 0.0
        %392 = vmatpush1.msra.mxu0 %v348
        %393 = vmatprep.subr.mxu0 0.0
        %394 = vmatpush1.msra.mxu0 %v347
        %395 = vmatprep.subr.mxu0 0.0
        %396 = vmatpush2.msra.mxu0 0.0
        %397 = vmatprep.subr.mxu0 0.0
        %398 = vmatpush2.msra.mxu0 0.0
        %399 = vmatprep.subr.mxu0 0.0
        %400 = vmatpush2.msra.mxu0 0.0
        %401 = vmatprep.subr.mxu0 0.0
        %402 = vmatpush2.msra.mxu0 0.0
        %403 = vmatprep.subr.mxu0 0.0
        %404 = vmatpush2.msra.mxu0 0.0
        %405 = vmatprep.subr.mxu0 0.0
        %406 = vmatpush2.msra.mxu0 0.0
        %407 = vmatprep.subr.mxu0 0.0
        %408 = vmatpush2.msra.mxu0 0.0
        %409 = vmatprep.subr.mxu0 0.0
        %410 = vmatpush2.msra.mxu0 0.0
        %411 = vmatprep.subr.mxu0 0.0
        %412 = vmatpush2.msra.mxu0 0.0
        %413 = vmatprep.subr.mxu0 0.0
        %414 = vmatpush2.msra.mxu0 0.0
        %415 = vmatprep.subr.mxu0 0.0
        %416 = vmatpush2.msra.mxu0 0.0
        %417 = vmatprep.subr.mxu0 0.0
        %418 = vmatpush2.msra.mxu0 0.0
        %419 = vmatprep.subr.mxu0 0.0
        %420 = vmatpush2.msra.mxu0 0.0
        %421 = vmatprep.subr.mxu0 0.0
        %422 = vmatpush2.msra.mxu0 0.0
        %423 = vmatprep.subr.mxu0 0.0
        %424 = vmatpush2.msra.mxu0 0.0
        %425 = vmatprep.subr.mxu0 0.0
        %426 = vmatpush2.msra.mxu0 0.0
        %427 = vmatprep.mubr.f32.mxu0 0.0
        %428 = vmatmul.mubr.f32.gmra.mxu0 %v267
        %v429 = vpop.f32.mrf.mxu0
        %v430 = vadd.f32 0.0, %v429
        %v431 = vpop.f32.mrf.mxu0
        %432 = vmatprep.mubr.f32.mxu0 0.0
        %433 = vmatmul.mubr.f32.gmra.mxu0 %v268
        %v434 = vpop.f32.mrf.mxu0
        %v435 = vadd.f32 0.0, %v434
        %v436 = vpop.f32.mrf.mxu0
        %437 = vmatprep.mubr.f32.mxu0 0.0
        %438 = vmatmul.mubr.f32.gmra.mxu0 %v269
        %v439 = vpop.f32.mrf.mxu0
        %v440 = vadd.f32 0.0, %v439
        %v441 = vpop.f32.mrf.mxu0
        %442 = vmatprep.mubr.f32.mxu0 0.0
        %443 = vmatmul.mubr.f32.gmra.mxu0 %v270
        %v444 = vpop.f32.mrf.mxu0
        %v445 = vadd.f32 0.0, %v444
        %v446 = vpop.f32.mrf.mxu0
        %447 = vmatprep.mubr.f32.mxu0 0.0
        %448 = vmatmul.mubr.f32.gmra.mxu0 %v271
        %v449 = vpop.f32.mrf.mxu0
        %v450 = vadd.f32 0.0, %v449
        %v451 = vpop.f32.mrf.mxu0
        %452 = vmatprep.mubr.f32.mxu0 0.0
        %453 = vmatmul.mubr.f32.gmra.mxu0 %v272
        %v454 = vpop.f32.mrf.mxu0
        %v455 = vadd.f32 0.0, %v454
        %v456 = vpop.f32.mrf.mxu0
        %457 = vmatprep.mubr.f32.mxu0 0.0
        %458 = vmatmul.mubr.f32.gmra.mxu0 %v273
        %v459 = vpop.f32.mrf.mxu0
        %v460 = vadd.f32 0.0, %v459
        %v461 = vpop.f32.mrf.mxu0
        %462 = vmatprep.mubr.f32.mxu0 0.0
        %463 = vmatmul.mubr.f32.gmra.mxu0 %v274
        %v464 = vpop.f32.mrf.mxu0
        %v465 = vadd.f32 0.0, %v464
        %v466 = vpop.f32.mrf.mxu0
        %467 = vdwg.mxu0
        %v468 = vsel %vm307, %v430, -inf
        %v469 = vsel %vm307, %v435, -inf
        %v470 = vsel %vm307, %v440, -inf
        %v471 = vsel %vm307, %v445, -inf
        %v472 = vsel %vm307, %v450, -inf
        %v473 = vmax.f32 %v468, %v472
        %v474 = vsel %vm307, %v455, -inf
        %v475 = vmax.f32 %v469, %v474
        %v476 = vsel %vm307, %v460, -inf
        %v477 = vmax.f32 %v470, %v476
        %v478 = vsel %vm307, %v465, -inf
        %v479 = vmax.f32 %v471, %v478
        %v480 = vmax.f32 %v473, %v475
        %v481 = vmax.f32 %v477, %v479
        %v482 = vmax.f32 %v480, %v481
        %v483 = vrot.slane %v482, 4
        %v484 = vmax.f32 %v482, %v483
        %v485 = vrot.slane %v484, 2
        %v486 = vmax.f32 %v484, %v485
        %v487 = vrot.slane %v486, 1
        %v488 = vmax.f32 %v486, %v487
        %v489 = vsub.f32 %v430, %v488
        %v490 = vsub.f32 %v435, %v488
        %v491 = vsub.f32 %v440, %v488
        %v492 = vsub.f32 %v445, %v488
        %v493 = vsub.f32 %v450, %v488
        %v494 = vsub.f32 %v455, %v488
        %v495 = vsub.f32 %v460, %v488
        %v496 = vsub.f32 %v465, %v488
        %v497 = vmul.f32 %v489, 1.442695
        %v498 = vpow.pop %v497
        %v499 = vmul.f32 %v490, 1.442695
        %v500 = vpow.pop %v499
        %v501 = vmul.f32 %v491, 1.442695
        %v502 = vpow.pop %v501
        %v503 = vmul.f32 %v492, 1.442695
        %v504 = vpow.pop %v503
        %v505 = vmul.f32 %v493, 1.442695
        %v506 = vpow.pop %v505
        %v507 = vmul.f32 %v494, 1.442695
        %v508 = vpow.pop %v507
        %v509 = vmul.f32 %v495, 1.442695
        %v510 = vpow.pop %v509
        %v511 = vmul.f32 %v496, 1.442695
        %v512 = vpow.pop %v511
        %v513 = vsel %vm307, %v498, 0.0
        %v514 = vsel %vm307, %v500, 0.0
        %v515 = vadd.f32 %v513, %v514
        %v516 = vsel %vm307, %v502, 0.0
        %v517 = vadd.f32 %v515, %v516
        %v518 = vsel %vm307, %v504, 0.0
        %v519 = vadd.f32 %v517, %v518
        %v520 = vsel %vm307, %v506, 0.0
        %v521 = vadd.f32 %v519, %v520
        %v522 = vsel %vm307, %v508, 0.0
        %v523 = vadd.f32 %v521, %v522
        %v524 = vsel %vm307, %v510, 0.0
        %v525 = vadd.f32 %v523, %v524
        %v526 = vsel %vm307, %v512, 0.0
        %v527 = vadd.f32 %v525, %v526
        %v528 = vrot.slane %v527, 4
        %v529 = vadd.f32 %v527, %v528
        %v530 = vrot.slane %v529, 2
        %v531 = vadd.f32 %v529, %v530
        %v532 = vrot.slane %v531, 1
        %v533 = vadd.f32 %v531, %v532
        %v534 = vrcp.pop %v533
        %v535 = vmul.f32 %v498, %v534
        %v536 = vmul.f32 %v500, %v534
        %v537 = vmul.f32 %v502, %v534
        %v538 = vmul.f32 %v504, %v534
        %v539 = vmul.f32 %v506, %v534
        %v540 = vmul.f32 %v508, %v534
        %v541 = vmul.f32 %v510, %v534
        %v542 = vmul.f32 %v512, %v534
        %v544 = vsel %vm307, %v535, 0
        %v547 = vsel %vm307, %v536, 0
        %v550 = vsel %vm307, %v537, 0
        %v553 = vsel %vm307, %v538, 0
        %v556 = vsel %vm307, %v539, 0
        %v559 = vsel %vm307, %v540, 0
        %v562 = vsel %vm307, %v541, 0
        %v565 = vsel %vm307, %v542, 0
        %v568 = vsel %vm307, %v347, 0
        %v571 = vsel %vm307, %v348, 0
        %v574 = vsel %vm307, %v349, 0
        %v577 = vsel %vm307, %v350, 0
        %v580 = vsel %vm307, %v351, 0
        %v583 = vsel %vm307, %v352, 0
        %v586 = vsel %vm307, %v353, 0
        %v589 = vsel %vm307, %v354, 0
        %v592 = vsel %vm307, %v355, 0
        %v595 = vsel %vm307, %v356, 0
        %v598 = vsel %vm307, %v357, 0
        %v601 = vsel %vm307, %v358, 0
        %v604 = vsel %vm307, %v359, 0
        %v607 = vsel %vm307, %v360, 0
        %v610 = vsel %vm307, %v361, 0
        %v613 = vsel %vm307, %v362, 0
        %615 = vmatprep.subr.mxu0 0.0
        %616 = vmatpush1.xpose.msra.mxu0 %v613
        %617 = vmatprep.subr.mxu0 0.0
        %618 = vmatpush1.xpose.msra.mxu0 %v610
        %619 = vmatprep.subr.mxu0 0.0
        %620 = vmatpush1.xpose.msra.mxu0 %v607
        %621 = vmatprep.subr.mxu0 0.0
        %622 = vmatpush1.xpose.msra.mxu0 %v604
        %623 = vmatprep.subr.mxu0 0.0
        %624 = vmatpush1.xpose.msra.mxu0 %v601
        %625 = vmatprep.subr.mxu0 0.0
        %626 = vmatpush1.xpose.msra.mxu0 %v598
        %627 = vmatprep.subr.mxu0 0.0
        %628 = vmatpush1.xpose.msra.mxu0 %v595
        %629 = vmatprep.subr.mxu0 0.0
        %630 = vmatpush1.xpose.msra.mxu0 %v592
        %631 = vmatprep.subr.mxu0 0.0
        %632 = vmatpush1.xpose.msra.mxu0 %v589
        %633 = vmatprep.subr.mxu0 0.0
        %634 = vmatpush1.xpose.msra.mxu0 %v586
        %635 = vmatprep.subr.mxu0 0.0
        %636 = vmatpush1.xpose.msra.mxu0 %v583
        %637 = vmatprep.subr.mxu0 0.0
        %638 = vmatpush1.xpose.msra.mxu0 %v580
        %639 = vmatprep.subr.mxu0 0.0
        %640 = vmatpush1.xpose.msra.mxu0 %v577
        %641 = vmatprep.subr.mxu0 0.0
        %642 = vmatpush1.xpose.msra.mxu0 %v574
        %643 = vmatprep.subr.mxu0 0.0
        %644 = vmatpush1.xpose.msra.mxu0 %v571
        %645 = vmatprep.subr.mxu0 0.0
        %646 = vmatpush1.xpose.msra.mxu0 %v568
        %647 = vmatprep.subr.mxu0 0.0
        %648 = vmatpush2.xpose.msra.mxu0 0.0
        %649 = vmatprep.subr.mxu0 0.0
        %650 = vmatpush2.xpose.msra.mxu0 0.0
        %651 = vmatprep.subr.mxu0 0.0
        %652 = vmatpush2.xpose.msra.mxu0 0.0
        %653 = vmatprep.subr.mxu0 0.0
        %654 = vmatpush2.xpose.msra.mxu0 0.0
        %655 = vmatprep.subr.mxu0 0.0
        %656 = vmatpush2.xpose.msra.mxu0 0.0
        %657 = vmatprep.subr.mxu0 0.0
        %658 = vmatpush2.xpose.msra.mxu0 0.0
        %659 = vmatprep.subr.mxu0 0.0
        %660 = vmatpush2.xpose.msra.mxu0 0.0
        %661 = vmatprep.subr.mxu0 0.0
        %662 = vmatpush2.xpose.msra.mxu0 0.0
        %663 = vmatprep.subr.mxu0 0.0
        %664 = vmatpush2.xpose.msra.mxu0 0.0
        %665 = vmatprep.subr.mxu0 0.0
        %666 = vmatpush2.xpose.msra.mxu0 0.0
        %667 = vmatprep.subr.mxu0 0.0
        %668 = vmatpush2.xpose.msra.mxu0 0.0
        %669 = vmatprep.subr.mxu0 0.0
        %670 = vmatpush2.xpose.msra.mxu0 0.0
        %671 = vmatprep.subr.mxu0 0.0
        %672 = vmatpush2.xpose.msra.mxu0 0.0
        %673 = vmatprep.subr.mxu0 0.0
        %674 = vmatpush2.xpose.msra.mxu0 0.0
        %675 = vmatprep.subr.mxu0 0.0
        %676 = vmatpush2.xpose.msra.mxu0 0.0
        %677 = vmatprep.subr.mxu0 0.0
        %678 = vmatpush2.xpose.msra.mxu0 0.0
        %679 = vmatprep.mubr.f32.mxu0 0.0
        %680 = vmatmul.mubr.f32.gmra.mxu0 %v544
        %v681 = vpop.f32.mrf.mxu0
        %v682 = vadd.f32 0.0, %v681
        %v683 = vpop.f32.mrf.mxu0
        %684 = vmatprep.mubr.f32.mxu0 0.0
        %685 = vmatmul.mubr.f32.gmra.mxu0 %v547
        %v686 = vpop.f32.mrf.mxu0
        %v687 = vadd.f32 0.0, %v686
        %v688 = vpop.f32.mrf.mxu0
        %689 = vmatprep.mubr.f32.mxu0 0.0
        %690 = vmatmul.mubr.f32.gmra.mxu0 %v550
        %v691 = vpop.f32.mrf.mxu0
        %v692 = vadd.f32 0.0, %v691
        %v693 = vpop.f32.mrf.mxu0
        %694 = vmatprep.mubr.f32.mxu0 0.0
        %695 = vmatmul.mubr.f32.gmra.mxu0 %v553
        %v696 = vpop.f32.mrf.mxu0
        %v697 = vadd.f32 0.0, %v696
        %v698 = vpop.f32.mrf.mxu0
        %699 = vmatprep.mubr.f32.mxu0 0.0
        %700 = vmatmul.mubr.f32.gmra.mxu0 %v556
        %v701 = vpop.f32.mrf.mxu0
        %v702 = vadd.f32 0.0, %v701
        %v703 = vpop.f32.mrf.mxu0
        %704 = vmatprep.mubr.f32.mxu0 0.0
        %705 = vmatmul.mubr.f32.gmra.mxu0 %v559
        %v706 = vpop.f32.mrf.mxu0
        %v707 = vadd.f32 0.0, %v706
        %v708 = vpop.f32.mrf.mxu0
        %709 = vmatprep.mubr.f32.mxu0 0.0
        %710 = vmatmul.mubr.f32.gmra.mxu0 %v562
        %v711 = vpop.f32.mrf.mxu0
        %v712 = vadd.f32 0.0, %v711
        %v713 = vpop.f32.mrf.mxu0
        %714 = vmatprep.mubr.f32.mxu0 0.0
        %715 = vmatmul.mubr.f32.gmra.mxu0 %v565
        %v716 = vpop.f32.mrf.mxu0
        %v717 = vadd.f32 0.0, %v716
        %v718 = vpop.f32.mrf.mxu0
        %719 = vdwg.mxu0
        %v720 = vld [vmem:[#allocation2] sm:$0xff]
        %v721 = vld [vmem:[#allocation2 + $0x8] sm:$0xff]
        %v722 = vld [vmem:[#allocation2 + $0x10] sm:$0xff]
        %v723 = vld [vmem:[#allocation2 + $0x18] sm:$0xff]
        %v724 = vld [vmem:[#allocation2 + $0x20] sm:$0xff]
        %v725 = vld [vmem:[#allocation2 + $0x28] sm:$0xff]
        %v726 = vld [vmem:[#allocation2 + $0x30] sm:$0xff]
        %v727 = vld [vmem:[#allocation2 + $0x38] sm:$0xff]
        %v728 = vadd.f32 %v720, %v682
        %v729 = vadd.f32 %v721, %v687
        %v730 = vadd.f32 %v722, %v692
        %v731 = vadd.f32 %v723, %v697
        %v732 = vadd.f32 %v724, %v702
        %v733 = vadd.f32 %v725, %v707
        %v734 = vadd.f32 %v726, %v712
        %v735 = vadd.f32 %v727, %v717
        %736 = vst [vmem:[#allocation2] sm:$0xff] %v728
        %737 = vst [vmem:[#allocation2 + $0x8] sm:$0xff] %v729
        %738 = vst [vmem:[#allocation2 + $0x10] sm:$0xff] %v730
        %739 = vst [vmem:[#allocation2 + $0x18] sm:$0xff] %v731
        %740 = vst [vmem:[#allocation2 + $0x20] sm:$0xff] %v732
        %741 = vst [vmem:[#allocation2 + $0x28] sm:$0xff] %v733
        %742 = vst [vmem:[#allocation2 + $0x30] sm:$0xff] %v734
        %743 = vst [vmem:[#allocation2 + $0x38] sm:$0xff] %v735
        %v744 = vld [vmem:[#allocation3] sm:$0xff]
        %v745 = vld [vmem:[#allocation3 + $0x8] sm:$0xff]
        %v746 = vld [vmem:[#allocation3 + $0x10] sm:$0xff]
        %v747 = vld [vmem:[#allocation3 + $0x18] sm:$0xff]
        %v748 = vld [vmem:[#allocation3 + $0x20] sm:$0xff]
        %v749 = vld [vmem:[#allocation3 + $0x28] sm:$0xff]
        %v750 = vld [vmem:[#allocation3 + $0x30] sm:$0xff]
        %v751 = vld [vmem:[#allocation3 + $0x38] sm:$0xff]
        %v752 = vsel %vm307, %v535, 0.0
        %753 = vadd.xlane.f32.xlu0 %v752
        %v754 = vpop.xlane.xlu0 %753
        %v755 = vsel %vm307, %v536, 0.0
        %756 = vadd.xlane.f32.xlu0 %v755
        %v757 = vpop.xlane.xlu0 %756
        %v758 = vsel %vm307, %v537, 0.0
        %759 = vadd.xlane.f32.xlu0 %v758
        %v760 = vpop.xlane.xlu0 %759
        %v761 = vsel %vm307, %v538, 0.0
        %762 = vadd.xlane.f32.xlu0 %v761
        %v763 = vpop.xlane.xlu0 %762
        %v764 = vsel %vm307, %v539, 0.0
        %765 = vadd.xlane.f32.xlu0 %v764
        %v766 = vpop.xlane.xlu0 %765
        %v767 = vsel %vm307, %v540, 0.0
        %768 = vadd.xlane.f32.xlu0 %v767
        %v769 = vpop.xlane.xlu0 %768
        %v770 = vsel %vm307, %v541, 0.0
        %771 = vadd.xlane.f32.xlu0 %v770
        %v772 = vpop.xlane.xlu0 %771
        %v773 = vsel %vm307, %v542, 0.0
        %774 = vadd.xlane.f32.xlu0 %v773
        %v775 = vpop.xlane.xlu0 %774
        %v776 = vadd.f32 %v744, %v754
        %v777 = vadd.f32 %v745, %v757
        %v778 = vadd.f32 %v746, %v760
        %v779 = vadd.f32 %v747, %v763
        %v780 = vadd.f32 %v748, %v766
        %v781 = vadd.f32 %v749, %v769
        %v782 = vadd.f32 %v750, %v772
        %v783 = vadd.f32 %v751, %v775
        %vm784 = vcmask 7168
        %785 = vst.msk [vmem:[#allocation3] sm:$0xff] %vm784, %v776
        %786 = vst.msk [vmem:[#allocation3 + $0x8] sm:$0xff] %vm784, %v777
        %787 = vst.msk [vmem:[#allocation3 + $0x10] sm:$0xff] %vm784, %v778
        %788 = vst.msk [vmem:[#allocation3 + $0x18] sm:$0xff] %vm784, %v779
        %789 = vst.msk [vmem:[#allocation3 + $0x20] sm:$0xff] %vm784, %v780
        %790 = vst.msk [vmem:[#allocation3 + $0x28] sm:$0xff] %vm784, %v781
        %791 = vst.msk [vmem:[#allocation3 + $0x30] sm:$0xff] %vm784, %v782
        %792 = vst.msk [vmem:[#allocation3 + $0x38] sm:$0xff] %vm784, %v783
        %s793 = scalar_lea.vmem %s195, 128
        %v794 = vld [vmem:[%s793] sm:$0xff]
        %v795 = vld [vmem:[%s793 + $0x8] sm:$0xff]
        %v796 = vld [vmem:[%s793 + $0x10] sm:$0xff]
        %v797 = vld [vmem:[%s793 + $0x18] sm:$0xff]
        %v798 = vld [vmem:[%s793 + $0x20] sm:$0xff]
        %v799 = vld [vmem:[%s793 + $0x28] sm:$0xff]
        %v800 = vld [vmem:[%s793 + $0x30] sm:$0xff]
        %v801 = vld [vmem:[%s793 + $0x38] sm:$0xff]
        %v802 = vld [vmem:[%s793 + $0x40] sm:$0xff]
        %v803 = vld [vmem:[%s793 + $0x48] sm:$0xff]
        %v804 = vld [vmem:[%s793 + $0x50] sm:$0xff]
        %v805 = vld [vmem:[%s793 + $0x58] sm:$0xff]
        %v806 = vld [vmem:[%s793 + $0x60] sm:$0xff]
        %v807 = vld [vmem:[%s793 + $0x68] sm:$0xff]
        %v808 = vld [vmem:[%s793 + $0x70] sm:$0xff]
        %v809 = vld [vmem:[%s793 + $0x78] sm:$0xff]
        %v810 = vmul.f32 %v794, %v794
        %v811 = vmul.f32 %v795, %v795
        %v812 = vmul.f32 %v796, %v796
        %v813 = vmul.f32 %v797, %v797
        %v814 = vmul.f32 %v798, %v798
        %v815 = vmul.f32 %v799, %v799
        %v816 = vmul.f32 %v800, %v800
        %v817 = vmul.f32 %v801, %v801
        %v818 = vmul.f32 %v802, %v802
        %v819 = vmul.f32 %v803, %v803
        %v820 = vmul.f32 %v804, %v804
        %v821 = vmul.f32 %v805, %v805
        %v822 = vmul.f32 %v806, %v806
        %v823 = vmul.f32 %v807, %v807
        %v824 = vmul.f32 %v808, %v808
        %v825 = vmul.f32 %v809, %v809
        %v826 = vsel %vm307, %v810, 0.0
        %v827 = vsel %vm307, %v811, 0.0
        %v828 = vadd.f32 %v826, %v827
        %v829 = vsel %vm307, %v812, 0.0
        %v830 = vadd.f32 %v828, %v829
        %v831 = vsel %vm307, %v813, 0.0
        %v832 = vadd.f32 %v830, %v831
        %v833 = vsel %vm307, %v814, 0.0
        %v834 = vadd.f32 %v832, %v833
        %v835 = vsel %vm307, %v815, 0.0
        %v836 = vadd.f32 %v834, %v835
        %v837 = vsel %vm307, %v816, 0.0
        %v838 = vadd.f32 %v836, %v837
        %v839 = vsel %vm307, %v817, 0.0
        %v840 = vadd.f32 %v838, %v839
        %v841 = vsel %vm307, %v818, 0.0
        %v842 = vadd.f32 %v840, %v841
        %v843 = vsel %vm307, %v819, 0.0
        %v844 = vadd.f32 %v842, %v843
        %v845 = vsel %vm307, %v820, 0.0
        %v846 = vadd.f32 %v844, %v845
        %v847 = vsel %vm307, %v821, 0.0
        %v848 = vadd.f32 %v846, %v847
        %v849 = vsel %vm307, %v822, 0.0
        %v850 = vadd.f32 %v848, %v849
        %v851 = vsel %vm307, %v823, 0.0
        %v852 = vadd.f32 %v850, %v851
        %v853 = vsel %vm307, %v824, 0.0
        %v854 = vadd.f32 %v852, %v853
        %v855 = vsel %vm307, %v825, 0.0
        %v856 = vadd.f32 %v854, %v855
        %v857 = vrot.slane %v856, 4
        %v858 = vadd.f32 %v856, %v857
        %v859 = vrot.slane %v858, 2
        %v860 = vadd.f32 %v858, %v859
        %v861 = vrot.slane %v860, 1
        %v862 = vadd.f32 %v860, %v861
        %v863 = vmax.f32 %v862, 1e-24
        %v864 = vrsqrt.pop %v863
        %v865 = vmul.f32 %v794, %v864
        %v866 = vmul.f32 %v795, %v864
        %v867 = vmul.f32 %v796, %v864
        %v868 = vmul.f32 %v797, %v864
        %v869 = vmul.f32 %v798, %v864
        %v870 = vmul.f32 %v799, %v864
        %v871 = vmul.f32 %v800, %v864
        %v872 = vmul.f32 %v801, %v864
        %v873 = vmul.f32 %v802, %v864
        %v874 = vmul.f32 %v803, %v864
        %v875 = vmul.f32 %v804, %v864
        %v876 = vmul.f32 %v805, %v864
        %v877 = vmul.f32 %v806, %v864
        %v878 = vmul.f32 %v807, %v864
        %v879 = vmul.f32 %v808, %v864
        %v880 = vmul.f32 %v809, %v864
        %881 = vmatprep.subr.mxu0 0.0
        %882 = vmatpush1.msra.mxu0 %v880
        %883 = vmatprep.subr.mxu0 0.0
        %884 = vmatpush1.msra.mxu0 %v879
        %885 = vmatprep.subr.mxu0 0.0
        %886 = vmatpush1.msra.mxu0 %v878
        %887 = vmatprep.subr.mxu0 0.0
        %888 = vmatpush1.msra.mxu0 %v877
        %889 = vmatprep.subr.mxu0 0.0
        %890 = vmatpush1.msra.mxu0 %v876
        %891 = vmatprep.subr.mxu0 0.0
        %892 = vmatpush1.msra.mxu0 %v875
        %893 = vmatprep.subr.mxu0 0.0
        %894 = vmatpush1.msra.mxu0 %v874
        %895 = vmatprep.subr.mxu0 0.0
        %896 = vmatpush1.msra.mxu0 %v873
        %897 = vmatprep.subr.mxu0 0.0
        %898 = vmatpush1.msra.mxu0 %v872
        %899 = vmatprep.subr.mxu0 0.0
        %900 = vmatpush1.msra.mxu0 %v871
        %901 = vmatprep.subr.mxu0 0.0
        %902 = vmatpush1.msra.mxu0 %v870
        %903 = vmatprep.subr.mxu0 0.0
        %904 = vmatpush1.msra.mxu0 %v869
        %905 = vmatprep.subr.mxu0 0.0
        %906 = vmatpush1.msra.mxu0 %v868
        %907 = vmatprep.subr.mxu0 0.0
        %908 = vmatpush1.msra.mxu0 %v867
        %909 = vmatprep.subr.mxu0 0.0
        %910 = vmatpush1.msra.mxu0 %v866
        %911 = vmatprep.subr.mxu0 0.0
        %912 = vmatpush1.msra.mxu0 %v865
        %913 = vmatprep.subr.mxu0 0.0
        %914 = vmatpush2.msra.mxu0 0.0
        %915 = vmatprep.subr.mxu0 0.0
        %916 = vmatpush2.msra.mxu0 0.0
        %917 = vmatprep.subr.mxu0 0.0
        %918 = vmatpush2.msra.mxu0 0.0
        %919 = vmatprep.subr.mxu0 0.0
        %920 = vmatpush2.msra.mxu0 0.0
        %921 = vmatprep.subr.mxu0 0.0
        %922 = vmatpush2.msra.mxu0 0.0
        %923 = vmatprep.subr.mxu0 0.0
        %924 = vmatpush2.msra.mxu0 0.0
        %925 = vmatprep.subr.mxu0 0.0
        %926 = vmatpush2.msra.mxu0 0.0
        %927 = vmatprep.subr.mxu0 0.0
        %928 = vmatpush2.msra.mxu0 0.0
        %929 = vmatprep.subr.mxu0 0.0
        %930 = vmatpush2.msra.mxu0 0.0
        %931 = vmatprep.subr.mxu0 0.0
        %932 = vmatpush2.msra.mxu0 0.0
        %933 = vmatprep.subr.mxu0 0.0
        %934 = vmatpush2.msra.mxu0 0.0
        %935 = vmatprep.subr.mxu0 0.0
        %936 = vmatpush2.msra.mxu0 0.0
        %937 = vmatprep.subr.mxu0 0.0
        %938 = vmatpush2.msra.mxu0 0.0
        %939 = vmatprep.subr.mxu0 0.0
        %940 = vmatpush2.msra.mxu0 0.0
        %941 = vmatprep.subr.mxu0 0.0
        %942 = vmatpush2.msra.mxu0 0.0
        %943 = vmatprep.subr.mxu0 0.0
        %944 = vmatpush2.msra.mxu0 0.0
        %945 = vmatprep.mubr.f32.mxu0 0.0
        %946 = vmatmul.mubr.f32.gmra.mxu0 %v267
        %v947 = vpop.f32.mrf.mxu0
        %v948 = vadd.f32 0.0, %v947
        %v949 = vpop.f32.mrf.mxu0
        %950 = vmatprep.mubr.f32.mxu0 0.0
        %951 = vmatmul.mubr.f32.gmra.mxu0 %v268
        %v952 = vpop.f32.mrf.mxu0
        %v953 = vadd.f32 0.0, %v952
        %v954 = vpop.f32.mrf.mxu0
        %955 = vmatprep.mubr.f32.mxu0 0.0
        %956 = vmatmul.mubr.f32.gmra.mxu0 %v269
        %v957 = vpop.f32.mrf.mxu0
        %v958 = vadd.f32 0.0, %v957
        %v959 = vpop.f32.mrf.mxu0
        %960 = vmatprep.mubr.f32.mxu0 0.0
        %961 = vmatmul.mubr.f32.gmra.mxu0 %v270
        %v962 = vpop.f32.mrf.mxu0
        %v963 = vadd.f32 0.0, %v962
        %v964 = vpop.f32.mrf.mxu0
        %965 = vmatprep.mubr.f32.mxu0 0.0
        %966 = vmatmul.mubr.f32.gmra.mxu0 %v271
        %v967 = vpop.f32.mrf.mxu0
        %v968 = vadd.f32 0.0, %v967
        %v969 = vpop.f32.mrf.mxu0
        %970 = vmatprep.mubr.f32.mxu0 0.0
        %971 = vmatmul.mubr.f32.gmra.mxu0 %v272
        %v972 = vpop.f32.mrf.mxu0
        %v973 = vadd.f32 0.0, %v972
        %v974 = vpop.f32.mrf.mxu0
        %975 = vmatprep.mubr.f32.mxu0 0.0
        %976 = vmatmul.mubr.f32.gmra.mxu0 %v273
        %v977 = vpop.f32.mrf.mxu0
        %v978 = vadd.f32 0.0, %v977
        %v979 = vpop.f32.mrf.mxu0
        %980 = vmatprep.mubr.f32.mxu0 0.0
        %981 = vmatmul.mubr.f32.gmra.mxu0 %v274
        %v982 = vpop.f32.mrf.mxu0
        %v983 = vadd.f32 0.0, %v982
        %v984 = vpop.f32.mrf.mxu0
        %985 = vdwg.mxu0
        %v986 = vsel %vm307, %v948, -inf
        %v987 = vsel %vm307, %v953, -inf
        %v988 = vsel %vm307, %v958, -inf
        %v989 = vsel %vm307, %v963, -inf
        %v990 = vsel %vm307, %v968, -inf
        %v991 = vmax.f32 %v986, %v990
        %v992 = vsel %vm307, %v973, -inf
        %v993 = vmax.f32 %v987, %v992
        %v994 = vsel %vm307, %v978, -inf
        %v995 = vmax.f32 %v988, %v994
        %v996 = vsel %vm307, %v983, -inf
        %v997 = vmax.f32 %v989, %v996
        %v998 = vmax.f32 %v991, %v993
        %v999 = vmax.f32 %v995, %v997
        %v1000 = vmax.f32 %v998, %v999
        %v1001 = vrot.slane %v1000, 4
        %v1002 = vmax.f32 %v1000, %v1001
        %v1003 = vrot.slane %v1002, 2
        %v1004 = vmax.f32 %v1002, %v1003
        %v1005 = vrot.slane %v1004, 1
        %v1006 = vmax.f32 %v1004, %v1005
        %v1007 = vsub.f32 %v948, %v1006
        %v1008 = vsub.f32 %v953, %v1006
        %v1009 = vsub.f32 %v958, %v1006
        %v1010 = vsub.f32 %v963, %v1006
        %v1011 = vsub.f32 %v968, %v1006
        %v1012 = vsub.f32 %v973, %v1006
        %v1013 = vsub.f32 %v978, %v1006
        %v1014 = vsub.f32 %v983, %v1006
        %v1015 = vmul.f32 %v1007, 1.442695
        %v1016 = vpow.pop %v1015
        %v1017 = vmul.f32 %v1008, 1.442695
        %v1018 = vpow.pop %v1017
        %v1019 = vmul.f32 %v1009, 1.442695
        %v1020 = vpow.pop %v1019
        %v1021 = vmul.f32 %v1010, 1.442695
        %v1022 = vpow.pop %v1021
        %v1023 = vmul.f32 %v1011, 1.442695
        %v1024 = vpow.pop %v1023
        %v1025 = vmul.f32 %v1012, 1.442695
        %v1026 = vpow.pop %v1025
        %v1027 = vmul.f32 %v1013, 1.442695
        %v1028 = vpow.pop %v1027
        %v1029 = vmul.f32 %v1014, 1.442695
        %v1030 = vpow.pop %v1029
        %v1031 = vsel %vm307, %v1016, 0.0
        %v1032 = vsel %vm307, %v1018, 0.0
        %v1033 = vadd.f32 %v1031, %v1032
        %v1034 = vsel %vm307, %v1020, 0.0
        %v1035 = vadd.f32 %v1033, %v1034
        %v1036 = vsel %vm307, %v1022, 0.0
        %v1037 = vadd.f32 %v1035, %v1036
        %v1038 = vsel %vm307, %v1024, 0.0
        %v1039 = vadd.f32 %v1037, %v1038
        %v1040 = vsel %vm307, %v1026, 0.0
        %v1041 = vadd.f32 %v1039, %v1040
        %v1042 = vsel %vm307, %v1028, 0.0
        %v1043 = vadd.f32 %v1041, %v1042
        %v1044 = vsel %vm307, %v1030, 0.0
        %v1045 = vadd.f32 %v1043, %v1044
        %v1046 = vrot.slane %v1045, 4
        %v1047 = vadd.f32 %v1045, %v1046
        %v1048 = vrot.slane %v1047, 2
        %v1049 = vadd.f32 %v1047, %v1048
        %v1050 = vrot.slane %v1049, 1
        %v1051 = vadd.f32 %v1049, %v1050
        %v1052 = vrcp.pop %v1051
        %v1053 = vmul.f32 %v1016, %v1052
        %v1054 = vmul.f32 %v1018, %v1052
        %v1055 = vmul.f32 %v1020, %v1052
        %v1056 = vmul.f32 %v1022, %v1052
        %v1057 = vmul.f32 %v1024, %v1052
        %v1058 = vmul.f32 %v1026, %v1052
        %v1059 = vmul.f32 %v1028, %v1052
        %v1060 = vmul.f32 %v1030, %v1052
        %v1062 = vsel %vm307, %v1053, 0
        %v1065 = vsel %vm307, %v1054, 0
        %v1068 = vsel %vm307, %v1055, 0
        %v1071 = vsel %vm307, %v1056, 0
        %v1074 = vsel %vm307, %v1057, 0
        %v1077 = vsel %vm307, %v1058, 0
        %v1080 = vsel %vm307, %v1059, 0
        %v1083 = vsel %vm307, %v1060, 0
        %v1086 = vsel %vm307, %v865, 0
        %v1089 = vsel %vm307, %v866, 0
        %v1092 = vsel %vm307, %v867, 0
        %v1095 = vsel %vm307, %v868, 0
        %v1098 = vsel %vm307, %v869, 0
        %v1101 = vsel %vm307, %v870, 0
        %v1104 = vsel %vm307, %v871, 0
        %v1107 = vsel %vm307, %v872, 0
        %v1110 = vsel %vm307, %v873, 0
        %v1113 = vsel %vm307, %v874, 0
        %v1116 = vsel %vm307, %v875, 0
        %v1119 = vsel %vm307, %v876, 0
        %v1122 = vsel %vm307, %v877, 0
        %v1125 = vsel %vm307, %v878, 0
        %v1128 = vsel %vm307, %v879, 0
        %v1131 = vsel %vm307, %v880, 0
        %1133 = vmatprep.subr.mxu0 0.0
        %1134 = vmatpush1.xpose.msra.mxu0 %v1131
        %1135 = vmatprep.subr.mxu0 0.0
        %1136 = vmatpush1.xpose.msra.mxu0 %v1128
        %1137 = vmatprep.subr.mxu0 0.0
        %1138 = vmatpush1.xpose.msra.mxu0 %v1125
        %1139 = vmatprep.subr.mxu0 0.0
        %1140 = vmatpush1.xpose.msra.mxu0 %v1122
        %1141 = vmatprep.subr.mxu0 0.0
        %1142 = vmatpush1.xpose.msra.mxu0 %v1119
        %1143 = vmatprep.subr.mxu0 0.0
        %1144 = vmatpush1.xpose.msra.mxu0 %v1116
        %1145 = vmatprep.subr.mxu0 0.0
        %1146 = vmatpush1.xpose.msra.mxu0 %v1113
        %1147 = vmatprep.subr.mxu0 0.0
        %1148 = vmatpush1.xpose.msra.mxu0 %v1110
        %1149 = vmatprep.subr.mxu0 0.0
        %1150 = vmatpush1.xpose.msra.mxu0 %v1107
        %1151 = vmatprep.subr.mxu0 0.0
        %1152 = vmatpush1.xpose.msra.mxu0 %v1104
        %1153 = vmatprep.subr.mxu0 0.0
        %1154 = vmatpush1.xpose.msra.mxu0 %v1101
        %1155 = vmatprep.subr.mxu0 0.0
        %1156 = vmatpush1.xpose.msra.mxu0 %v1098
        %1157 = vmatprep.subr.mxu0 0.0
        %1158 = vmatpush1.xpose.msra.mxu0 %v1095
        %1159 = vmatprep.subr.mxu0 0.0
        %1160 = vmatpush1.xpose.msra.mxu0 %v1092
        %1161 = vmatprep.subr.mxu0 0.0
        %1162 = vmatpush1.xpose.msra.mxu0 %v1089
        %1163 = vmatprep.subr.mxu0 0.0
        %1164 = vmatpush1.xpose.msra.mxu0 %v1086
        %1165 = vmatprep.subr.mxu0 0.0
        %1166 = vmatpush2.xpose.msra.mxu0 0.0
        %1167 = vmatprep.subr.mxu0 0.0
        %1168 = vmatpush2.xpose.msra.mxu0 0.0
        %1169 = vmatprep.subr.mxu0 0.0
        %1170 = vmatpush2.xpose.msra.mxu0 0.0
        %1171 = vmatprep.subr.mxu0 0.0
        %1172 = vmatpush2.xpose.msra.mxu0 0.0
        %1173 = vmatprep.subr.mxu0 0.0
        %1174 = vmatpush2.xpose.msra.mxu0 0.0
        %1175 = vmatprep.subr.mxu0 0.0
        %1176 = vmatpush2.xpose.msra.mxu0 0.0
        %1177 = vmatprep.subr.mxu0 0.0
        %1178 = vmatpush2.xpose.msra.mxu0 0.0
        %1179 = vmatprep.subr.mxu0 0.0
        %1180 = vmatpush2.xpose.msra.mxu0 0.0
        %1181 = vmatprep.subr.mxu0 0.0
        %1182 = vmatpush2.xpose.msra.mxu0 0.0
        %1183 = vmatprep.subr.mxu0 0.0
        %1184 = vmatpush2.xpose.msra.mxu0 0.0
        %1185 = vmatprep.subr.mxu0 0.0
        %1186 = vmatpush2.xpose.msra.mxu0 0.0
        %1187 = vmatprep.subr.mxu0 0.0
        %1188 = vmatpush2.xpose.msra.mxu0 0.0
        %1189 = vmatprep.subr.mxu0 0.0
        %1190 = vmatpush2.xpose.msra.mxu0 0.0
        %1191 = vmatprep.subr.mxu0 0.0
        %1192 = vmatpush2.xpose.msra.mxu0 0.0
        %1193 = vmatprep.subr.mxu0 0.0
        %1194 = vmatpush2.xpose.msra.mxu0 0.0
        %1195 = vmatprep.subr.mxu0 0.0
        %1196 = vmatpush2.xpose.msra.mxu0 0.0
        %1197 = vmatprep.mubr.f32.mxu0 0.0
        %1198 = vmatmul.mubr.f32.gmra.mxu0 %v1062
        %v1199 = vpop.f32.mrf.mxu0
        %v1200 = vadd.f32 0.0, %v1199
        %v1201 = vpop.f32.mrf.mxu0
        %1202 = vmatprep.mubr.f32.mxu0 0.0
        %1203 = vmatmul.mubr.f32.gmra.mxu0 %v1065
        %v1204 = vpop.f32.mrf.mxu0
        %v1205 = vadd.f32 0.0, %v1204
        %v1206 = vpop.f32.mrf.mxu0
        %1207 = vmatprep.mubr.f32.mxu0 0.0
        %1208 = vmatmul.mubr.f32.gmra.mxu0 %v1068
        %v1209 = vpop.f32.mrf.mxu0
        %v1210 = vadd.f32 0.0, %v1209
        %v1211 = vpop.f32.mrf.mxu0
        %1212 = vmatprep.mubr.f32.mxu0 0.0
        %1213 = vmatmul.mubr.f32.gmra.mxu0 %v1071
        %v1214 = vpop.f32.mrf.mxu0
        %v1215 = vadd.f32 0.0, %v1214
        %v1216 = vpop.f32.mrf.mxu0
        %1217 = vmatprep.mubr.f32.mxu0 0.0
        %1218 = vmatmul.mubr.f32.gmra.mxu0 %v1074
        %v1219 = vpop.f32.mrf.mxu0
        %v1220 = vadd.f32 0.0, %v1219
        %v1221 = vpop.f32.mrf.mxu0
        %1222 = vmatprep.mubr.f32.mxu0 0.0
        %1223 = vmatmul.mubr.f32.gmra.mxu0 %v1077
        %v1224 = vpop.f32.mrf.mxu0
        %v1225 = vadd.f32 0.0, %v1224
        %v1226 = vpop.f32.mrf.mxu0
        %1227 = vmatprep.mubr.f32.mxu0 0.0
        %1228 = vmatmul.mubr.f32.gmra.mxu0 %v1080
        %v1229 = vpop.f32.mrf.mxu0
        %v1230 = vadd.f32 0.0, %v1229
        %v1231 = vpop.f32.mrf.mxu0
        %1232 = vmatprep.mubr.f32.mxu0 0.0
        %1233 = vmatmul.mubr.f32.gmra.mxu0 %v1083
        %v1234 = vpop.f32.mrf.mxu0
        %v1235 = vadd.f32 0.0, %v1234
        %v1236 = vpop.f32.mrf.mxu0
        %1237 = vdwg.mxu0
        %s1238 = scalar_lea.vmem [#allocation2], 64
        %v1239 = vld [vmem:[%s1238] sm:$0xff]
        %v1240 = vld [vmem:[%s1238 + $0x8] sm:$0xff]
        %v1241 = vld [vmem:[%s1238 + $0x10] sm:$0xff]
        %v1242 = vld [vmem:[%s1238 + $0x18] sm:$0xff]
        %v1243 = vld [vmem:[%s1238 + $0x20] sm:$0xff]
        %v1244 = vld [vmem:[%s1238 + $0x28] sm:$0xff]
        %v1245 = vld [vmem:[%s1238 + $0x30] sm:$0xff]
        %v1246 = vld [vmem:[%s1238 + $0x38] sm:$0xff]
        %v1247 = vadd.f32 %v1239, %v1200
        %v1248 = vadd.f32 %v1240, %v1205
        %v1249 = vadd.f32 %v1241, %v1210
        %v1250 = vadd.f32 %v1242, %v1215
        %v1251 = vadd.f32 %v1243, %v1220
        %v1252 = vadd.f32 %v1244, %v1225
        %v1253 = vadd.f32 %v1245, %v1230
        %v1254 = vadd.f32 %v1246, %v1235
        %1255 = vst [vmem:[%s1238] sm:$0xff] %v1247
        %1256 = vst [vmem:[%s1238 + $0x8] sm:$0xff] %v1248
        %1257 = vst [vmem:[%s1238 + $0x10] sm:$0xff] %v1249
        %1258 = vst [vmem:[%s1238 + $0x18] sm:$0xff] %v1250
        %1259 = vst [vmem:[%s1238 + $0x20] sm:$0xff] %v1251
        %1260 = vst [vmem:[%s1238 + $0x28] sm:$0xff] %v1252
        %1261 = vst [vmem:[%s1238 + $0x30] sm:$0xff] %v1253
        %1262 = vst [vmem:[%s1238 + $0x38] sm:$0xff] %v1254
        %s1263 = scalar_lea.vmem [#allocation3], 64
        %v1264 = vld [vmem:[%s1263] sm:$0xff]
        %v1265 = vld [vmem:[%s1263 + $0x8] sm:$0xff]
        %v1266 = vld [vmem:[%s1263 + $0x10] sm:$0xff]
        %v1267 = vld [vmem:[%s1263 + $0x18] sm:$0xff]
        %v1268 = vld [vmem:[%s1263 + $0x20] sm:$0xff]
        %v1269 = vld [vmem:[%s1263 + $0x28] sm:$0xff]
        %v1270 = vld [vmem:[%s1263 + $0x30] sm:$0xff]
        %v1271 = vld [vmem:[%s1263 + $0x38] sm:$0xff]
        %v1272 = vsel %vm307, %v1053, 0.0
        %1273 = vadd.xlane.f32.xlu0 %v1272
        %v1274 = vpop.xlane.xlu0 %1273
        %v1275 = vsel %vm307, %v1054, 0.0
        %1276 = vadd.xlane.f32.xlu0 %v1275
        %v1277 = vpop.xlane.xlu0 %1276
        %v1278 = vsel %vm307, %v1055, 0.0
        %1279 = vadd.xlane.f32.xlu0 %v1278
        %v1280 = vpop.xlane.xlu0 %1279
        %v1281 = vsel %vm307, %v1056, 0.0
        %1282 = vadd.xlane.f32.xlu0 %v1281
        %v1283 = vpop.xlane.xlu0 %1282
        %v1284 = vsel %vm307, %v1057, 0.0
        %1285 = vadd.xlane.f32.xlu0 %v1284
        %v1286 = vpop.xlane.xlu0 %1285
        %v1287 = vsel %vm307, %v1058, 0.0
        %1288 = vadd.xlane.f32.xlu0 %v1287
        %v1289 = vpop.xlane.xlu0 %1288
        %v1290 = vsel %vm307, %v1059, 0.0
        %1291 = vadd.xlane.f32.xlu0 %v1290
        %v1292 = vpop.xlane.xlu0 %1291
        %v1293 = vsel %vm307, %v1060, 0.0
        %1294 = vadd.xlane.f32.xlu0 %v1293
        %v1295 = vpop.xlane.xlu0 %1294
        %v1296 = vadd.f32 %v1264, %v1274
        %v1297 = vadd.f32 %v1265, %v1277
        %v1298 = vadd.f32 %v1266, %v1280
        %v1299 = vadd.f32 %v1267, %v1283
        %v1300 = vadd.f32 %v1268, %v1286
        %v1301 = vadd.f32 %v1269, %v1289
        %v1302 = vadd.f32 %v1270, %v1292
        %v1303 = vadd.f32 %v1271, %v1295
        %1304 = vst.msk [vmem:[%s1263] sm:$0xff] %vm784, %v1296
        %1305 = vst.msk [vmem:[%s1263 + $0x8] sm:$0xff] %vm784, %v1297
        %1306 = vst.msk [vmem:[%s1263 + $0x10] sm:$0xff] %vm784, %v1298
        %1307 = vst.msk [vmem:[%s1263 + $0x18] sm:$0xff] %vm784, %v1299
        %1308 = vst.msk [vmem:[%s1263 + $0x20] sm:$0xff] %vm784, %v1300
        %1309 = vst.msk [vmem:[%s1263 + $0x28] sm:$0xff] %vm784, %v1301
        %1310 = vst.msk [vmem:[%s1263 + $0x30] sm:$0xff] %vm784, %v1302
        %1311 = vst.msk [vmem:[%s1263 + $0x38] sm:$0xff] %vm784, %v1303
        %s1312 = scalar_lea.vmem %s195, 256
        %v1313 = vld [vmem:[%s1312] sm:$0xff]
        %v1314 = vld [vmem:[%s1312 + $0x8] sm:$0xff]
        %v1315 = vld [vmem:[%s1312 + $0x10] sm:$0xff]
        %v1316 = vld [vmem:[%s1312 + $0x18] sm:$0xff]
        %v1317 = vld [vmem:[%s1312 + $0x20] sm:$0xff]
        %v1318 = vld [vmem:[%s1312 + $0x28] sm:$0xff]
        %v1319 = vld [vmem:[%s1312 + $0x30] sm:$0xff]
        %v1320 = vld [vmem:[%s1312 + $0x38] sm:$0xff]
        %v1321 = vld [vmem:[%s1312 + $0x40] sm:$0xff]
        %v1322 = vld [vmem:[%s1312 + $0x48] sm:$0xff]
        %v1323 = vld [vmem:[%s1312 + $0x50] sm:$0xff]
        %v1324 = vld [vmem:[%s1312 + $0x58] sm:$0xff]
        %v1325 = vld [vmem:[%s1312 + $0x60] sm:$0xff]
        %v1326 = vld [vmem:[%s1312 + $0x68] sm:$0xff]
        %v1327 = vld [vmem:[%s1312 + $0x70] sm:$0xff]
        %v1328 = vld [vmem:[%s1312 + $0x78] sm:$0xff]
        %v1329 = vmul.f32 %v1313, %v1313
        %v1330 = vmul.f32 %v1314, %v1314
        %v1331 = vmul.f32 %v1315, %v1315
        %v1332 = vmul.f32 %v1316, %v1316
        %v1333 = vmul.f32 %v1317, %v1317
        %v1334 = vmul.f32 %v1318, %v1318
        %v1335 = vmul.f32 %v1319, %v1319
        %v1336 = vmul.f32 %v1320, %v1320
        %v1337 = vmul.f32 %v1321, %v1321
        %v1338 = vmul.f32 %v1322, %v1322
        %v1339 = vmul.f32 %v1323, %v1323
        %v1340 = vmul.f32 %v1324, %v1324
        %v1341 = vmul.f32 %v1325, %v1325
        %v1342 = vmul.f32 %v1326, %v1326
        %v1343 = vmul.f32 %v1327, %v1327
        %v1344 = vmul.f32 %v1328, %v1328
        %v1345 = vsel %vm307, %v1329, 0.0
        %v1346 = vsel %vm307, %v1330, 0.0
        %v1347 = vadd.f32 %v1345, %v1346
        %v1348 = vsel %vm307, %v1331, 0.0
        %v1349 = vadd.f32 %v1347, %v1348
        %v1350 = vsel %vm307, %v1332, 0.0
        %v1351 = vadd.f32 %v1349, %v1350
        %v1352 = vsel %vm307, %v1333, 0.0
        %v1353 = vadd.f32 %v1351, %v1352
        %v1354 = vsel %vm307, %v1334, 0.0
        %v1355 = vadd.f32 %v1353, %v1354
        %v1356 = vsel %vm307, %v1335, 0.0
        %v1357 = vadd.f32 %v1355, %v1356
        %v1358 = vsel %vm307, %v1336, 0.0
        %v1359 = vadd.f32 %v1357, %v1358
        %v1360 = vsel %vm307, %v1337, 0.0
        %v1361 = vadd.f32 %v1359, %v1360
        %v1362 = vsel %vm307, %v1338, 0.0
        %v1363 = vadd.f32 %v1361, %v1362
        %v1364 = vsel %vm307, %v1339, 0.0
        %v1365 = vadd.f32 %v1363, %v1364
        %v1366 = vsel %vm307, %v1340, 0.0
        %v1367 = vadd.f32 %v1365, %v1366
        %v1368 = vsel %vm307, %v1341, 0.0
        %v1369 = vadd.f32 %v1367, %v1368
        %v1370 = vsel %vm307, %v1342, 0.0
        %v1371 = vadd.f32 %v1369, %v1370
        %v1372 = vsel %vm307, %v1343, 0.0
        %v1373 = vadd.f32 %v1371, %v1372
        %v1374 = vsel %vm307, %v1344, 0.0
        %v1375 = vadd.f32 %v1373, %v1374
        %v1376 = vrot.slane %v1375, 4
        %v1377 = vadd.f32 %v1375, %v1376
        %v1378 = vrot.slane %v1377, 2
        %v1379 = vadd.f32 %v1377, %v1378
        %v1380 = vrot.slane %v1379, 1
        %v1381 = vadd.f32 %v1379, %v1380
        %v1382 = vmax.f32 %v1381, 1e-24
        %v1383 = vrsqrt.pop %v1382
        %v1384 = vmul.f32 %v1313, %v1383
        %v1385 = vmul.f32 %v1314, %v1383
        %v1386 = vmul.f32 %v1315, %v1383
        %v1387 = vmul.f32 %v1316, %v1383
        %v1388 = vmul.f32 %v1317, %v1383
        %v1389 = vmul.f32 %v1318, %v1383
        %v1390 = vmul.f32 %v1319, %v1383
        %v1391 = vmul.f32 %v1320, %v1383
        %v1392 = vmul.f32 %v1321, %v1383
        %v1393 = vmul.f32 %v1322, %v1383
        %v1394 = vmul.f32 %v1323, %v1383
        %v1395 = vmul.f32 %v1324, %v1383
        %v1396 = vmul.f32 %v1325, %v1383
        %v1397 = vmul.f32 %v1326, %v1383
        %v1398 = vmul.f32 %v1327, %v1383
        %v1399 = vmul.f32 %v1328, %v1383
        %1400 = vmatprep.subr.mxu0 0.0
        %1401 = vmatpush1.msra.mxu0 %v1399
        %1402 = vmatprep.subr.mxu0 0.0
        %1403 = vmatpush1.msra.mxu0 %v1398
        %1404 = vmatprep.subr.mxu0 0.0
        %1405 = vmatpush1.msra.mxu0 %v1397
        %1406 = vmatprep.subr.mxu0 0.0
        %1407 = vmatpush1.msra.mxu0 %v1396
        %1408 = vmatprep.subr.mxu0 0.0
        %1409 = vmatpush1.msra.mxu0 %v1395
        %1410 = vmatprep.subr.mxu0 0.0
        %1411 = vmatpush1.msra.mxu0 %v1394
        %1412 = vmatprep.subr.mxu0 0.0
        %1413 = vmatpush1.msra.mxu0 %v1393
        %1414 = vmatprep.subr.mxu0 0.0
        %1415 = vmatpush1.msra.mxu0 %v1392
        %1416 = vmatprep.subr.mxu0 0.0
        %1417 = vmatpush1.msra.mxu0 %v1391
        %1418 = vmatprep.subr.mxu0 0.0
        %1419 = vmatpush1.msra.mxu0 %v1390
        %1420 = vmatprep.subr.mxu0 0.0
        %1421 = vmatpush1.msra.mxu0 %v1389
        %1422 = vmatprep.subr.mxu0 0.0
        %1423 = vmatpush1.msra.mxu0 %v1388
        %1424 = vmatprep.subr.mxu0 0.0
        %1425 = vmatpush1.msra.mxu0 %v1387
        %1426 = vmatprep.subr.mxu0 0.0
        %1427 = vmatpush1.msra.mxu0 %v1386
        %1428 = vmatprep.subr.mxu0 0.0
        %1429 = vmatpush1.msra.mxu0 %v1385
        %1430 = vmatprep.subr.mxu0 0.0
        %1431 = vmatpush1.msra.mxu0 %v1384
        %1432 = vmatprep.subr.mxu0 0.0
        %1433 = vmatpush2.msra.mxu0 0.0
        %1434 = vmatprep.subr.mxu0 0.0
        %1435 = vmatpush2.msra.mxu0 0.0
        %1436 = vmatprep.subr.mxu0 0.0
        %1437 = vmatpush2.msra.mxu0 0.0
        %1438 = vmatprep.subr.mxu0 0.0
        %1439 = vmatpush2.msra.mxu0 0.0
        %1440 = vmatprep.subr.mxu0 0.0
        %1441 = vmatpush2.msra.mxu0 0.0
        %1442 = vmatprep.subr.mxu0 0.0
        %1443 = vmatpush2.msra.mxu0 0.0
        %1444 = vmatprep.subr.mxu0 0.0
        %1445 = vmatpush2.msra.mxu0 0.0
        %1446 = vmatprep.subr.mxu0 0.0
        %1447 = vmatpush2.msra.mxu0 0.0
        %1448 = vmatprep.subr.mxu0 0.0
        %1449 = vmatpush2.msra.mxu0 0.0
        %1450 = vmatprep.subr.mxu0 0.0
        %1451 = vmatpush2.msra.mxu0 0.0
        %1452 = vmatprep.subr.mxu0 0.0
        %1453 = vmatpush2.msra.mxu0 0.0
        %1454 = vmatprep.subr.mxu0 0.0
        %1455 = vmatpush2.msra.mxu0 0.0
        %1456 = vmatprep.subr.mxu0 0.0
        %1457 = vmatpush2.msra.mxu0 0.0
        %1458 = vmatprep.subr.mxu0 0.0
        %1459 = vmatpush2.msra.mxu0 0.0
        %1460 = vmatprep.subr.mxu0 0.0
        %1461 = vmatpush2.msra.mxu0 0.0
        %1462 = vmatprep.subr.mxu0 0.0
        %1463 = vmatpush2.msra.mxu0 0.0
        %1464 = vmatprep.mubr.f32.mxu0 0.0
        %1465 = vmatmul.mubr.f32.gmra.mxu0 %v267
        %v1466 = vpop.f32.mrf.mxu0
        %v1467 = vadd.f32 0.0, %v1466
        %v1468 = vpop.f32.mrf.mxu0
        %1469 = vmatprep.mubr.f32.mxu0 0.0
        %1470 = vmatmul.mubr.f32.gmra.mxu0 %v268
        %v1471 = vpop.f32.mrf.mxu0
        %v1472 = vadd.f32 0.0, %v1471
        %v1473 = vpop.f32.mrf.mxu0
        %1474 = vmatprep.mubr.f32.mxu0 0.0
        %1475 = vmatmul.mubr.f32.gmra.mxu0 %v269
        %v1476 = vpop.f32.mrf.mxu0
        %v1477 = vadd.f32 0.0, %v1476
        %v1478 = vpop.f32.mrf.mxu0
        %1479 = vmatprep.mubr.f32.mxu0 0.0
        %1480 = vmatmul.mubr.f32.gmra.mxu0 %v270
        %v1481 = vpop.f32.mrf.mxu0
        %v1482 = vadd.f32 0.0, %v1481
        %v1483 = vpop.f32.mrf.mxu0
        %1484 = vmatprep.mubr.f32.mxu0 0.0
        %1485 = vmatmul.mubr.f32.gmra.mxu0 %v271
        %v1486 = vpop.f32.mrf.mxu0
        %v1487 = vadd.f32 0.0, %v1486
        %v1488 = vpop.f32.mrf.mxu0
        %1489 = vmatprep.mubr.f32.mxu0 0.0
        %1490 = vmatmul.mubr.f32.gmra.mxu0 %v272
        %v1491 = vpop.f32.mrf.mxu0
        %v1492 = vadd.f32 0.0, %v1491
        %v1493 = vpop.f32.mrf.mxu0
        %1494 = vmatprep.mubr.f32.mxu0 0.0
        %1495 = vmatmul.mubr.f32.gmra.mxu0 %v273
        %v1496 = vpop.f32.mrf.mxu0
        %v1497 = vadd.f32 0.0, %v1496
        %v1498 = vpop.f32.mrf.mxu0
        %1499 = vmatprep.mubr.f32.mxu0 0.0
        %1500 = vmatmul.mubr.f32.gmra.mxu0 %v274
        %v1501 = vpop.f32.mrf.mxu0
        %v1502 = vadd.f32 0.0, %v1501
        %v1503 = vpop.f32.mrf.mxu0
        %1504 = vdwg.mxu0
        %v1505 = vsel %vm307, %v1467, -inf
        %v1506 = vsel %vm307, %v1472, -inf
        %v1507 = vsel %vm307, %v1477, -inf
        %v1508 = vsel %vm307, %v1482, -inf
        %v1509 = vsel %vm307, %v1487, -inf
        %v1510 = vmax.f32 %v1505, %v1509
        %v1511 = vsel %vm307, %v1492, -inf
        %v1512 = vmax.f32 %v1506, %v1511
        %v1513 = vsel %vm307, %v1497, -inf
        %v1514 = vmax.f32 %v1507, %v1513
        %v1515 = vsel %vm307, %v1502, -inf
        %v1516 = vmax.f32 %v1508, %v1515
        %v1517 = vmax.f32 %v1510, %v1512
        %v1518 = vmax.f32 %v1514, %v1516
        %v1519 = vmax.f32 %v1517, %v1518
        %v1520 = vrot.slane %v1519, 4
        %v1521 = vmax.f32 %v1519, %v1520
        %v1522 = vrot.slane %v1521, 2
        %v1523 = vmax.f32 %v1521, %v1522
        %v1524 = vrot.slane %v1523, 1
        %v1525 = vmax.f32 %v1523, %v1524
        %v1526 = vsub.f32 %v1467, %v1525
        %v1527 = vsub.f32 %v1472, %v1525
        %v1528 = vsub.f32 %v1477, %v1525
        %v1529 = vsub.f32 %v1482, %v1525
        %v1530 = vsub.f32 %v1487, %v1525
        %v1531 = vsub.f32 %v1492, %v1525
        %v1532 = vsub.f32 %v1497, %v1525
        %v1533 = vsub.f32 %v1502, %v1525
        %v1534 = vmul.f32 %v1526, 1.442695
        %v1535 = vpow.pop %v1534
        %v1536 = vmul.f32 %v1527, 1.442695
        %v1537 = vpow.pop %v1536
        %v1538 = vmul.f32 %v1528, 1.442695
        %v1539 = vpow.pop %v1538
        %v1540 = vmul.f32 %v1529, 1.442695
        %v1541 = vpow.pop %v1540
        %v1542 = vmul.f32 %v1530, 1.442695
        %v1543 = vpow.pop %v1542
        %v1544 = vmul.f32 %v1531, 1.442695
        %v1545 = vpow.pop %v1544
        %v1546 = vmul.f32 %v1532, 1.442695
        %v1547 = vpow.pop %v1546
        %v1548 = vmul.f32 %v1533, 1.442695
        %v1549 = vpow.pop %v1548
        %v1550 = vsel %vm307, %v1535, 0.0
        %v1551 = vsel %vm307, %v1537, 0.0
        %v1552 = vadd.f32 %v1550, %v1551
        %v1553 = vsel %vm307, %v1539, 0.0
        %v1554 = vadd.f32 %v1552, %v1553
        %v1555 = vsel %vm307, %v1541, 0.0
        %v1556 = vadd.f32 %v1554, %v1555
        %v1557 = vsel %vm307, %v1543, 0.0
        %v1558 = vadd.f32 %v1556, %v1557
        %v1559 = vsel %vm307, %v1545, 0.0
        %v1560 = vadd.f32 %v1558, %v1559
        %v1561 = vsel %vm307, %v1547, 0.0
        %v1562 = vadd.f32 %v1560, %v1561
        %v1563 = vsel %vm307, %v1549, 0.0
        %v1564 = vadd.f32 %v1562, %v1563
        %v1565 = vrot.slane %v1564, 4
        %v1566 = vadd.f32 %v1564, %v1565
        %v1567 = vrot.slane %v1566, 2
        %v1568 = vadd.f32 %v1566, %v1567
        %v1569 = vrot.slane %v1568, 1
        %v1570 = vadd.f32 %v1568, %v1569
        %v1571 = vrcp.pop %v1570
        %v1572 = vmul.f32 %v1535, %v1571
        %v1573 = vmul.f32 %v1537, %v1571
        %v1574 = vmul.f32 %v1539, %v1571
        %v1575 = vmul.f32 %v1541, %v1571
        %v1576 = vmul.f32 %v1543, %v1571
        %v1577 = vmul.f32 %v1545, %v1571
        %v1578 = vmul.f32 %v1547, %v1571
        %v1579 = vmul.f32 %v1549, %v1571
        %v1581 = vsel %vm307, %v1572, 0
        %v1584 = vsel %vm307, %v1573, 0
        %v1587 = vsel %vm307, %v1574, 0
        %v1590 = vsel %vm307, %v1575, 0
        %v1593 = vsel %vm307, %v1576, 0
        %v1596 = vsel %vm307, %v1577, 0
        %v1599 = vsel %vm307, %v1578, 0
        %v1602 = vsel %vm307, %v1579, 0
        %v1605 = vsel %vm307, %v1384, 0
        %v1608 = vsel %vm307, %v1385, 0
        %v1611 = vsel %vm307, %v1386, 0
        %v1614 = vsel %vm307, %v1387, 0
        %v1617 = vsel %vm307, %v1388, 0
        %v1620 = vsel %vm307, %v1389, 0
        %v1623 = vsel %vm307, %v1390, 0
        %v1626 = vsel %vm307, %v1391, 0
        %v1629 = vsel %vm307, %v1392, 0
        %v1632 = vsel %vm307, %v1393, 0
        %v1635 = vsel %vm307, %v1394, 0
        %v1638 = vsel %vm307, %v1395, 0
        %v1641 = vsel %vm307, %v1396, 0
        %v1644 = vsel %vm307, %v1397, 0
        %v1647 = vsel %vm307, %v1398, 0
        %v1650 = vsel %vm307, %v1399, 0
        %1652 = vmatprep.subr.mxu0 0.0
        %1653 = vmatpush1.xpose.msra.mxu0 %v1650
        %1654 = vmatprep.subr.mxu0 0.0
        %1655 = vmatpush1.xpose.msra.mxu0 %v1647
        %1656 = vmatprep.subr.mxu0 0.0
        %1657 = vmatpush1.xpose.msra.mxu0 %v1644
        %1658 = vmatprep.subr.mxu0 0.0
        %1659 = vmatpush1.xpose.msra.mxu0 %v1641
        %1660 = vmatprep.subr.mxu0 0.0
        %1661 = vmatpush1.xpose.msra.mxu0 %v1638
        %1662 = vmatprep.subr.mxu0 0.0
        %1663 = vmatpush1.xpose.msra.mxu0 %v1635
        %1664 = vmatprep.subr.mxu0 0.0
        %1665 = vmatpush1.xpose.msra.mxu0 %v1632
        %1666 = vmatprep.subr.mxu0 0.0
        %1667 = vmatpush1.xpose.msra.mxu0 %v1629
        %1668 = vmatprep.subr.mxu0 0.0
        %1669 = vmatpush1.xpose.msra.mxu0 %v1626
        %1670 = vmatprep.subr.mxu0 0.0
        %1671 = vmatpush1.xpose.msra.mxu0 %v1623
        %1672 = vmatprep.subr.mxu0 0.0
        %1673 = vmatpush1.xpose.msra.mxu0 %v1620
        %1674 = vmatprep.subr.mxu0 0.0
        %1675 = vmatpush1.xpose.msra.mxu0 %v1617
        %1676 = vmatprep.subr.mxu0 0.0
        %1677 = vmatpush1.xpose.msra.mxu0 %v1614
        %1678 = vmatprep.subr.mxu0 0.0
        %1679 = vmatpush1.xpose.msra.mxu0 %v1611
        %1680 = vmatprep.subr.mxu0 0.0
        %1681 = vmatpush1.xpose.msra.mxu0 %v1608
        %1682 = vmatprep.subr.mxu0 0.0
        %1683 = vmatpush1.xpose.msra.mxu0 %v1605
        %1684 = vmatprep.subr.mxu0 0.0
        %1685 = vmatpush2.xpose.msra.mxu0 0.0
        %1686 = vmatprep.subr.mxu0 0.0
        %1687 = vmatpush2.xpose.msra.mxu0 0.0
        %1688 = vmatprep.subr.mxu0 0.0
        %1689 = vmatpush2.xpose.msra.mxu0 0.0
        %1690 = vmatprep.subr.mxu0 0.0
        %1691 = vmatpush2.xpose.msra.mxu0 0.0
        %1692 = vmatprep.subr.mxu0 0.0
        %1693 = vmatpush2.xpose.msra.mxu0 0.0
        %1694 = vmatprep.subr.mxu0 0.0
        %1695 = vmatpush2.xpose.msra.mxu0 0.0
        %1696 = vmatprep.subr.mxu0 0.0
        %1697 = vmatpush2.xpose.msra.mxu0 0.0
        %1698 = vmatprep.subr.mxu0 0.0
        %1699 = vmatpush2.xpose.msra.mxu0 0.0
        %1700 = vmatprep.subr.mxu0 0.0
        %1701 = vmatpush2.xpose.msra.mxu0 0.0
        %1702 = vmatprep.subr.mxu0 0.0
        %1703 = vmatpush2.xpose.msra.mxu0 0.0
        %1704 = vmatprep.subr.mxu0 0.0
        %1705 = vmatpush2.xpose.msra.mxu0 0.0
        %1706 = vmatprep.subr.mxu0 0.0
        %1707 = vmatpush2.xpose.msra.mxu0 0.0
        %1708 = vmatprep.subr.mxu0 0.0
        %1709 = vmatpush2.xpose.msra.mxu0 0.0
        %1710 = vmatprep.subr.mxu0 0.0
        %1711 = vmatpush2.xpose.msra.mxu0 0.0
        %1712 = vmatprep.subr.mxu0 0.0
        %1713 = vmatpush2.xpose.msra.mxu0 0.0
        %1714 = vmatprep.subr.mxu0 0.0
        %1715 = vmatpush2.xpose.msra.mxu0 0.0
        %1716 = vmatprep.mubr.f32.mxu0 0.0
        %1717 = vmatmul.mubr.f32.gmra.mxu0 %v1581
        %v1718 = vpop.f32.mrf.mxu0
        %v1719 = vadd.f32 0.0, %v1718
        %v1720 = vpop.f32.mrf.mxu0
        %1721 = vmatprep.mubr.f32.mxu0 0.0
        %1722 = vmatmul.mubr.f32.gmra.mxu0 %v1584
        %v1723 = vpop.f32.mrf.mxu0
        %v1724 = vadd.f32 0.0, %v1723
        %v1725 = vpop.f32.mrf.mxu0
        %1726 = vmatprep.mubr.f32.mxu0 0.0
        %1727 = vmatmul.mubr.f32.gmra.mxu0 %v1587
        %v1728 = vpop.f32.mrf.mxu0
        %v1729 = vadd.f32 0.0, %v1728
        %v1730 = vpop.f32.mrf.mxu0
        %1731 = vmatprep.mubr.f32.mxu0 0.0
        %1732 = vmatmul.mubr.f32.gmra.mxu0 %v1590
        %v1733 = vpop.f32.mrf.mxu0
        %v1734 = vadd.f32 0.0, %v1733
        %v1735 = vpop.f32.mrf.mxu0
        %1736 = vmatprep.mubr.f32.mxu0 0.0
        %1737 = vmatmul.mubr.f32.gmra.mxu0 %v1593
        %v1738 = vpop.f32.mrf.mxu0
        %v1739 = vadd.f32 0.0, %v1738
        %v1740 = vpop.f32.mrf.mxu0
        %1741 = vmatprep.mubr.f32.mxu0 0.0
        %1742 = vmatmul.mubr.f32.gmra.mxu0 %v1596
        %v1743 = vpop.f32.mrf.mxu0
        %v1744 = vadd.f32 0.0, %v1743
        %v1745 = vpop.f32.mrf.mxu0
        %1746 = vmatprep.mubr.f32.mxu0 0.0
        %1747 = vmatmul.mubr.f32.gmra.mxu0 %v1599
        %v1748 = vpop.f32.mrf.mxu0
        %v1749 = vadd.f32 0.0, %v1748
        %v1750 = vpop.f32.mrf.mxu0
        %1751 = vmatprep.mubr.f32.mxu0 0.0
        %1752 = vmatmul.mubr.f32.gmra.mxu0 %v1602
        %v1753 = vpop.f32.mrf.mxu0
        %v1754 = vadd.f32 0.0, %v1753
        %v1755 = vpop.f32.mrf.mxu0
        %1756 = vdwg.mxu0
        %s1757 = scalar_lea.vmem [#allocation2], 128
        %v1758 = vld [vmem:[%s1757] sm:$0xff]
        %v1759 = vld [vmem:[%s1757 + $0x8] sm:$0xff]
        %v1760 = vld [vmem:[%s1757 + $0x10] sm:$0xff]
        %v1761 = vld [vmem:[%s1757 + $0x18] sm:$0xff]
        %v1762 = vld [vmem:[%s1757 + $0x20] sm:$0xff]
        %v1763 = vld [vmem:[%s1757 + $0x28] sm:$0xff]
        %v1764 = vld [vmem:[%s1757 + $0x30] sm:$0xff]
        %v1765 = vld [vmem:[%s1757 + $0x38] sm:$0xff]
        %v1766 = vadd.f32 %v1758, %v1719
        %v1767 = vadd.f32 %v1759, %v1724
        %v1768 = vadd.f32 %v1760, %v1729
        %v1769 = vadd.f32 %v1761, %v1734
        %v1770 = vadd.f32 %v1762, %v1739
        %v1771 = vadd.f32 %v1763, %v1744
        %v1772 = vadd.f32 %v1764, %v1749
        %v1773 = vadd.f32 %v1765, %v1754
        %1774 = vst [vmem:[%s1757] sm:$0xff] %v1766
        %1775 = vst [vmem:[%s1757 + $0x8] sm:$0xff] %v1767
        %1776 = vst [vmem:[%s1757 + $0x10] sm:$0xff] %v1768
        %1777 = vst [vmem:[%s1757 + $0x18] sm:$0xff] %v1769
        %1778 = vst [vmem:[%s1757 + $0x20] sm:$0xff] %v1770
        %1779 = vst [vmem:[%s1757 + $0x28] sm:$0xff] %v1771
        %1780 = vst [vmem:[%s1757 + $0x30] sm:$0xff] %v1772
        %1781 = vst [vmem:[%s1757 + $0x38] sm:$0xff] %v1773
        %s1782 = scalar_lea.vmem [#allocation3], 128
        %v1783 = vld [vmem:[%s1782] sm:$0xff]
        %v1784 = vld [vmem:[%s1782 + $0x8] sm:$0xff]
        %v1785 = vld [vmem:[%s1782 + $0x10] sm:$0xff]
        %v1786 = vld [vmem:[%s1782 + $0x18] sm:$0xff]
        %v1787 = vld [vmem:[%s1782 + $0x20] sm:$0xff]
        %v1788 = vld [vmem:[%s1782 + $0x28] sm:$0xff]
        %v1789 = vld [vmem:[%s1782 + $0x30] sm:$0xff]
        %v1790 = vld [vmem:[%s1782 + $0x38] sm:$0xff]
        %v1791 = vsel %vm307, %v1572, 0.0
        %1792 = vadd.xlane.f32.xlu0 %v1791
        %v1793 = vpop.xlane.xlu0 %1792
        %v1794 = vsel %vm307, %v1573, 0.0
        %1795 = vadd.xlane.f32.xlu0 %v1794
        %v1796 = vpop.xlane.xlu0 %1795
        %v1797 = vsel %vm307, %v1574, 0.0
        %1798 = vadd.xlane.f32.xlu0 %v1797
        %v1799 = vpop.xlane.xlu0 %1798
        %v1800 = vsel %vm307, %v1575, 0.0
        %1801 = vadd.xlane.f32.xlu0 %v1800
        %v1802 = vpop.xlane.xlu0 %1801
        %v1803 = vsel %vm307, %v1576, 0.0
        %1804 = vadd.xlane.f32.xlu0 %v1803
        %v1805 = vpop.xlane.xlu0 %1804
        %v1806 = vsel %vm307, %v1577, 0.0
        %1807 = vadd.xlane.f32.xlu0 %v1806
        %v1808 = vpop.xlane.xlu0 %1807
        %v1809 = vsel %vm307, %v1578, 0.0
        %1810 = vadd.xlane.f32.xlu0 %v1809
        %v1811 = vpop.xlane.xlu0 %1810
        %v1812 = vsel %vm307, %v1579, 0.0
        %1813 = vadd.xlane.f32.xlu0 %v1812
        %v1814 = vpop.xlane.xlu0 %1813
        %v1815 = vadd.f32 %v1783, %v1793
        %v1816 = vadd.f32 %v1784, %v1796
        %v1817 = vadd.f32 %v1785, %v1799
        %v1818 = vadd.f32 %v1786, %v1802
        %v1819 = vadd.f32 %v1787, %v1805
        %v1820 = vadd.f32 %v1788, %v1808
        %v1821 = vadd.f32 %v1789, %v1811
        %v1822 = vadd.f32 %v1790, %v1814
        %1823 = vst.msk [vmem:[%s1782] sm:$0xff] %vm784, %v1815
        %1824 = vst.msk [vmem:[%s1782 + $0x8] sm:$0xff] %vm784, %v1816
        %1825 = vst.msk [vmem:[%s1782 + $0x10] sm:$0xff] %vm784, %v1817
        %1826 = vst.msk [vmem:[%s1782 + $0x18] sm:$0xff] %vm784, %v1818
        %1827 = vst.msk [vmem:[%s1782 + $0x20] sm:$0xff] %vm784, %v1819
        %1828 = vst.msk [vmem:[%s1782 + $0x28] sm:$0xff] %vm784, %v1820
        %1829 = vst.msk [vmem:[%s1782 + $0x30] sm:$0xff] %vm784, %v1821
        %1830 = vst.msk [vmem:[%s1782 + $0x38] sm:$0xff] %vm784, %v1822
        %s1831 = scalar_lea.vmem %s195, 384
        %v1832 = vld [vmem:[%s1831] sm:$0xff]
        %v1833 = vld [vmem:[%s1831 + $0x8] sm:$0xff]
        %v1834 = vld [vmem:[%s1831 + $0x10] sm:$0xff]
        %v1835 = vld [vmem:[%s1831 + $0x18] sm:$0xff]
        %v1836 = vld [vmem:[%s1831 + $0x20] sm:$0xff]
        %v1837 = vld [vmem:[%s1831 + $0x28] sm:$0xff]
        %v1838 = vld [vmem:[%s1831 + $0x30] sm:$0xff]
        %v1839 = vld [vmem:[%s1831 + $0x38] sm:$0xff]
        %v1840 = vld [vmem:[%s1831 + $0x40] sm:$0xff]
        %v1841 = vld [vmem:[%s1831 + $0x48] sm:$0xff]
        %v1842 = vld [vmem:[%s1831 + $0x50] sm:$0xff]
        %v1843 = vld [vmem:[%s1831 + $0x58] sm:$0xff]
        %v1844 = vld [vmem:[%s1831 + $0x60] sm:$0xff]
        %v1845 = vld [vmem:[%s1831 + $0x68] sm:$0xff]
        %v1846 = vld [vmem:[%s1831 + $0x70] sm:$0xff]
        %v1847 = vld [vmem:[%s1831 + $0x78] sm:$0xff]
        %v1848 = vmul.f32 %v1832, %v1832
        %v1849 = vmul.f32 %v1833, %v1833
        %v1850 = vmul.f32 %v1834, %v1834
        %v1851 = vmul.f32 %v1835, %v1835
        %v1852 = vmul.f32 %v1836, %v1836
        %v1853 = vmul.f32 %v1837, %v1837
        %v1854 = vmul.f32 %v1838, %v1838
        %v1855 = vmul.f32 %v1839, %v1839
        %v1856 = vmul.f32 %v1840, %v1840
        %v1857 = vmul.f32 %v1841, %v1841
        %v1858 = vmul.f32 %v1842, %v1842
        %v1859 = vmul.f32 %v1843, %v1843
        %v1860 = vmul.f32 %v1844, %v1844
        %v1861 = vmul.f32 %v1845, %v1845
        %v1862 = vmul.f32 %v1846, %v1846
        %v1863 = vmul.f32 %v1847, %v1847
        %v1864 = vsel %vm307, %v1848, 0.0
        %v1865 = vsel %vm307, %v1849, 0.0
        %v1866 = vadd.f32 %v1864, %v1865
        %v1867 = vsel %vm307, %v1850, 0.0
        %v1868 = vadd.f32 %v1866, %v1867
        %v1869 = vsel %vm307, %v1851, 0.0
        %v1870 = vadd.f32 %v1868, %v1869
        %v1871 = vsel %vm307, %v1852, 0.0
        %v1872 = vadd.f32 %v1870, %v1871
        %v1873 = vsel %vm307, %v1853, 0.0
        %v1874 = vadd.f32 %v1872, %v1873
        %v1875 = vsel %vm307, %v1854, 0.0
        %v1876 = vadd.f32 %v1874, %v1875
        %v1877 = vsel %vm307, %v1855, 0.0
        %v1878 = vadd.f32 %v1876, %v1877
        %v1879 = vsel %vm307, %v1856, 0.0
        %v1880 = vadd.f32 %v1878, %v1879
        %v1881 = vsel %vm307, %v1857, 0.0
        %v1882 = vadd.f32 %v1880, %v1881
        %v1883 = vsel %vm307, %v1858, 0.0
        %v1884 = vadd.f32 %v1882, %v1883
        %v1885 = vsel %vm307, %v1859, 0.0
        %v1886 = vadd.f32 %v1884, %v1885
        %v1887 = vsel %vm307, %v1860, 0.0
        %v1888 = vadd.f32 %v1886, %v1887
        %v1889 = vsel %vm307, %v1861, 0.0
        %v1890 = vadd.f32 %v1888, %v1889
        %v1891 = vsel %vm307, %v1862, 0.0
        %v1892 = vadd.f32 %v1890, %v1891
        %v1893 = vsel %vm307, %v1863, 0.0
        %v1894 = vadd.f32 %v1892, %v1893
        %v1895 = vrot.slane %v1894, 4
        %v1896 = vadd.f32 %v1894, %v1895
        %v1897 = vrot.slane %v1896, 2
        %v1898 = vadd.f32 %v1896, %v1897
        %v1899 = vrot.slane %v1898, 1
        %v1900 = vadd.f32 %v1898, %v1899
        %v1901 = vmax.f32 %v1900, 1e-24
        %v1902 = vrsqrt.pop %v1901
        %v1903 = vmul.f32 %v1832, %v1902
        %v1904 = vmul.f32 %v1833, %v1902
        %v1905 = vmul.f32 %v1834, %v1902
        %v1906 = vmul.f32 %v1835, %v1902
        %v1907 = vmul.f32 %v1836, %v1902
        %v1908 = vmul.f32 %v1837, %v1902
        %v1909 = vmul.f32 %v1838, %v1902
        %v1910 = vmul.f32 %v1839, %v1902
        %v1911 = vmul.f32 %v1840, %v1902
        %v1912 = vmul.f32 %v1841, %v1902
        %v1913 = vmul.f32 %v1842, %v1902
        %v1914 = vmul.f32 %v1843, %v1902
        %v1915 = vmul.f32 %v1844, %v1902
        %v1916 = vmul.f32 %v1845, %v1902
        %v1917 = vmul.f32 %v1846, %v1902
        %v1918 = vmul.f32 %v1847, %v1902
        %1919 = vmatprep.subr.mxu0 0.0
        %1920 = vmatpush1.msra.mxu0 %v1918
        %1921 = vmatprep.subr.mxu0 0.0
        %1922 = vmatpush1.msra.mxu0 %v1917
        %1923 = vmatprep.subr.mxu0 0.0
        %1924 = vmatpush1.msra.mxu0 %v1916
        %1925 = vmatprep.subr.mxu0 0.0
        %1926 = vmatpush1.msra.mxu0 %v1915
        %1927 = vmatprep.subr.mxu0 0.0
        %1928 = vmatpush1.msra.mxu0 %v1914
        %1929 = vmatprep.subr.mxu0 0.0
        %1930 = vmatpush1.msra.mxu0 %v1913
        %1931 = vmatprep.subr.mxu0 0.0
        %1932 = vmatpush1.msra.mxu0 %v1912
        %1933 = vmatprep.subr.mxu0 0.0
        %1934 = vmatpush1.msra.mxu0 %v1911
        %1935 = vmatprep.subr.mxu0 0.0
        %1936 = vmatpush1.msra.mxu0 %v1910
        %1937 = vmatprep.subr.mxu0 0.0
        %1938 = vmatpush1.msra.mxu0 %v1909
        %1939 = vmatprep.subr.mxu0 0.0
        %1940 = vmatpush1.msra.mxu0 %v1908
        %1941 = vmatprep.subr.mxu0 0.0
        %1942 = vmatpush1.msra.mxu0 %v1907
        %1943 = vmatprep.subr.mxu0 0.0
        %1944 = vmatpush1.msra.mxu0 %v1906
        %1945 = vmatprep.subr.mxu0 0.0
        %1946 = vmatpush1.msra.mxu0 %v1905
        %1947 = vmatprep.subr.mxu0 0.0
        %1948 = vmatpush1.msra.mxu0 %v1904
        %1949 = vmatprep.subr.mxu0 0.0
        %1950 = vmatpush1.msra.mxu0 %v1903
        %1951 = vmatprep.subr.mxu0 0.0
        %1952 = vmatpush2.msra.mxu0 0.0
        %1953 = vmatprep.subr.mxu0 0.0
        %1954 = vmatpush2.msra.mxu0 0.0
        %1955 = vmatprep.subr.mxu0 0.0
        %1956 = vmatpush2.msra.mxu0 0.0
        %1957 = vmatprep.subr.mxu0 0.0
        %1958 = vmatpush2.msra.mxu0 0.0
        %1959 = vmatprep.subr.mxu0 0.0
        %1960 = vmatpush2.msra.mxu0 0.0
        %1961 = vmatprep.subr.mxu0 0.0
        %1962 = vmatpush2.msra.mxu0 0.0
        %1963 = vmatprep.subr.mxu0 0.0
        %1964 = vmatpush2.msra.mxu0 0.0
        %1965 = vmatprep.subr.mxu0 0.0
        %1966 = vmatpush2.msra.mxu0 0.0
        %1967 = vmatprep.subr.mxu0 0.0
        %1968 = vmatpush2.msra.mxu0 0.0
        %1969 = vmatprep.subr.mxu0 0.0
        %1970 = vmatpush2.msra.mxu0 0.0
        %1971 = vmatprep.subr.mxu0 0.0
        %1972 = vmatpush2.msra.mxu0 0.0
        %1973 = vmatprep.subr.mxu0 0.0
        %1974 = vmatpush2.msra.mxu0 0.0
        %1975 = vmatprep.subr.mxu0 0.0
        %1976 = vmatpush2.msra.mxu0 0.0
        %1977 = vmatprep.subr.mxu0 0.0
        %1978 = vmatpush2.msra.mxu0 0.0
        %1979 = vmatprep.subr.mxu0 0.0
        %1980 = vmatpush2.msra.mxu0 0.0
        %1981 = vmatprep.subr.mxu0 0.0
        %1982 = vmatpush2.msra.mxu0 0.0
        %1983 = vmatprep.mubr.f32.mxu0 0.0
        %1984 = vmatmul.mubr.f32.gmra.mxu0 %v267
        %v1985 = vpop.f32.mrf.mxu0
        %v1986 = vadd.f32 0.0, %v1985
        %v1987 = vpop.f32.mrf.mxu0
        %1988 = vmatprep.mubr.f32.mxu0 0.0
        %1989 = vmatmul.mubr.f32.gmra.mxu0 %v268
        %v1990 = vpop.f32.mrf.mxu0
        %v1991 = vadd.f32 0.0, %v1990
        %v1992 = vpop.f32.mrf.mxu0
        %1993 = vmatprep.mubr.f32.mxu0 0.0
        %1994 = vmatmul.mubr.f32.gmra.mxu0 %v269
        %v1995 = vpop.f32.mrf.mxu0
        %v1996 = vadd.f32 0.0, %v1995
        %v1997 = vpop.f32.mrf.mxu0
        %1998 = vmatprep.mubr.f32.mxu0 0.0
        %1999 = vmatmul.mubr.f32.gmra.mxu0 %v270
        %v2000 = vpop.f32.mrf.mxu0
        %v2001 = vadd.f32 0.0, %v2000
        %v2002 = vpop.f32.mrf.mxu0
        %2003 = vmatprep.mubr.f32.mxu0 0.0
        %2004 = vmatmul.mubr.f32.gmra.mxu0 %v271
        %v2005 = vpop.f32.mrf.mxu0
        %v2006 = vadd.f32 0.0, %v2005
        %v2007 = vpop.f32.mrf.mxu0
        %2008 = vmatprep.mubr.f32.mxu0 0.0
        %2009 = vmatmul.mubr.f32.gmra.mxu0 %v272
        %v2010 = vpop.f32.mrf.mxu0
        %v2011 = vadd.f32 0.0, %v2010
        %v2012 = vpop.f32.mrf.mxu0
        %2013 = vmatprep.mubr.f32.mxu0 0.0
        %2014 = vmatmul.mubr.f32.gmra.mxu0 %v273
        %v2015 = vpop.f32.mrf.mxu0
        %v2016 = vadd.f32 0.0, %v2015
        %v2017 = vpop.f32.mrf.mxu0
        %2018 = vmatprep.mubr.f32.mxu0 0.0
        %2019 = vmatmul.mubr.f32.gmra.mxu0 %v274
        %v2020 = vpop.f32.mrf.mxu0
        %v2021 = vadd.f32 0.0, %v2020
        %v2022 = vpop.f32.mrf.mxu0
        %2023 = vdwg.mxu0
        %v2024 = vsel %vm307, %v1986, -inf
        %v2025 = vsel %vm307, %v1991, -inf
        %v2026 = vsel %vm307, %v1996, -inf
        %v2027 = vsel %vm307, %v2001, -inf
        %v2028 = vsel %vm307, %v2006, -inf
        %v2029 = vmax.f32 %v2024, %v2028
        %v2030 = vsel %vm307, %v2011, -inf
        %v2031 = vmax.f32 %v2025, %v2030
        %v2032 = vsel %vm307, %v2016, -inf
        %v2033 = vmax.f32 %v2026, %v2032
        %v2034 = vsel %vm307, %v2021, -inf
        %v2035 = vmax.f32 %v2027, %v2034
        %v2036 = vmax.f32 %v2029, %v2031
        %v2037 = vmax.f32 %v2033, %v2035
        %v2038 = vmax.f32 %v2036, %v2037
        %v2039 = vrot.slane %v2038, 4
        %v2040 = vmax.f32 %v2038, %v2039
        %v2041 = vrot.slane %v2040, 2
        %v2042 = vmax.f32 %v2040, %v2041
        %v2043 = vrot.slane %v2042, 1
        %v2044 = vmax.f32 %v2042, %v2043
        %v2045 = vsub.f32 %v1986, %v2044
        %v2046 = vsub.f32 %v1991, %v2044
        %v2047 = vsub.f32 %v1996, %v2044
        %v2048 = vsub.f32 %v2001, %v2044
        %v2049 = vsub.f32 %v2006, %v2044
        %v2050 = vsub.f32 %v2011, %v2044
        %v2051 = vsub.f32 %v2016, %v2044
        %v2052 = vsub.f32 %v2021, %v2044
        %v2053 = vmul.f32 %v2045, 1.442695
        %v2054 = vpow.pop %v2053
        %v2055 = vmul.f32 %v2046, 1.442695
        %v2056 = vpow.pop %v2055
        %v2057 = vmul.f32 %v2047, 1.442695
        %v2058 = vpow.pop %v2057
        %v2059 = vmul.f32 %v2048, 1.442695
        %v2060 = vpow.pop %v2059
        %v2061 = vmul.f32 %v2049, 1.442695
        %v2062 = vpow.pop %v2061
        %v2063 = vmul.f32 %v2050, 1.442695
        %v2064 = vpow.pop %v2063
        %v2065 = vmul.f32 %v2051, 1.442695
        %v2066 = vpow.pop %v2065
        %v2067 = vmul.f32 %v2052, 1.442695
        %v2068 = vpow.pop %v2067
        %v2069 = vsel %vm307, %v2054, 0.0
        %v2070 = vsel %vm307, %v2056, 0.0
        %v2071 = vadd.f32 %v2069, %v2070
        %v2072 = vsel %vm307, %v2058, 0.0
        %v2073 = vadd.f32 %v2071, %v2072
        %v2074 = vsel %vm307, %v2060, 0.0
        %v2075 = vadd.f32 %v2073, %v2074
        %v2076 = vsel %vm307, %v2062, 0.0
        %v2077 = vadd.f32 %v2075, %v2076
        %v2078 = vsel %vm307, %v2064, 0.0
        %v2079 = vadd.f32 %v2077, %v2078
        %v2080 = vsel %vm307, %v2066, 0.0
        %v2081 = vadd.f32 %v2079, %v2080
        %v2082 = vsel %vm307, %v2068, 0.0
        %v2083 = vadd.f32 %v2081, %v2082
        %v2084 = vrot.slane %v2083, 4
        %v2085 = vadd.f32 %v2083, %v2084
        %v2086 = vrot.slane %v2085, 2
        %v2087 = vadd.f32 %v2085, %v2086
        %v2088 = vrot.slane %v2087, 1
        %v2089 = vadd.f32 %v2087, %v2088
        %v2090 = vrcp.pop %v2089
        %v2091 = vmul.f32 %v2054, %v2090
        %v2092 = vmul.f32 %v2056, %v2090
        %v2093 = vmul.f32 %v2058, %v2090
        %v2094 = vmul.f32 %v2060, %v2090
        %v2095 = vmul.f32 %v2062, %v2090
        %v2096 = vmul.f32 %v2064, %v2090
        %v2097 = vmul.f32 %v2066, %v2090
        %v2098 = vmul.f32 %v2068, %v2090
        %v2100 = vsel %vm307, %v2091, 0
        %v2103 = vsel %vm307, %v2092, 0
        %v2106 = vsel %vm307, %v2093, 0
        %v2109 = vsel %vm307, %v2094, 0
        %v2112 = vsel %vm307, %v2095, 0
        %v2115 = vsel %vm307, %v2096, 0
        %v2118 = vsel %vm307, %v2097, 0
        %v2121 = vsel %vm307, %v2098, 0
        %v2124 = vsel %vm307, %v1903, 0
        %v2127 = vsel %vm307, %v1904, 0
        %v2130 = vsel %vm307, %v1905, 0
        %v2133 = vsel %vm307, %v1906, 0
        %v2136 = vsel %vm307, %v1907, 0
        %v2139 = vsel %vm307, %v1908, 0
        %v2142 = vsel %vm307, %v1909, 0
        %v2145 = vsel %vm307, %v1910, 0
        %v2148 = vsel %vm307, %v1911, 0
        %v2151 = vsel %vm307, %v1912, 0
        %v2154 = vsel %vm307, %v1913, 0
        %v2157 = vsel %vm307, %v1914, 0
        %v2160 = vsel %vm307, %v1915, 0
        %v2163 = vsel %vm307, %v1916, 0
        %v2166 = vsel %vm307, %v1917, 0
        %v2169 = vsel %vm307, %v1918, 0
        %2171 = vmatprep.subr.mxu0 0.0
        %2172 = vmatpush1.xpose.msra.mxu0 %v2169
        %2173 = vmatprep.subr.mxu0 0.0
        %2174 = vmatpush1.xpose.msra.mxu0 %v2166
        %2175 = vmatprep.subr.mxu0 0.0
        %2176 = vmatpush1.xpose.msra.mxu0 %v2163
        %2177 = vmatprep.subr.mxu0 0.0
        %2178 = vmatpush1.xpose.msra.mxu0 %v2160
        %2179 = vmatprep.subr.mxu0 0.0
        %2180 = vmatpush1.xpose.msra.mxu0 %v2157
        %2181 = vmatprep.subr.mxu0 0.0
        %2182 = vmatpush1.xpose.msra.mxu0 %v2154
        %2183 = vmatprep.subr.mxu0 0.0
        %2184 = vmatpush1.xpose.msra.mxu0 %v2151
        %2185 = vmatprep.subr.mxu0 0.0
        %2186 = vmatpush1.xpose.msra.mxu0 %v2148
        %2187 = vmatprep.subr.mxu0 0.0
        %2188 = vmatpush1.xpose.msra.mxu0 %v2145
        %2189 = vmatprep.subr.mxu0 0.0
        %2190 = vmatpush1.xpose.msra.mxu0 %v2142
        %2191 = vmatprep.subr.mxu0 0.0
        %2192 = vmatpush1.xpose.msra.mxu0 %v2139
        %2193 = vmatprep.subr.mxu0 0.0
        %2194 = vmatpush1.xpose.msra.mxu0 %v2136
        %2195 = vmatprep.subr.mxu0 0.0
        %2196 = vmatpush1.xpose.msra.mxu0 %v2133
        %2197 = vmatprep.subr.mxu0 0.0
        %2198 = vmatpush1.xpose.msra.mxu0 %v2130
        %2199 = vmatprep.subr.mxu0 0.0
        %2200 = vmatpush1.xpose.msra.mxu0 %v2127
        %2201 = vmatprep.subr.mxu0 0.0
        %2202 = vmatpush1.xpose.msra.mxu0 %v2124
        %2203 = vmatprep.subr.mxu0 0.0
        %2204 = vmatpush2.xpose.msra.mxu0 0.0
        %2205 = vmatprep.subr.mxu0 0.0
        %2206 = vmatpush2.xpose.msra.mxu0 0.0
        %2207 = vmatprep.subr.mxu0 0.0
        %2208 = vmatpush2.xpose.msra.mxu0 0.0
        %2209 = vmatprep.subr.mxu0 0.0
        %2210 = vmatpush2.xpose.msra.mxu0 0.0
        %2211 = vmatprep.subr.mxu0 0.0
        %2212 = vmatpush2.xpose.msra.mxu0 0.0
        %2213 = vmatprep.subr.mxu0 0.0
        %2214 = vmatpush2.xpose.msra.mxu0 0.0
        %2215 = vmatprep.subr.mxu0 0.0
        %2216 = vmatpush2.xpose.msra.mxu0 0.0
        %2217 = vmatprep.subr.mxu0 0.0
        %2218 = vmatpush2.xpose.msra.mxu0 0.0
        %2219 = vmatprep.subr.mxu0 0.0
        %2220 = vmatpush2.xpose.msra.mxu0 0.0
        %2221 = vmatprep.subr.mxu0 0.0
        %2222 = vmatpush2.xpose.msra.mxu0 0.0
        %2223 = vmatprep.subr.mxu0 0.0
        %2224 = vmatpush2.xpose.msra.mxu0 0.0
        %2225 = vmatprep.subr.mxu0 0.0
        %2226 = vmatpush2.xpose.msra.mxu0 0.0
        %2227 = vmatprep.subr.mxu0 0.0
        %2228 = vmatpush2.xpose.msra.mxu0 0.0
        %2229 = vmatprep.subr.mxu0 0.0
        %2230 = vmatpush2.xpose.msra.mxu0 0.0
        %2231 = vmatprep.subr.mxu0 0.0
        %2232 = vmatpush2.xpose.msra.mxu0 0.0
        %2233 = vmatprep.subr.mxu0 0.0
        %2234 = vmatpush2.xpose.msra.mxu0 0.0
        %2235 = vmatprep.mubr.f32.mxu0 0.0
        %2236 = vmatmul.mubr.f32.gmra.mxu0 %v2100
        %v2237 = vpop.f32.mrf.mxu0
        %v2238 = vadd.f32 0.0, %v2237
        %v2239 = vpop.f32.mrf.mxu0
        %2240 = vmatprep.mubr.f32.mxu0 0.0
        %2241 = vmatmul.mubr.f32.gmra.mxu0 %v2103
        %v2242 = vpop.f32.mrf.mxu0
        %v2243 = vadd.f32 0.0, %v2242
        %v2244 = vpop.f32.mrf.mxu0
        %2245 = vmatprep.mubr.f32.mxu0 0.0
        %2246 = vmatmul.mubr.f32.gmra.mxu0 %v2106
        %v2247 = vpop.f32.mrf.mxu0
        %v2248 = vadd.f32 0.0, %v2247
        %v2249 = vpop.f32.mrf.mxu0
        %2250 = vmatprep.mubr.f32.mxu0 0.0
        %2251 = vmatmul.mubr.f32.gmra.mxu0 %v2109
        %v2252 = vpop.f32.mrf.mxu0
        %v2253 = vadd.f32 0.0, %v2252
        %v2254 = vpop.f32.mrf.mxu0
        %2255 = vmatprep.mubr.f32.mxu0 0.0
        %2256 = vmatmul.mubr.f32.gmra.mxu0 %v2112
        %v2257 = vpop.f32.mrf.mxu0
        %v2258 = vadd.f32 0.0, %v2257
        %v2259 = vpop.f32.mrf.mxu0
        %2260 = vmatprep.mubr.f32.mxu0 0.0
        %2261 = vmatmul.mubr.f32.gmra.mxu0 %v2115
        %v2262 = vpop.f32.mrf.mxu0
        %v2263 = vadd.f32 0.0, %v2262
        %v2264 = vpop.f32.mrf.mxu0
        %2265 = vmatprep.mubr.f32.mxu0 0.0
        %2266 = vmatmul.mubr.f32.gmra.mxu0 %v2118
        %v2267 = vpop.f32.mrf.mxu0
        %v2268 = vadd.f32 0.0, %v2267
        %v2269 = vpop.f32.mrf.mxu0
        %2270 = vmatprep.mubr.f32.mxu0 0.0
        %2271 = vmatmul.mubr.f32.gmra.mxu0 %v2121
        %v2272 = vpop.f32.mrf.mxu0
        %v2273 = vadd.f32 0.0, %v2272
        %v2274 = vpop.f32.mrf.mxu0
        %2275 = vdwg.mxu0
        %s2276 = scalar_lea.vmem [#allocation2], 192
        %v2277 = vld [vmem:[%s2276] sm:$0xff]
        %v2278 = vld [vmem:[%s2276 + $0x8] sm:$0xff]
        %v2279 = vld [vmem:[%s2276 + $0x10] sm:$0xff]
        %v2280 = vld [vmem:[%s2276 + $0x18] sm:$0xff]
        %v2281 = vld [vmem:[%s2276 + $0x20] sm:$0xff]
        %v2282 = vld [vmem:[%s2276 + $0x28] sm:$0xff]
        %v2283 = vld [vmem:[%s2276 + $0x30] sm:$0xff]
        %v2284 = vld [vmem:[%s2276 + $0x38] sm:$0xff]
        %v2285 = vadd.f32 %v2277, %v2238
        %v2286 = vadd.f32 %v2278, %v2243
        %v2287 = vadd.f32 %v2279, %v2248
        %v2288 = vadd.f32 %v2280, %v2253
        %v2289 = vadd.f32 %v2281, %v2258
        %v2290 = vadd.f32 %v2282, %v2263
        %v2291 = vadd.f32 %v2283, %v2268
        %v2292 = vadd.f32 %v2284, %v2273
        %2293 = vst [vmem:[%s2276] sm:$0xff] %v2285
        %2294 = vst [vmem:[%s2276 + $0x8] sm:$0xff] %v2286
        %2295 = vst [vmem:[%s2276 + $0x10] sm:$0xff] %v2287
        %2296 = vst [vmem:[%s2276 + $0x18] sm:$0xff] %v2288
        %2297 = vst [vmem:[%s2276 + $0x20] sm:$0xff] %v2289
        %2298 = vst [vmem:[%s2276 + $0x28] sm:$0xff] %v2290
        %2299 = vst [vmem:[%s2276 + $0x30] sm:$0xff] %v2291
        %2300 = vst [vmem:[%s2276 + $0x38] sm:$0xff] %v2292
        %s2301 = scalar_lea.vmem [#allocation3], 192
        %v2302 = vld [vmem:[%s2301] sm:$0xff]
        %v2303 = vld [vmem:[%s2301 + $0x8] sm:$0xff]
        %v2304 = vld [vmem:[%s2301 + $0x10] sm:$0xff]
        %v2305 = vld [vmem:[%s2301 + $0x18] sm:$0xff]
        %v2306 = vld [vmem:[%s2301 + $0x20] sm:$0xff]
        %v2307 = vld [vmem:[%s2301 + $0x28] sm:$0xff]
        %v2308 = vld [vmem:[%s2301 + $0x30] sm:$0xff]
        %v2309 = vld [vmem:[%s2301 + $0x38] sm:$0xff]
        %v2310 = vsel %vm307, %v2091, 0.0
        %2311 = vadd.xlane.f32.xlu0 %v2310
        %v2312 = vpop.xlane.xlu0 %2311
        %v2313 = vsel %vm307, %v2092, 0.0
        %2314 = vadd.xlane.f32.xlu0 %v2313
        %v2315 = vpop.xlane.xlu0 %2314
        %v2316 = vsel %vm307, %v2093, 0.0
        %2317 = vadd.xlane.f32.xlu0 %v2316
        %v2318 = vpop.xlane.xlu0 %2317
        %v2319 = vsel %vm307, %v2094, 0.0
        %2320 = vadd.xlane.f32.xlu0 %v2319
        %v2321 = vpop.xlane.xlu0 %2320
        %v2322 = vsel %vm307, %v2095, 0.0
        %2323 = vadd.xlane.f32.xlu0 %v2322
        %v2324 = vpop.xlane.xlu0 %2323
        %v2325 = vsel %vm307, %v2096, 0.0
        %2326 = vadd.xlane.f32.xlu0 %v2325
        %v2327 = vpop.xlane.xlu0 %2326
        %v2328 = vsel %vm307, %v2097, 0.0
        %2329 = vadd.xlane.f32.xlu0 %v2328
        %v2330 = vpop.xlane.xlu0 %2329
        %v2331 = vsel %vm307, %v2098, 0.0
        %2332 = vadd.xlane.f32.xlu0 %v2331
        %v2333 = vpop.xlane.xlu0 %2332
        %v2334 = vadd.f32 %v2302, %v2312
        %v2335 = vadd.f32 %v2303, %v2315
        %v2336 = vadd.f32 %v2304, %v2318
        %v2337 = vadd.f32 %v2305, %v2321
        %v2338 = vadd.f32 %v2306, %v2324
        %v2339 = vadd.f32 %v2307, %v2327
        %v2340 = vadd.f32 %v2308, %v2330
        %v2341 = vadd.f32 %v2309, %v2333
        %2342 = vst.msk [vmem:[%s2301] sm:$0xff] %vm784, %v2334
        %2343 = vst.msk [vmem:[%s2301 + $0x8] sm:$0xff] %vm784, %v2335
        %2344 = vst.msk [vmem:[%s2301 + $0x10] sm:$0xff] %vm784, %v2336
        %2345 = vst.msk [vmem:[%s2301 + $0x18] sm:$0xff] %vm784, %v2337
        %2346 = vst.msk [vmem:[%s2301 + $0x20] sm:$0xff] %vm784, %v2338
        %2347 = vst.msk [vmem:[%s2301 + $0x28] sm:$0xff] %vm784, %v2339
        %2348 = vst.msk [vmem:[%s2301 + $0x30] sm:$0xff] %vm784, %v2340
        %2349 = vst.msk [vmem:[%s2301 + $0x38] sm:$0xff] %vm784, %v2341
        // Predicated region
        $region37: #{tpu_custom_call.1} parent=31 // pred_check
          %p2350 = pneg %p198
        $region38: #{tpu_custom_call.1} parent=31 // pred_check_branch
          %2352 = sbr.rel (%p2350) target = $region40
        $region39: #{tpu_custom_call.1} parent=31 // pred_region
          %v2353 = vld [vmem:[%s2] sm:$0xff]
          %v2354 = vld [vmem:[%s2 + $0x8] sm:$0xff]
          %v2355 = vld [vmem:[%s2 + $0x10] sm:$0xff]
          %v2356 = vld [vmem:[%s2 + $0x18] sm:$0xff]
          %v2357 = vld [vmem:[%s2 + $0x20] sm:$0xff]
          %v2358 = vld [vmem:[%s2 + $0x28] sm:$0xff]
          %v2359 = vld [vmem:[%s2 + $0x30] sm:$0xff]
          %v2360 = vld [vmem:[%s2 + $0x38] sm:$0xff]
          %v2361 = vld [vmem:[#allocation2] sm:$0xff]
          %v2362 = vld [vmem:[#allocation2 + $0x8] sm:$0xff]
          %v2363 = vld [vmem:[#allocation2 + $0x10] sm:$0xff]
          %v2364 = vld [vmem:[#allocation2 + $0x18] sm:$0xff]
          %v2365 = vld [vmem:[#allocation2 + $0x20] sm:$0xff]
          %v2366 = vld [vmem:[#allocation2 + $0x28] sm:$0xff]
          %v2367 = vld [vmem:[#allocation2 + $0x30] sm:$0xff]
          %v2368 = vld [vmem:[#allocation2 + $0x38] sm:$0xff]
          %v2369 = vld [vmem:[#allocation2 + $0x40] sm:$0xff]
          %v2370 = vld [vmem:[#allocation2 + $0x48] sm:$0xff]
          %v2371 = vld [vmem:[#allocation2 + $0x50] sm:$0xff]
          %v2372 = vld [vmem:[#allocation2 + $0x58] sm:$0xff]
          %v2373 = vld [vmem:[#allocation2 + $0x60] sm:$0xff]
          %v2374 = vld [vmem:[#allocation2 + $0x68] sm:$0xff]
          %v2375 = vld [vmem:[#allocation2 + $0x70] sm:$0xff]
          %v2376 = vld [vmem:[#allocation2 + $0x78] sm:$0xff]
          %v2377 = vld [vmem:[#allocation2 + $0x80] sm:$0xff]
          %v2378 = vld [vmem:[#allocation2 + $0x88] sm:$0xff]
          %v2379 = vld [vmem:[#allocation2 + $0x90] sm:$0xff]
          %v2380 = vld [vmem:[#allocation2 + $0x98] sm:$0xff]
          %v2381 = vld [vmem:[#allocation2 + $0xa0] sm:$0xff]
          %v2382 = vld [vmem:[#allocation2 + $0xa8] sm:$0xff]
          %v2383 = vld [vmem:[#allocation2 + $0xb0] sm:$0xff]
          %v2384 = vld [vmem:[#allocation2 + $0xb8] sm:$0xff]
          %v2385 = vld [vmem:[#allocation2 + $0xc0] sm:$0xff]
          %v2386 = vld [vmem:[#allocation2 + $0xc8] sm:$0xff]
          %v2387 = vld [vmem:[#allocation2 + $0xd0] sm:$0xff]
          %v2388 = vld [vmem:[#allocation2 + $0xd8] sm:$0xff]
          %v2389 = vld [vmem:[#allocation2 + $0xe0] sm:$0xff]
          %v2390 = vld [vmem:[#allocation2 + $0xe8] sm:$0xff]
          %v2391 = vld [vmem:[#allocation2 + $0xf0] sm:$0xff]
          %v2392 = vld [vmem:[#allocation2 + $0xf8] sm:$0xff]
          %v2393 = vld [vmem:[#allocation3] sm:$0xff]
          %v2394 = vld [vmem:[#allocation3 + $0x8] sm:$0xff]
          %v2395 = vld [vmem:[#allocation3 + $0x10] sm:$0xff]
          %v2396 = vld [vmem:[#allocation3 + $0x18] sm:$0xff]
          %v2397 = vld [vmem:[#allocation3 + $0x20] sm:$0xff]
          %v2398 = vld [vmem:[#allocation3 + $0x28] sm:$0xff]
          %v2399 = vld [vmem:[#allocation3 + $0x30] sm:$0xff]
          %v2400 = vld [vmem:[#allocation3 + $0x38] sm:$0xff]
          %v2401 = vld [vmem:[#allocation3 + $0x40] sm:$0xff]
          %v2402 = vld [vmem:[#allocation3 + $0x48] sm:$0xff]
          %v2403 = vld [vmem:[#allocation3 + $0x50] sm:$0xff]
          %v2404 = vld [vmem:[#allocation3 + $0x58] sm:$0xff]
          %v2405 = vld [vmem:[#allocation3 + $0x60] sm:$0xff]
          %v2406 = vld [vmem:[#allocation3 + $0x68] sm:$0xff]
          %v2407 = vld [vmem:[#allocation3 + $0x70] sm:$0xff]
          %v2408 = vld [vmem:[#allocation3 + $0x78] sm:$0xff]
          %v2409 = vld [vmem:[#allocation3 + $0x80] sm:$0xff]
          %v2410 = vld [vmem:[#allocation3 + $0x88] sm:$0xff]
          %v2411 = vld [vmem:[#allocation3 + $0x90] sm:$0xff]
          %v2412 = vld [vmem:[#allocation3 + $0x98] sm:$0xff]
          %v2413 = vld [vmem:[#allocation3 + $0xa0] sm:$0xff]
          %v2414 = vld [vmem:[#allocation3 + $0xa8] sm:$0xff]
          %v2415 = vld [vmem:[#allocation3 + $0xb0] sm:$0xff]
          %v2416 = vld [vmem:[#allocation3 + $0xb8] sm:$0xff]
          %v2417 = vld [vmem:[#allocation3 + $0xc0] sm:$0xff]
          %v2418 = vld [vmem:[#allocation3 + $0xc8] sm:$0xff]
          %v2419 = vld [vmem:[#allocation3 + $0xd0] sm:$0xff]
          %v2420 = vld [vmem:[#allocation3 + $0xd8] sm:$0xff]
          %v2421 = vld [vmem:[#allocation3 + $0xe0] sm:$0xff]
          %v2422 = vld [vmem:[#allocation3 + $0xe8] sm:$0xff]
          %v2423 = vld [vmem:[#allocation3 + $0xf0] sm:$0xff]
          %v2424 = vld [vmem:[#allocation3 + $0xf8] sm:$0xff]
          %2426 = vset.pattern.permute.xlu0 0
          %2427 = vperm.xlu0 %2426, %v2393
          %v2428 = vpop.permute.xlu0 %2427
          %2431 = vset.pattern.permute.xlu0 0
          %2432 = vperm.xlu0 %2431, %v2394
          %v2433 = vpop.permute.xlu0 %2432
          %2436 = vset.pattern.permute.xlu0 0
          %2437 = vperm.xlu0 %2436, %v2395
          %v2438 = vpop.permute.xlu0 %2437
          %2441 = vset.pattern.permute.xlu0 0
          %2442 = vperm.xlu0 %2441, %v2396
          %v2443 = vpop.permute.xlu0 %2442
          %2446 = vset.pattern.permute.xlu0 0
          %2447 = vperm.xlu0 %2446, %v2397
          %v2448 = vpop.permute.xlu0 %2447
          %2451 = vset.pattern.permute.xlu0 0
          %2452 = vperm.xlu0 %2451, %v2398
          %v2453 = vpop.permute.xlu0 %2452
          %2456 = vset.pattern.permute.xlu0 0
          %2457 = vperm.xlu0 %2456, %v2399
          %v2458 = vpop.permute.xlu0 %2457
          %2461 = vset.pattern.permute.xlu0 0
          %2462 = vperm.xlu0 %2461, %v2400
          %v2463 = vpop.permute.xlu0 %2462
          %2466 = vset.pattern.permute.xlu0 0
          %2467 = vperm.xlu0 %2466, %v2401
          %v2468 = vpop.permute.xlu0 %2467
          %2471 = vset.pattern.permute.xlu0 0
          %2472 = vperm.xlu0 %2471, %v2402
          %v2473 = vpop.permute.xlu0 %2472
          %2476 = vset.pattern.permute.xlu0 0
          %2477 = vperm.xlu0 %2476, %v2403
          %v2478 = vpop.permute.xlu0 %2477
          %2481 = vset.pattern.permute.xlu0 0
          %2482 = vperm.xlu0 %2481, %v2404
          %v2483 = vpop.permute.xlu0 %2482
          %2486 = vset.pattern.permute.xlu0 0
          %2487 = vperm.xlu0 %2486, %v2405
          %v2488 = vpop.permute.xlu0 %2487
          %2491 = vset.pattern.permute.xlu0 0
          %2492 = vperm.xlu0 %2491, %v2406
          %v2493 = vpop.permute.xlu0 %2492
          %2496 = vset.pattern.permute.xlu0 0
          %2497 = vperm.xlu0 %2496, %v2407
          %v2498 = vpop.permute.xlu0 %2497
          %2501 = vset.pattern.permute.xlu0 0
          %2502 = vperm.xlu0 %2501, %v2408
          %v2503 = vpop.permute.xlu0 %2502
          %2506 = vset.pattern.permute.xlu0 0
          %2507 = vperm.xlu0 %2506, %v2409
          %v2508 = vpop.permute.xlu0 %2507
          %2511 = vset.pattern.permute.xlu0 0
          %2512 = vperm.xlu0 %2511, %v2410
          %v2513 = vpop.permute.xlu0 %2512
          %2516 = vset.pattern.permute.xlu0 0
          %2517 = vperm.xlu0 %2516, %v2411
          %v2518 = vpop.permute.xlu0 %2517
          %2521 = vset.pattern.permute.xlu0 0
          %2522 = vperm.xlu0 %2521, %v2412
          %v2523 = vpop.permute.xlu0 %2522
          %2526 = vset.pattern.permute.xlu0 0
          %2527 = vperm.xlu0 %2526, %v2413
          %v2528 = vpop.permute.xlu0 %2527
          %2531 = vset.pattern.permute.xlu0 0
          %2532 = vperm.xlu0 %2531, %v2414
          %v2533 = vpop.permute.xlu0 %2532
          %2536 = vset.pattern.permute.xlu0 0
          %2537 = vperm.xlu0 %2536, %v2415
          %v2538 = vpop.permute.xlu0 %2537
          %2541 = vset.pattern.permute.xlu0 0
          %2542 = vperm.xlu0 %2541, %v2416
          %v2543 = vpop.permute.xlu0 %2542
          %2546 = vset.pattern.permute.xlu0 0
          %2547 = vperm.xlu0 %2546, %v2417
          %v2548 = vpop.permute.xlu0 %2547
          %2551 = vset.pattern.permute.xlu0 0
          %2552 = vperm.xlu0 %2551, %v2418
          %v2553 = vpop.permute.xlu0 %2552
          %2556 = vset.pattern.permute.xlu0 0
          %2557 = vperm.xlu0 %2556, %v2419
          %v2558 = vpop.permute.xlu0 %2557
          %2561 = vset.pattern.permute.xlu0 0
          %2562 = vperm.xlu0 %2561, %v2420
          %v2563 = vpop.permute.xlu0 %2562
          %2566 = vset.pattern.permute.xlu0 0
          %2567 = vperm.xlu0 %2566, %v2421
          %v2568 = vpop.permute.xlu0 %2567
          %2571 = vset.pattern.permute.xlu0 0
          %2572 = vperm.xlu0 %2571, %v2422
          %v2573 = vpop.permute.xlu0 %2572
          %2576 = vset.pattern.permute.xlu0 0
          %2577 = vperm.xlu0 %2576, %v2423
          %v2578 = vpop.permute.xlu0 %2577
          %2581 = vset.pattern.permute.xlu0 0
          %2582 = vperm.xlu0 %2581, %v2424
          %v2583 = vpop.permute.xlu0 %2582
          %v2585 = vmul.f32 %v2428, %v2353
          %v2586 = vmul.f32 %v2433, %v2354
          %v2587 = vmul.f32 %v2438, %v2355
          %v2588 = vmul.f32 %v2443, %v2356
          %v2589 = vmul.f32 %v2448, %v2357
          %v2590 = vmul.f32 %v2453, %v2358
          %v2591 = vmul.f32 %v2458, %v2359
          %v2592 = vmul.f32 %v2463, %v2360
          %v2593 = vmul.f32 %v2468, %v2353
          %v2594 = vmul.f32 %v2473, %v2354
          %v2595 = vmul.f32 %v2478, %v2355
          %v2596 = vmul.f32 %v2483, %v2356
          %v2597 = vmul.f32 %v2488, %v2357
          %v2598 = vmul.f32 %v2493, %v2358
          %v2599 = vmul.f32 %v2498, %v2359
          %v2600 = vmul.f32 %v2503, %v2360
          %v2601 = vmul.f32 %v2508, %v2353
          %v2602 = vmul.f32 %v2513, %v2354
          %v2603 = vmul.f32 %v2518, %v2355
          %v2604 = vmul.f32 %v2523, %v2356
          %v2605 = vmul.f32 %v2528, %v2357
          %v2606 = vmul.f32 %v2533, %v2358
          %v2607 = vmul.f32 %v2538, %v2359
          %v2608 = vmul.f32 %v2543, %v2360
          %v2609 = vmul.f32 %v2548, %v2353
          %v2610 = vmul.f32 %v2553, %v2354
          %v2611 = vmul.f32 %v2558, %v2355
          %v2612 = vmul.f32 %v2563, %v2356
          %v2613 = vmul.f32 %v2568, %v2357
          %v2614 = vmul.f32 %v2573, %v2358
          %v2615 = vmul.f32 %v2578, %v2359
          %v2616 = vmul.f32 %v2583, %v2360
          %v2617 = vsub.f32 %v2361, %v2585
          %v2618 = vsub.f32 %v2362, %v2586
          %v2619 = vsub.f32 %v2363, %v2587
          %v2620 = vsub.f32 %v2364, %v2588
          %v2621 = vsub.f32 %v2365, %v2589
          %v2622 = vsub.f32 %v2366, %v2590
          %v2623 = vsub.f32 %v2367, %v2591
          %v2624 = vsub.f32 %v2368, %v2592
          %v2625 = vsub.f32 %v2369, %v2593
          %v2626 = vsub.f32 %v2370, %v2594
          %v2627 = vsub.f32 %v2371, %v2595
          %v2628 = vsub.f32 %v2372, %v2596
          %v2629 = vsub.f32 %v2373, %v2597
          %v2630 = vsub.f32 %v2374, %v2598
          %v2631 = vsub.f32 %v2375, %v2599
          %v2632 = vsub.f32 %v2376, %v2600
          %v2633 = vsub.f32 %v2377, %v2601
          %v2634 = vsub.f32 %v2378, %v2602
          %v2635 = vsub.f32 %v2379, %v2603
          %v2636 = vsub.f32 %v2380, %v2604
          %v2637 = vsub.f32 %v2381, %v2605
          %v2638 = vsub.f32 %v2382, %v2606
          %v2639 = vsub.f32 %v2383, %v2607
          %v2640 = vsub.f32 %v2384, %v2608
          %v2641 = vsub.f32 %v2385, %v2609
          %v2642 = vsub.f32 %v2386, %v2610
          %v2643 = vsub.f32 %v2387, %v2611
          %v2644 = vsub.f32 %v2388, %v2612
          %v2645 = vsub.f32 %v2389, %v2613
          %v2646 = vsub.f32 %v2390, %v2614
          %v2647 = vsub.f32 %v2391, %v2615
          %v2648 = vsub.f32 %v2392, %v2616
          %v2649 = vmul.f32 %v2617, %v2617
          %v2650 = vmul.f32 %v2618, %v2618
          %v2651 = vmul.f32 %v2619, %v2619
          %v2652 = vmul.f32 %v2620, %v2620
          %v2653 = vmul.f32 %v2621, %v2621
          %v2654 = vmul.f32 %v2622, %v2622
          %v2655 = vmul.f32 %v2623, %v2623
          %v2656 = vmul.f32 %v2624, %v2624
          %v2657 = vmul.f32 %v2625, %v2625
          %v2658 = vmul.f32 %v2626, %v2626
          %v2659 = vmul.f32 %v2627, %v2627
          %v2660 = vmul.f32 %v2628, %v2628
          %v2661 = vmul.f32 %v2629, %v2629
          %v2662 = vmul.f32 %v2630, %v2630
          %v2663 = vmul.f32 %v2631, %v2631
          %v2664 = vmul.f32 %v2632, %v2632
          %v2665 = vmul.f32 %v2633, %v2633
          %v2666 = vmul.f32 %v2634, %v2634
          %v2667 = vmul.f32 %v2635, %v2635
          %v2668 = vmul.f32 %v2636, %v2636
          %v2669 = vmul.f32 %v2637, %v2637
          %v2670 = vmul.f32 %v2638, %v2638
          %v2671 = vmul.f32 %v2639, %v2639
          %v2672 = vmul.f32 %v2640, %v2640
          %v2673 = vmul.f32 %v2641, %v2641
          %v2674 = vmul.f32 %v2642, %v2642
          %v2675 = vmul.f32 %v2643, %v2643
          %v2676 = vmul.f32 %v2644, %v2644
          %v2677 = vmul.f32 %v2645, %v2645
          %v2678 = vmul.f32 %v2646, %v2646
          %v2679 = vmul.f32 %v2647, %v2647
          %v2680 = vmul.f32 %v2648, %v2648
          %2681 = vadd.xlane.f32.xlu0 %v2649
          %v2682 = vpop.xlane.xlu0 %2681
          %2683 = vadd.xlane.f32.xlu0 %v2650
          %v2684 = vpop.xlane.xlu0 %2683
          %2685 = vadd.xlane.f32.xlu0 %v2651
          %v2686 = vpop.xlane.xlu0 %2685
          %2687 = vadd.xlane.f32.xlu0 %v2652
          %v2688 = vpop.xlane.xlu0 %2687
          %2689 = vadd.xlane.f32.xlu0 %v2653
          %v2690 = vpop.xlane.xlu0 %2689
          %2691 = vadd.xlane.f32.xlu0 %v2654
          %v2692 = vpop.xlane.xlu0 %2691
          %2693 = vadd.xlane.f32.xlu0 %v2655
          %v2694 = vpop.xlane.xlu0 %2693
          %2695 = vadd.xlane.f32.xlu0 %v2656
          %v2696 = vpop.xlane.xlu0 %2695
          %2697 = vadd.xlane.f32.xlu0 %v2657
          %v2698 = vpop.xlane.xlu0 %2697
          %2699 = vadd.xlane.f32.xlu0 %v2658
          %v2700 = vpop.xlane.xlu0 %2699
          %2701 = vadd.xlane.f32.xlu0 %v2659
          %v2702 = vpop.xlane.xlu0 %2701
          %2703 = vadd.xlane.f32.xlu0 %v2660
          %v2704 = vpop.xlane.xlu0 %2703
          %2705 = vadd.xlane.f32.xlu0 %v2661
          %v2706 = vpop.xlane.xlu0 %2705
          %2707 = vadd.xlane.f32.xlu0 %v2662
          %v2708 = vpop.xlane.xlu0 %2707
          %2709 = vadd.xlane.f32.xlu0 %v2663
          %v2710 = vpop.xlane.xlu0 %2709
          %2711 = vadd.xlane.f32.xlu0 %v2664
          %v2712 = vpop.xlane.xlu0 %2711
          %2713 = vadd.xlane.f32.xlu0 %v2665
          %v2714 = vpop.xlane.xlu0 %2713
          %2715 = vadd.xlane.f32.xlu0 %v2666
          %v2716 = vpop.xlane.xlu0 %2715
          %2717 = vadd.xlane.f32.xlu0 %v2667
          %v2718 = vpop.xlane.xlu0 %2717
          %2719 = vadd.xlane.f32.xlu0 %v2668
          %v2720 = vpop.xlane.xlu0 %2719
          %2721 = vadd.xlane.f32.xlu0 %v2669
          %v2722 = vpop.xlane.xlu0 %2721
          %2723 = vadd.xlane.f32.xlu0 %v2670
          %v2724 = vpop.xlane.xlu0 %2723
          %2725 = vadd.xlane.f32.xlu0 %v2671
          %v2726 = vpop.xlane.xlu0 %2725
          %2727 = vadd.xlane.f32.xlu0 %v2672
          %v2728 = vpop.xlane.xlu0 %2727
          %2729 = vadd.xlane.f32.xlu0 %v2673
          %v2730 = vpop.xlane.xlu0 %2729
          %2731 = vadd.xlane.f32.xlu0 %v2674
          %v2732 = vpop.xlane.xlu0 %2731
          %2733 = vadd.xlane.f32.xlu0 %v2675
          %v2734 = vpop.xlane.xlu0 %2733
          %2735 = vadd.xlane.f32.xlu0 %v2676
          %v2736 = vpop.xlane.xlu0 %2735
          %2737 = vadd.xlane.f32.xlu0 %v2677
          %v2738 = vpop.xlane.xlu0 %2737
          %2739 = vadd.xlane.f32.xlu0 %v2678
          %v2740 = vpop.xlane.xlu0 %2739
          %2741 = vadd.xlane.f32.xlu0 %v2679
          %v2742 = vpop.xlane.xlu0 %2741
          %2743 = vadd.xlane.f32.xlu0 %v2680
          %v2744 = vpop.xlane.xlu0 %2743
          %v2745 = vmax.f32 %v2682, 1e-24
          %v2746 = vmax.f32 %v2684, 1e-24
          %v2747 = vmax.f32 %v2686, 1e-24
          %v2748 = vmax.f32 %v2688, 1e-24
          %v2749 = vmax.f32 %v2690, 1e-24
          %v2750 = vmax.f32 %v2692, 1e-24
          %v2751 = vmax.f32 %v2694, 1e-24
          %v2752 = vmax.f32 %v2696, 1e-24
          %v2753 = vmax.f32 %v2698, 1e-24
          %v2754 = vmax.f32 %v2700, 1e-24
          %v2755 = vmax.f32 %v2702, 1e-24
          %v2756 = vmax.f32 %v2704, 1e-24
          %v2757 = vmax.f32 %v2706, 1e-24
          %v2758 = vmax.f32 %v2708, 1e-24
          %v2759 = vmax.f32 %v2710, 1e-24
          %v2760 = vmax.f32 %v2712, 1e-24
          %v2761 = vmax.f32 %v2714, 1e-24
          %v2762 = vmax.f32 %v2716, 1e-24
          %v2763 = vmax.f32 %v2718, 1e-24
          %v2764 = vmax.f32 %v2720, 1e-24
          %v2765 = vmax.f32 %v2722, 1e-24
          %v2766 = vmax.f32 %v2724, 1e-24
          %v2767 = vmax.f32 %v2726, 1e-24
          %v2768 = vmax.f32 %v2728, 1e-24
          %v2769 = vmax.f32 %v2730, 1e-24
          %v2770 = vmax.f32 %v2732, 1e-24
          %v2771 = vmax.f32 %v2734, 1e-24
          %v2772 = vmax.f32 %v2736, 1e-24
          %v2773 = vmax.f32 %v2738, 1e-24
          %v2774 = vmax.f32 %v2740, 1e-24
          %v2775 = vmax.f32 %v2742, 1e-24
          %v2776 = vmax.f32 %v2744, 1e-24
          %v2777 = vrsqrt.pop %v2745
          %v2778 = vrsqrt.pop %v2746
          %v2779 = vrsqrt.pop %v2747
          %v2780 = vrsqrt.pop %v2748
          %v2781 = vrsqrt.pop %v2749
          %v2782 = vrsqrt.pop %v2750
          %v2783 = vrsqrt.pop %v2751
          %v2784 = vrsqrt.pop %v2752
          %v2785 = vrsqrt.pop %v2753
          %v2786 = vrsqrt.pop %v2754
          %v2787 = vrsqrt.pop %v2755
          %v2788 = vrsqrt.pop %v2756
          %v2789 = vrsqrt.pop %v2757
          %v2790 = vrsqrt.pop %v2758
          %v2791 = vrsqrt.pop %v2759
          %v2792 = vrsqrt.pop %v2760
          %v2793 = vrsqrt.pop %v2761
          %v2794 = vrsqrt.pop %v2762
          %v2795 = vrsqrt.pop %v2763
          %v2796 = vrsqrt.pop %v2764
          %v2797 = vrsqrt.pop %v2765
          %v2798 = vrsqrt.pop %v2766
          %v2799 = vrsqrt.pop %v2767
          %v2800 = vrsqrt.pop %v2768
          %v2801 = vrsqrt.pop %v2769
          %v2802 = vrsqrt.pop %v2770
          %v2803 = vrsqrt.pop %v2771
          %v2804 = vrsqrt.pop %v2772
          %v2805 = vrsqrt.pop %v2773
          %v2806 = vrsqrt.pop %v2774
          %v2807 = vrsqrt.pop %v2775
          %v2808 = vrsqrt.pop %v2776
          %v2809 = vmul.f32 %v2617, %v2777
          %v2810 = vmul.f32 %v2618, %v2778
          %v2811 = vmul.f32 %v2619, %v2779
          %v2812 = vmul.f32 %v2620, %v2780
          %v2813 = vmul.f32 %v2621, %v2781
          %v2814 = vmul.f32 %v2622, %v2782
          %v2815 = vmul.f32 %v2623, %v2783
          %v2816 = vmul.f32 %v2624, %v2784
          %v2817 = vmul.f32 %v2625, %v2785
          %v2818 = vmul.f32 %v2626, %v2786
          %v2819 = vmul.f32 %v2627, %v2787
          %v2820 = vmul.f32 %v2628, %v2788
          %v2821 = vmul.f32 %v2629, %v2789
          %v2822 = vmul.f32 %v2630, %v2790
          %v2823 = vmul.f32 %v2631, %v2791
          %v2824 = vmul.f32 %v2632, %v2792
          %v2825 = vmul.f32 %v2633, %v2793
          %v2826 = vmul.f32 %v2634, %v2794
          %v2827 = vmul.f32 %v2635, %v2795
          %v2828 = vmul.f32 %v2636, %v2796
          %v2829 = vmul.f32 %v2637, %v2797
          %v2830 = vmul.f32 %v2638, %v2798
          %v2831 = vmul.f32 %v2639, %v2799
          %v2832 = vmul.f32 %v2640, %v2800
          %v2833 = vmul.f32 %v2641, %v2801
          %v2834 = vmul.f32 %v2642, %v2802
          %v2835 = vmul.f32 %v2643, %v2803
          %v2836 = vmul.f32 %v2644, %v2804
          %v2837 = vmul.f32 %v2645, %v2805
          %v2838 = vmul.f32 %v2646, %v2806
          %v2839 = vmul.f32 %v2647, %v2807
          %v2840 = vmul.f32 %v2648, %v2808
          %v2841 = vmul.f32 %v2809, %v2809
          %v2842 = vmul.f32 %v2810, %v2810
          %v2843 = vmul.f32 %v2811, %v2811
          %v2844 = vmul.f32 %v2812, %v2812
          %v2845 = vmul.f32 %v2813, %v2813
          %v2846 = vmul.f32 %v2814, %v2814
          %v2847 = vmul.f32 %v2815, %v2815
          %v2848 = vmul.f32 %v2816, %v2816
          %v2849 = vmul.f32 %v2817, %v2817
          %v2850 = vmul.f32 %v2818, %v2818
          %v2851 = vmul.f32 %v2819, %v2819
          %v2852 = vmul.f32 %v2820, %v2820
          %v2853 = vmul.f32 %v2821, %v2821
          %v2854 = vmul.f32 %v2822, %v2822
          %v2855 = vmul.f32 %v2823, %v2823
          %v2856 = vmul.f32 %v2824, %v2824
          %v2857 = vmul.f32 %v2825, %v2825
          %v2858 = vmul.f32 %v2826, %v2826
          %v2859 = vmul.f32 %v2827, %v2827
          %v2860 = vmul.f32 %v2828, %v2828
          %v2861 = vmul.f32 %v2829, %v2829
          %v2862 = vmul.f32 %v2830, %v2830
          %v2863 = vmul.f32 %v2831, %v2831
          %v2864 = vmul.f32 %v2832, %v2832
          %v2865 = vmul.f32 %v2833, %v2833
          %v2866 = vmul.f32 %v2834, %v2834
          %v2867 = vmul.f32 %v2835, %v2835
          %v2868 = vmul.f32 %v2836, %v2836
          %v2869 = vmul.f32 %v2837, %v2837
          %v2870 = vmul.f32 %v2838, %v2838
          %v2871 = vmul.f32 %v2839, %v2839
          %v2872 = vmul.f32 %v2840, %v2840
          %2873 = vadd.xlane.f32.xlu0 %v2841
          %v2874 = vpop.xlane.xlu0 %2873
          %2875 = vadd.xlane.f32.xlu0 %v2842
          %v2876 = vpop.xlane.xlu0 %2875
          %2877 = vadd.xlane.f32.xlu0 %v2843
          %v2878 = vpop.xlane.xlu0 %2877
          %2879 = vadd.xlane.f32.xlu0 %v2844
          %v2880 = vpop.xlane.xlu0 %2879
          %2881 = vadd.xlane.f32.xlu0 %v2845
          %v2882 = vpop.xlane.xlu0 %2881
          %2883 = vadd.xlane.f32.xlu0 %v2846
          %v2884 = vpop.xlane.xlu0 %2883
          %2885 = vadd.xlane.f32.xlu0 %v2847
          %v2886 = vpop.xlane.xlu0 %2885
          %2887 = vadd.xlane.f32.xlu0 %v2848
          %v2888 = vpop.xlane.xlu0 %2887
          %2889 = vadd.xlane.f32.xlu0 %v2849
          %v2890 = vpop.xlane.xlu0 %2889
          %2891 = vadd.xlane.f32.xlu0 %v2850
          %v2892 = vpop.xlane.xlu0 %2891
          %2893 = vadd.xlane.f32.xlu0 %v2851
          %v2894 = vpop.xlane.xlu0 %2893
          %2895 = vadd.xlane.f32.xlu0 %v2852
          %v2896 = vpop.xlane.xlu0 %2895
          %2897 = vadd.xlane.f32.xlu0 %v2853
          %v2898 = vpop.xlane.xlu0 %2897
          %2899 = vadd.xlane.f32.xlu0 %v2854
          %v2900 = vpop.xlane.xlu0 %2899
          %2901 = vadd.xlane.f32.xlu0 %v2855
          %v2902 = vpop.xlane.xlu0 %2901
          %2903 = vadd.xlane.f32.xlu0 %v2856
          %v2904 = vpop.xlane.xlu0 %2903
          %2905 = vadd.xlane.f32.xlu0 %v2857
          %v2906 = vpop.xlane.xlu0 %2905
          %2907 = vadd.xlane.f32.xlu0 %v2858
          %v2908 = vpop.xlane.xlu0 %2907
          %2909 = vadd.xlane.f32.xlu0 %v2859
          %v2910 = vpop.xlane.xlu0 %2909
          %2911 = vadd.xlane.f32.xlu0 %v2860
          %v2912 = vpop.xlane.xlu0 %2911
          %2913 = vadd.xlane.f32.xlu0 %v2861
          %v2914 = vpop.xlane.xlu0 %2913
          %2915 = vadd.xlane.f32.xlu0 %v2862
          %v2916 = vpop.xlane.xlu0 %2915
          %2917 = vadd.xlane.f32.xlu0 %v2863
          %v2918 = vpop.xlane.xlu0 %2917
          %2919 = vadd.xlane.f32.xlu0 %v2864
          %v2920 = vpop.xlane.xlu0 %2919
          %2921 = vadd.xlane.f32.xlu0 %v2865
          %v2922 = vpop.xlane.xlu0 %2921
          %2923 = vadd.xlane.f32.xlu0 %v2866
          %v2924 = vpop.xlane.xlu0 %2923
          %2925 = vadd.xlane.f32.xlu0 %v2867
          %v2926 = vpop.xlane.xlu0 %2925
          %2927 = vadd.xlane.f32.xlu0 %v2868
          %v2928 = vpop.xlane.xlu0 %2927
          %2929 = vadd.xlane.f32.xlu0 %v2869
          %v2930 = vpop.xlane.xlu0 %2929
          %2931 = vadd.xlane.f32.xlu0 %v2870
          %v2932 = vpop.xlane.xlu0 %2931
          %2933 = vadd.xlane.f32.xlu0 %v2871
          %v2934 = vpop.xlane.xlu0 %2933
          %2935 = vadd.xlane.f32.xlu0 %v2872
          %v2936 = vpop.xlane.xlu0 %2935
          %v2937 = vadd.f32 %v2874, %v2876
          %v2938 = vadd.f32 %v2937, %v2878
          %v2939 = vadd.f32 %v2938, %v2880
          %v2940 = vadd.f32 %v2939, %v2882
          %v2941 = vadd.f32 %v2940, %v2884
          %v2942 = vadd.f32 %v2941, %v2886
          %v2943 = vadd.f32 %v2942, %v2888
          %v2944 = vrot.slane %v2943, 4
          %v2945 = vadd.f32 %v2943, %v2944
          %v2946 = vrot.slane %v2945, 2
          %v2947 = vadd.f32 %v2945, %v2946
          %v2948 = vrot.slane %v2947, 1
          %v2949 = vadd.f32 %v2947, %v2948
          %v2950 = vadd.f32 %v2890, %v2892
          %v2951 = vadd.f32 %v2950, %v2894
          %v2952 = vadd.f32 %v2951, %v2896
          %v2953 = vadd.f32 %v2952, %v2898
          %v2954 = vadd.f32 %v2953, %v2900
          %v2955 = vadd.f32 %v2954, %v2902
          %v2956 = vadd.f32 %v2955, %v2904
          %v2957 = vrot.slane %v2956, 4
          %v2958 = vadd.f32 %v2956, %v2957
          %v2959 = vrot.slane %v2958, 2
          %v2960 = vadd.f32 %v2958, %v2959
          %v2961 = vrot.slane %v2960, 1
          %v2962 = vadd.f32 %v2960, %v2961
          %v2963 = vadd.f32 %v2906, %v2908
          %v2964 = vadd.f32 %v2963, %v2910
          %v2965 = vadd.f32 %v2964, %v2912
          %v2966 = vadd.f32 %v2965, %v2914
          %v2967 = vadd.f32 %v2966, %v2916
          %v2968 = vadd.f32 %v2967, %v2918
          %v2969 = vadd.f32 %v2968, %v2920
          %v2970 = vrot.slane %v2969, 4
          %v2971 = vadd.f32 %v2969, %v2970
          %v2972 = vrot.slane %v2971, 2
          %v2973 = vadd.f32 %v2971, %v2972
          %v2974 = vrot.slane %v2973, 1
          %v2975 = vadd.f32 %v2973, %v2974
          %v2976 = vadd.f32 %v2922, %v2924
          %v2977 = vadd.f32 %v2976, %v2926
          %v2978 = vadd.f32 %v2977, %v2928
          %v2979 = vadd.f32 %v2978, %v2930
          %v2980 = vadd.f32 %v2979, %v2932
          %v2981 = vadd.f32 %v2980, %v2934
          %v2982 = vadd.f32 %v2981, %v2936
          %v2983 = vrot.slane %v2982, 4
          %v2984 = vadd.f32 %v2982, %v2983
          %v2985 = vrot.slane %v2984, 2
          %v2986 = vadd.f32 %v2984, %v2985
          %v2987 = vrot.slane %v2986, 1
          %v2988 = vadd.f32 %v2986, %v2987
          %v2989 = vmax.f32 %v2949, 1e-24
          %v2990 = vmax.f32 %v2962, 1e-24
          %v2991 = vmax.f32 %v2975, 1e-24
          %v2992 = vmax.f32 %v2988, 1e-24
          %v2993 = vrsqrt.pop %v2989
          %v2994 = vrsqrt.pop %v2990
          %v2995 = vrsqrt.pop %v2991
          %v2996 = vrsqrt.pop %v2992
          %v2997 = vmul.f32 %v2809, %v2993
          %v2998 = vmul.f32 %v2810, %v2993
          %v2999 = vmul.f32 %v2811, %v2993
          %v3000 = vmul.f32 %v2812, %v2993
          %v3001 = vmul.f32 %v2813, %v2993
          %v3002 = vmul.f32 %v2814, %v2993
          %v3003 = vmul.f32 %v2815, %v2993
          %v3004 = vmul.f32 %v2816, %v2993
          %v3005 = vmul.f32 %v2817, %v2994
          %v3006 = vmul.f32 %v2818, %v2994
          %v3007 = vmul.f32 %v2819, %v2994
          %v3008 = vmul.f32 %v2820, %v2994
          %v3009 = vmul.f32 %v2821, %v2994
          %v3010 = vmul.f32 %v2822, %v2994
          %v3011 = vmul.f32 %v2823, %v2994
          %v3012 = vmul.f32 %v2824, %v2994
          %v3013 = vmul.f32 %v2825, %v2995
          %v3014 = vmul.f32 %v2826, %v2995
          %v3015 = vmul.f32 %v2827, %v2995
          %v3016 = vmul.f32 %v2828, %v2995
          %v3017 = vmul.f32 %v2829, %v2995
          %v3018 = vmul.f32 %v2830, %v2995
          %v3019 = vmul.f32 %v2831, %v2995
          %v3020 = vmul.f32 %v2832, %v2995
          %v3021 = vmul.f32 %v2833, %v2996
          %v3022 = vmul.f32 %v2834, %v2996
          %v3023 = vmul.f32 %v2835, %v2996
          %v3024 = vmul.f32 %v2836, %v2996
          %v3025 = vmul.f32 %v2837, %v2996
          %v3026 = vmul.f32 %v2838, %v2996
          %v3027 = vmul.f32 %v2839, %v2996
          %v3028 = vmul.f32 %v2840, %v2996
          %3029 = vst [vmem:[%s186] sm:$0xff] %v2997
          %3030 = vst [vmem:[%s186 + $0x8] sm:$0xff] %v2998
          %3031 = vst [vmem:[%s186 + $0x10] sm:$0xff] %v2999
          %3032 = vst [vmem:[%s186 + $0x18] sm:$0xff] %v3000
          %3033 = vst [vmem:[%s186 + $0x20] sm:$0xff] %v3001
          %3034 = vst [vmem:[%s186 + $0x28] sm:$0xff] %v3002
          %3035 = vst [vmem:[%s186 + $0x30] sm:$0xff] %v3003
          %3036 = vst [vmem:[%s186 + $0x38] sm:$0xff] %v3004
          %3037 = vst [vmem:[%s186 + $0x40] sm:$0xff] %v3005
          %3038 = vst [vmem:[%s186 + $0x48] sm:$0xff] %v3006
          %3039 = vst [vmem:[%s186 + $0x50] sm:$0xff] %v3007
          %3040 = vst [vmem:[%s186 + $0x58] sm:$0xff] %v3008
          %3041 = vst [vmem:[%s186 + $0x60] sm:$0xff] %v3009
          %3042 = vst [vmem:[%s186 + $0x68] sm:$0xff] %v3010
          %3043 = vst [vmem:[%s186 + $0x70] sm:$0xff] %v3011
          %3044 = vst [vmem:[%s186 + $0x78] sm:$0xff] %v3012
          %3045 = vst [vmem:[%s186 + $0x80] sm:$0xff] %v3013
          %3046 = vst [vmem:[%s186 + $0x88] sm:$0xff] %v3014
          %3047 = vst [vmem:[%s186 + $0x90] sm:$0xff] %v3015
          %3048 = vst [vmem:[%s186 + $0x98] sm:$0xff] %v3016
          %3049 = vst [vmem:[%s186 + $0xa0] sm:$0xff] %v3017
          %3050 = vst [vmem:[%s186 + $0xa8] sm:$0xff] %v3018
          %3051 = vst [vmem:[%s186 + $0xb0] sm:$0xff] %v3019
          %3052 = vst [vmem:[%s186 + $0xb8] sm:$0xff] %v3020
          %3053 = vst [vmem:[%s186 + $0xc0] sm:$0xff] %v3021
          %3054 = vst [vmem:[%s186 + $0xc8] sm:$0xff] %v3022
          %3055 = vst [vmem:[%s186 + $0xd0] sm:$0xff] %v3023
          %3056 = vst [vmem:[%s186 + $0xd8] sm:$0xff] %v3024
          %3057 = vst [vmem:[%s186 + $0xe0] sm:$0xff] %v3025
          %3058 = vst [vmem:[%s186 + $0xe8] sm:$0xff] %v3026
          %3059 = vst [vmem:[%s186 + $0xf0] sm:$0xff] %v3027
          %3060 = vst [vmem:[%s186 + $0xf8] sm:$0xff] %v3028
        $region40: #{tpu_custom_call.1} parent=31 // pred_fallthru
          _
        %s3061 = sand.u32 %s107, 1
        %s3062 = scalar_lea.sflag [#allocation5], %s3061
        %s3063 = sand.u32 %s107, 1
        %s3064 = smul.addr %s3063, 256
        %s3065 = scalar_lea.vmem [#allocation4], %s3064
        // Predicated region
        $region41: #{tpu_custom_call.1} parent=31 // pred_check
          %p3066 = pneg %p117
        $region42: #{tpu_custom_call.1} parent=31 // pred_check_branch
          %3068 = sbr.rel (%p3066) target = $region44
        $region43: #{tpu_custom_call.1} parent=31 // pred_region
          %s3069 = smul.u32 4, %s21
          %s3071 = ssub.s32 4096, 4096
          %3072 = vsyncadd %s3062, %s3071
          %s3073 = smul.addr %s3069, 8
          %s3074 = smul.addr %s3073, 128
          %s3075 = scalar_lea.hbm %s3, %s3074
          %s3076 = sshll.u32 %s3065, 4
          %s3077 = int_to_ptr.vmem [resolvable:$true] %s3076
          %3082 = dma.vmem_to_hbm [thread:$0]  %s3077, 4096, %s3075, %s3062, 128, 128, 8
        $region44: #{tpu_custom_call.1} parent=31 // pred_fallthru
          _
      $region32: #{tpu_custom_call.1} parent=5 // pred_fallthru
        _
      %p3083 = scmp.le.s32.totalorder 2, %s12
      // Predicated region
      $region45: #{tpu_custom_call.1} parent=5 // pred_check
        %p3084 = pneg %p3083
      $region46: #{tpu_custom_call.1} parent=5 // pred_check_branch
        %3086 = sbr.rel (%p3084) target = $region48
      $region47: #{tpu_custom_call.1} parent=5 // pred_region
        %s3087 = ssub.s32 %s12, 2
        // Predicated region
        $region49: #{tpu_custom_call.1} parent=47 // pred_check
          %p3088 = pneg %p123
        $region50: #{tpu_custom_call.1} parent=47 // pred_check_branch
          %3090 = sbr.rel (%p3088) target = $region52
        $region51: #{tpu_custom_call.1} parent=47 // pred_region
          %s3091 = sand.u32 %s108, 1
          %s3092 = scalar_lea.sflag [#allocation5], %s3091
          %s3093 = sand.u32 %s108, 1
          %s3094 = smul.addr %s3093, 256
          %s3095 = scalar_lea.vmem [#allocation4], %s3094
          %3096 = dma.done %s3092, 4096
        $region52: #{tpu_custom_call.1} parent=47 // pred_fallthru
          _
      $region48: #{tpu_custom_call.1} parent=5 // pred_fallthru
        _
    $region6: #{tpu_custom_call.1} parent=1 // loop_footer
      %s16 = sadd.s32 1, %s12
    $region7: #{tpu_custom_call.1} parent=1 // loop_footer_branch
      %11 = sbr.rel target = $region3
    $region8: #{tpu_custom_call.1} parent=1 // loop_exit
      _
    %3097 = vsyncpa [#allocation5], 1
    %s3098 = scalar_lea.sflag [#allocation5], 1
    %3099 = vsyncpa %s3098, 1

</llo_original>
